<compile_context>
chip_gen: v5e
topology: v5e:2x2
jax: 0.10.0
libtpu: 0.0.40
codegen_flags: <defaults>
</compile_context>

<pallas_src>
import functools

import jax
import jax.numpy as jnp
from jax import lax
from jax.experimental import pallas as pl
from jax.experimental.pallas import tpu as pltpu

# Fixed shapes implied by the PyTorch module (Linear(660, 6) => L3 = 33 => L_in = 79).
L_IN, L1, L2, L3 = 79, 39, 35, 33
C1, C2, C3 = 20, 50, 20
N_OUT = 6
N_PAD = 128          # lane-dense output width; real logits live in the first 6 lanes
EPS = 1e-5


def _round_up(n, m):
    return ((n + m - 1) // m) * m


# ----------------------------------------------------------------------------------
# Kernel: one batch tile (bt, 79) -> (bt, 128), three lane-dense matmuls on the MXU.
# ----------------------------------------------------------------------------------
def densenet_kernel(x_ref, m1_ref, p1_ref, m2_ref, p2_ref, m34_ref, b34_ref, out_ref):
    # p*_ref rows: [0] conv bias (per channel, repeated over length),
    #              [1] folded-BN scale, [2] folded-BN shift.  All f32.
    x = x_ref[...]                                              # (bt, 79) f32

    # conv1 (k=3, stride 2) as one banded matmul; + bias, ReLU, BN(eval) affine.
    h = jnp.dot(x, m1_ref[...], preferred_element_type=jnp.float32)     # (bt, 780)
    h = jnp.maximum(h + p1_ref[0:1, :], 0.0)
    # drop1: identity in inference mode.
    # TODO(synk): train-mode Dropout / BatchNorm (stochastic mask, batch stats) not implemented.
    a1 = h * p1_ref[1:2, :] + p1_ref[2:3, :]

    # conv2 (k=5) as one banded matmul; + bias, ReLU, BN(eval) affine.
    h = jnp.dot(a1.astype(m2_ref.dtype), m2_ref[...],
                preferred_element_type=jnp.float32)                     # (bt, 1750)
    h = jnp.maximum(h + p2_ref[0:1, :], 0.0)
    # drop2: identity in inference mode.
    a2 = h * p2_ref[1:2, :] + p2_ref[2:3, :]

    # conv3 (k=3) + Flatten(1,2) + Linear(660,6) folded into one (bt,1750)@(1750,128).
    y = jnp.dot(a2.astype(m34_ref.dtype), m34_ref[...],
                preferred_element_type=jnp.float32)                     # (bt, 128)
    out_ref[...] = (y + b34_ref[...]).astype(out_ref.dtype)


# ----------------------------------------------------------------------------------
# Host-side prep helpers (plain JAX, folded under jit).
# ----------------------------------------------------------------------------------
def _conv_band_matrix(W, l_in, l_out, stride=1):
    """(C_out, C_in, K) Conv1d weights -> dense (C_in*l_in, C_out*l_out) matrix M such
    that out_flat = in_flat @ M reproduces a VALID conv with the given stride, using
    PyTorch's channel-major flatten order (flat index = channel * L + position)."""
    c_out, c_in, K = W.shape
    r = jnp.arange(l_in)[:, None, None]                 # input position
    c = jnp.arange(l_out)[None, :, None]                # output position
    k = jnp.arange(K)[None, None, :]                    # tap
    sel = (r == stride * c + k).astype(W.dtype)         # (l_in, l_out, K)
    # m4[i, r, o, c] = W[o, i, k*]  iff  r == stride*c + k*      (channel-major both sides)
    m4 = jnp.einsum('oik,rck->iroc', W, sel, precision=lax.Precision.HIGHEST)
    return m4.reshape(c_in * l_in, c_out * l_out)       # rows: i*l_in+r ; cols: o*l_out+c


@functools.partial(jax.jit, static_argnames=("b_tile", "weight_dtype"))
def densenet_forward(x, p, *, b_tile=None, weight_dtype=jnp.bfloat16):
    """x: (B, 1, 79) float32 NCL (PyTorch layout). Returns (B, 6)."""
    B = x.shape[0]

    # Batch tile: multiple of 8, >=2 grid steps per TensorCore on v7x when B allows,
    # capped at 512 (review: 256-512 for large B, 128 or less only for small B).
    if b_tile is None:
        bt = max(8, min(512, _round_up(pl.cdiv(B, 4), 8)))
    else:
        bt = b_tile
    bt = _round_up(min(bt, _round_up(B, 8)), 8)
    Bp = _round_up(B, bt)

    x2d = x[:, 0, :].astype(jnp.float32)                # raw input, no host-side im2col
    if Bp != B:
        x2d = jnp.pad(x2d, ((0, Bp - B), (0, 0)))

    hp = lax.Precision.HIGHEST
    # Convs as banded matmul matrices; conv3 + Flatten + Linear fused into one matrix.
    m1 = _conv_band_matrix(p['W1'], L_IN, L1, stride=2)           # (79, 780)
    m2 = _conv_band_matrix(p['W2'], L1, L2)                       # (780, 1750)
    m3 = _conv_band_matrix(p['W3'], L2, L3)                       # (1750, 660)
    m34 = jnp.dot(m3, p['Wl'].T, precision=hp)                    # (1750, 6)
    b34 = jnp.dot(jnp.repeat(p['b3'], L3), p['Wl'].T, precision=hp) + p['bl']   # (6,)
    # Lane-dense final stage: pad 6 -> 128 output lanes (zeros), slice after the call.
    m34 = jnp.pad(m34, ((0, 0), (0, N_PAD - N_OUT)))              # (1750, 128)
    b34 = jnp.pad(b34, (0, N_PAD - N_OUT))[None, :]               # (1, 128)

    # Fold BatchNorm (eval) into per-channel affine, flattened to lane vectors.
    inv1 = 1.0 / jnp.sqrt(p['rv1'] + EPS)
    s1, t1 = p['g1'] * inv1, p['be1'] - p['rm1'] * p['g1'] * inv1
    inv2 = 1.0 / jnp.sqrt(p['rv2'] + EPS)
    s2, t2 = p['g2'] * inv2, p['be2'] - p['rm2'] * p['g2'] * inv2
    p1 = jnp.stack([jnp.repeat(p['b1'], L1), jnp.repeat(s1, L1), jnp.repeat(t1, L1)])
    p2 = jnp.stack([jnp.repeat(p['b2'], L2), jnp.repeat(s2, L2), jnp.repeat(t2, L2)])

    # bf16 weights for the big matmuls on every generation (MXU is bf16-native);
    # m1 / x stay f32 (tiny, stage-1 accuracy); accumulation is f32 in-kernel.
    m2 = m2.astype(weight_dtype)
    m34 = m34.astype(weight_dtype)

    args = (x2d, m1, p1, m2, p2, m34, b34)

    def resident(a):
        # Constant block index => fetched once, VMEM-resident across all grid steps.
        # Single-buffered: double-buffering a never-refetched operand wastes VMEM.
        return pl.BlockSpec(a.shape, lambda i: (0, 0), pipeline_mode=pl.Buffered(1))

    out = pl.pallas_call(
        densenet_kernel,
        out_shape=jax.ShapeDtypeStruct((Bp, N_PAD), jnp.float32),
        grid=(Bp // bt,),
        in_specs=[pl.BlockSpec((bt, L_IN), lambda i: (i, 0))]
                 + [resident(a) for a in args[1:]],
        out_specs=pl.BlockSpec((bt, N_PAD), lambda i: (i, 0)),
        compiler_params=pltpu.CompilerParams(
            dimension_semantics=("parallel",),          # batch tiles split across TCs (v7x)
            vmem_limit_bytes=48 * 1024 * 1024),         # few MB used; well under limits
    )(*args)
    return out[:B, :N_OUT]


# ----------------------------------------------------------------------------------
# Parameters + pure-JAX reference (mirrors the PyTorch forward, eval mode).
# ----------------------------------------------------------------------------------
def init_params(key):
    ks = jax.random.split(key, 12)

    def nrm(k, shape, scale=0.1):
        return scale * jax.random.normal(k, shape, jnp.float32)

    return dict(
        W1=nrm(ks[0], (C1, 1, 3), 0.3),  b1=nrm(ks[1], (C1,)),
        W2=nrm(ks[2], (C2, C1, 5), 0.1), b2=nrm(ks[3], (C2,)),
        W3=nrm(ks[4], (C3, C2, 3), 0.1), b3=nrm(ks[5], (C3,)),
        g1=1.0 + nrm(ks[6], (C1,)),      be1=nrm(ks[7], (C1,)),
        g2=1.0 + nrm(ks[8], (C2,)),      be2=nrm(ks[9], (C2,)),
        rm1=jnp.zeros((C1,), jnp.float32), rv1=jnp.ones((C1,), jnp.float32),
        rm2=jnp.zeros((C2,), jnp.float32), rv2=jnp.ones((C2,), jnp.float32),
        Wl=nrm(ks[10], (N_OUT, C3 * L3), 0.05), bl=nrm(ks[11], (N_OUT,)),
    )


def ref_forward(x, p):
    dn = ('NCH', 'OIH', 'NCH')
    hp = lax.Precision.HIGHEST

    def bn(a, rm, rv, g, be):
        return ((a - rm[None, :, None]) / jnp.sqrt(rv[None, :, None] + EPS)
                * g[None, :, None] + be[None, :, None])

    a = lax.conv_general_dilated(x, p['W1'], (2,), 'VALID', dimension_numbers=dn,
                                 precision=hp)
    a = jnp.maximum(a + p['b1'][None, :, None], 0.0)
    a = bn(a, p['rm1'], p['rv1'], p['g1'], p['be1'])
    a = lax.conv_general_dilated(a, p['W2'], (1,), 'VALID', dimension_numbers=dn,
                                 precision=hp)
    a = jnp.maximum(a + p['b2'][None, :, None], 0.0)
    a = bn(a, p['rm2'], p['rv2'], p['g2'], p['be2'])
    a = lax.conv_general_dilated(a, p['W3'], (1,), 'VALID', dimension_numbers=dn,
                                 precision=hp)
    a = a + p['b3'][None, :, None]
    flat = a.reshape(a.shape[0], -1)                              # (B, 660)
    return jnp.dot(flat, p['Wl'].T, precision=hp) + p['bl'][None, :]


if __name__ == "__main__":
    key = jax.random.PRNGKey(0)
    kx, kp = jax.random.split(key)
    params = init_params(kp)

    B = 20                                       # pads to 24, batch tile 8 -> grid=(3,)
    x = jax.random.normal(kx, (B, 1, L_IN), jnp.float32)

    y_ref = ref_forward(x, params)

    # All-f32 weight path: strict correctness check of the fused/banded lowering.
    y = jax.block_until_ready(densenet_forward(x, params, weight_dtype=jnp.float32))
    assert y.shape == (B, N_OUT), y.shape
    assert jnp.allclose(y, y_ref, atol=5e-3, rtol=5e-3), float(jnp.max(jnp.abs(y - y_ref)))

    # Default path: bf16 weights for the big matmuls (all generations), f32 accumulate.
    y16 = jax.block_until_ready(densenet_forward(x, params))
    assert y16.shape == (B, N_OUT), y16.shape
    assert jnp.allclose(y16, y_ref, atol=1e-1, rtol=1e-1), float(jnp.max(jnp.abs(y16 - y_ref)))

    print("KERNEL_OK")
</pallas_src>

<mosaic_0001>
module attributes {stable_mosaic.version = 11 : i64} {
  func.func @densenet_kernel(%arg0: i32, %arg1: memref<8x79xf32, #tpu.memory_space<vmem>>, %arg2: memref<79x780xf32, #tpu.memory_space<vmem>>, %arg3: memref<3x780xf32, #tpu.memory_space<vmem>>, %arg4: memref<780x1750xf32, #tpu.memory_space<vmem>>, %arg5: memref<3x1750xf32, #tpu.memory_space<vmem>>, %arg6: memref<1750x128xf32, #tpu.memory_space<vmem>>, %arg7: memref<1x128xf32, #tpu.memory_space<vmem>>, %arg8: memref<8x128xf32, #tpu.memory_space<vmem>>) attributes {dimension_semantics = [#tpu.dimension_semantics<parallel>], iteration_bounds = array<i64: 3>, scalar_prefetch = 0 : i64, scratch_operands = 0 : i64, tpu.core_type = #tpu.core_type<tc>, window_params = [{transform_indices = @transform_0, window_bounds = array<i64: 8, 79>}, {pipeline_mode = #tpu.pipeline_mode<synchronous>, transform_indices = @transform_1, window_bounds = array<i64: 79, 780>}, {pipeline_mode = #tpu.pipeline_mode<synchronous>, transform_indices = @transform_2, window_bounds = array<i64: 3, 780>}, {pipeline_mode = #tpu.pipeline_mode<synchronous>, transform_indices = @transform_3, window_bounds = array<i64: 780, 1750>}, {pipeline_mode = #tpu.pipeline_mode<synchronous>, transform_indices = @transform_4, window_bounds = array<i64: 3, 1750>}, {pipeline_mode = #tpu.pipeline_mode<synchronous>, transform_indices = @transform_5, window_bounds = array<i64: 1750, 128>}, {pipeline_mode = #tpu.pipeline_mode<synchronous>, transform_indices = @transform_6, window_bounds = array<i64: 1, 128>}, {transform_indices = @transform_7, window_bounds = array<i64: 8, 128>}]} {
    %c0 = arith.constant 0 : index
    %c0_0 = arith.constant 0 : index
    %0 = vector.load %arg1[%c0, %c0_0] : memref<8x79xf32, #tpu.memory_space<vmem>>, vector<8x79xf32>
    %c0_1 = arith.constant 0 : index
    %c0_2 = arith.constant 0 : index
    %1 = vector.load %arg2[%c0_1, %c0_2] : memref<79x780xf32, #tpu.memory_space<vmem>>, vector<79x780xf32>
    %cst = arith.constant dense<0.000000e+00> : vector<8x780xf32>
    %2 = tpu.matmul %0, %1, %cst {dimension_numbers = #tpu.dot_dimension_numbers<[1], [0], [0], [1], [0, 0, 1, 1], [], []>} : vector<8x79xf32>, vector<79x780xf32>, vector<8x780xf32> -> vector<8x780xf32>
    %c0_3 = arith.constant 0 : index
    %c0_4 = arith.constant 0 : index
    %3 = vector.load %arg3[%c0_3, %c0_4] : memref<3x780xf32, #tpu.memory_space<vmem>>, vector<1x780xf32>
    %4 = vector.broadcast %3 : vector<1x780xf32> to vector<8x780xf32>
    %5 = arith.addf %2, %4 : vector<8x780xf32>
    %cst_5 = arith.constant 0.000000e+00 : f32
    %6 = vector.broadcast %cst_5 : f32 to vector<8x780xf32>
    %7 = arith.maximumf %5, %6 : vector<8x780xf32>
    %c1 = arith.constant 1 : index
    %c0_6 = arith.constant 0 : index
    %8 = vector.load %arg3[%c1, %c0_6] : memref<3x780xf32, #tpu.memory_space<vmem>>, vector<1x780xf32>
    %9 = vector.broadcast %8 : vector<1x780xf32> to vector<8x780xf32>
    %10 = arith.mulf %7, %9 : vector<8x780xf32>
    %c2 = arith.constant 2 : index
    %c0_7 = arith.constant 0 : index
    %11 = vector.load %arg3[%c2, %c0_7] : memref<3x780xf32, #tpu.memory_space<vmem>>, vector<1x780xf32>
    %12 = vector.broadcast %11 : vector<1x780xf32> to vector<8x780xf32>
    %13 = arith.addf %10, %12 : vector<8x780xf32>
    %c0_8 = arith.constant 0 : index
    %c0_9 = arith.constant 0 : index
    %14 = vector.load %arg4[%c0_8, %c0_9] : memref<780x1750xf32, #tpu.memory_space<vmem>>, vector<780x1750xf32>
    %cst_10 = arith.constant dense<0.000000e+00> : vector<8x1750xf32>
    %15 = tpu.matmul %13, %14, %cst_10 {dimension_numbers = #tpu.dot_dimension_numbers<[1], [0], [0], [1], [0, 0, 1, 1], [], []>} : vector<8x780xf32>, vector<780x1750xf32>, vector<8x1750xf32> -> vector<8x1750xf32>
    %c0_11 = arith.constant 0 : index
    %c0_12 = arith.constant 0 : index
    %16 = vector.load %arg5[%c0_11, %c0_12] : memref<3x1750xf32, #tpu.memory_space<vmem>>, vector<1x1750xf32>
    %17 = vector.broadcast %16 : vector<1x1750xf32> to vector<8x1750xf32>
    %18 = arith.addf %15, %17 : vector<8x1750xf32>
    %cst_13 = arith.constant 0.000000e+00 : f32
    %19 = vector.broadcast %cst_13 : f32 to vector<8x1750xf32>
    %20 = arith.maximumf %18, %19 : vector<8x1750xf32>
    %c1_14 = arith.constant 1 : index
    %c0_15 = arith.constant 0 : index
    %21 = vector.load %arg5[%c1_14, %c0_15] : memref<3x1750xf32, #tpu.memory_space<vmem>>, vector<1x1750xf32>
    %22 = vector.broadcast %21 : vector<1x1750xf32> to vector<8x1750xf32>
    %23 = arith.mulf %20, %22 : vector<8x1750xf32>
    %c2_16 = arith.constant 2 : index
    %c0_17 = arith.constant 0 : index
    %24 = vector.load %arg5[%c2_16, %c0_17] : memref<3x1750xf32, #tpu.memory_space<vmem>>, vector<1x1750xf32>
    %25 = vector.broadcast %24 : vector<1x1750xf32> to vector<8x1750xf32>
    %26 = arith.addf %23, %25 : vector<8x1750xf32>
    %c0_18 = arith.constant 0 : index
    %c0_19 = arith.constant 0 : index
    %27 = vector.load %arg6[%c0_18, %c0_19] : memref<1750x128xf32, #tpu.memory_space<vmem>>, vector<1750x128xf32>
    %cst_20 = arith.constant dense<0.000000e+00> : vector<8x128xf32>
    %28 = tpu.matmul %26, %27, %cst_20 {dimension_numbers = #tpu.dot_dimension_numbers<[1], [0], [0], [1], [0, 0, 1, 1], [], []>} : vector<8x1750xf32>, vector<1750x128xf32>, vector<8x128xf32> -> vector<8x128xf32>
    %c0_21 = arith.constant 0 : index
    %c0_22 = arith.constant 0 : index
    %29 = vector.load %arg7[%c0_21, %c0_22] : memref<1x128xf32, #tpu.memory_space<vmem>>, vector<1x128xf32>
    %30 = vector.broadcast %29 : vector<1x128xf32> to vector<8x128xf32>
    %31 = arith.addf %28, %30 : vector<8x128xf32>
    %c0_23 = arith.constant 0 : index
    %c0_24 = arith.constant 0 : index
    %32 = vector.load %arg8[%c0_23, %c0_24] : memref<8x128xf32, #tpu.memory_space<vmem>>, vector<8x128xf32>
    tpu.vector_store %arg8[%c0_23, %c0_24], %31 {strides = array<i32>} : memref<8x128xf32, #tpu.memory_space<vmem>>, vector<8x128xf32>,
    return
  }
  func.func @transform_0(%arg0: i32) -> (i32, i32) {
    %c0_i32 = arith.constant 0 : i32
    %c0_i32_0 = arith.constant 0 : i32
    return %arg0, %c0_i32 : i32, i32
  }
  func.func @transform_1(%arg0: i32) -> (i32, i32) {
    %c0_i32 = arith.constant 0 : i32
    %c0_i32_0 = arith.constant 0 : i32
    %c0_i32_1 = arith.constant 0 : i32
    return %c0_i32, %c0_i32_0 : i32, i32
  }
  func.func @transform_2(%arg0: i32) -> (i32, i32) {
    %c0_i32 = arith.constant 0 : i32
    %c0_i32_0 = arith.constant 0 : i32
    %c0_i32_1 = arith.constant 0 : i32
    return %c0_i32, %c0_i32_0 : i32, i32
  }
  func.func @transform_3(%arg0: i32) -> (i32, i32) {
    %c0_i32 = arith.constant 0 : i32
    %c0_i32_0 = arith.constant 0 : i32
    %c0_i32_1 = arith.constant 0 : i32
    return %c0_i32, %c0_i32_0 : i32, i32
  }
  func.func @transform_4(%arg0: i32) -> (i32, i32) {
    %c0_i32 = arith.constant 0 : i32
    %c0_i32_0 = arith.constant 0 : i32
    %c0_i32_1 = arith.constant 0 : i32
    return %c0_i32, %c0_i32_0 : i32, i32
  }
  func.func @transform_5(%arg0: i32) -> (i32, i32) {
    %c0_i32 = arith.constant 0 : i32
    %c0_i32_0 = arith.constant 0 : i32
    %c0_i32_1 = arith.constant 0 : i32
    return %c0_i32, %c0_i32_0 : i32, i32
  }
  func.func @transform_6(%arg0: i32) -> (i32, i32) {
    %c0_i32 = arith.constant 0 : i32
    %c0_i32_0 = arith.constant 0 : i32
    %c0_i32_1 = arith.constant 0 : i32
    return %c0_i32, %c0_i32_0 : i32, i32
  }
  func.func @transform_7(%arg0: i32) -> (i32, i32) {
    %c0_i32 = arith.constant 0 : i32
    %c0_i32_0 = arith.constant 0 : i32
    return %arg0, %c0_i32 : i32, i32
  }
}

</mosaic_0001>

<llo_original>
// kernel: densenet_forward.1
$region0: #{densenet_forward.1}
  #allocation0 [shape = 'u32[]', space=smem, size = 0x4, offset = 0x4, fixed_abs, tag = 'smem constant byte address 0x4 - core index']
  #allocation1 [shape = 'u32[72,128]{1,0:T(1,128)}', space=vmem, size = 0x9000, scoped, tag = 'internal scratch']
  %s0 = inlined_call_operand.vmem [shape: f32[24,79], index: 0, kind: input, shape index: {}]
  %s1 = inlined_call_operand.vmem [shape: f32[79,780], index: 1, kind: input, shape index: {}]
  %s2 = inlined_call_operand.vmem [shape: f32[3,780], index: 2, kind: input, shape index: {}]
  %s3 = inlined_call_operand.vmem [shape: f32[780,1750], index: 3, kind: input, shape index: {}]
  %s4 = inlined_call_operand.vmem [shape: f32[3,1750], index: 4, kind: input, shape index: {}]
  %s5 = inlined_call_operand.vmem [shape: f32[1750,128], index: 5, kind: input, shape index: {}]
  %s6 = inlined_call_operand.vmem [shape: f32[1,128], index: 6, kind: input, shape index: {}]
  %s7 = inlined_call_operand.vmem [shape: f32[24,128], index: 7, kind: output, shape index: {}]
  %s8 = sld [smem:[#allocation0]]
  $region61: #{densenet_forward.1} parent=0
    _
  %s10 = ssub.s32 1, %s8
  %s11 = scalar_select 0, %s10, %s8
  loop: start=0, step=1, limit=5
  $region2: #{densenet_forward.1} parent=0 // loop_pre_header
    _
  $region3: #{densenet_forward.1} parent=0 // loop_header
    %s13 = sphi 0, %s17
    %p14 = scmp.ge.s32.totalorder %s13, 5
    %s23 = sphi 0, %s25
    %s26 = sphi 0, %s23
    %s27 = sphi 0, %s26
    %s43 = sphi 0, %s27
    %s47 = sphi 0, %s47
    %s49 = sphi 0, %s47
    %s50 = sphi 0, %s49
    %s64 = sphi 0, %s50
    %s68 = sphi 0, %s68
    %s70 = sphi 0, %s68
    %s71 = sphi 0, %s70
    %s85 = sphi 0, %s71
    %s89 = sphi 0, %s89
    %s91 = sphi 0, %s89
    %s92 = sphi 0, %s91
    %s106 = sphi 0, %s92
    %s110 = sphi 0, %s110
    %s112 = sphi 0, %s110
    %s113 = sphi 0, %s112
    %s127 = sphi 0, %s113
    %s131 = sphi 0, %s131
    %s133 = sphi 0, %s131
    %s134 = sphi 0, %s133
    %s148 = sphi 0, %s134
    %s152 = sphi 0, %s152
    %s154 = sphi 0, %s152
    %s155 = sphi 0, %s154
    %s169 = sphi 0, %s155
    %s175 = sphi 0, %s177
    %s178 = sphi 0, %s175
    %s179 = sphi 0, %s178
    %s195 = sphi 0, %s179
  $region4: #{densenet_forward.1} parent=0 // loop_header_branch
    %16 = sbr.rel (%p14) target = $region8
  $region5: #{densenet_forward.1} parent=0 // loop_body
    %s18 = ssub.s32 %s13, 1
    %s19 = ssub.s32 %s13, 2
    %s20 = sadd.s32 %s13, 1
    %s21 = ssub.s32 %s13, %s20
    %p22 = scmp.eq.s32.totalorder %s21, 0
    %s24 = sadd.s32 %s23, 1
    %s25 = scalar_select %p22, %s23, %s24
    %p28 = pneg %p22
    %p29 = scmp.eq.s32.totalorder %s13, 2
    %p30 = por %p28, %p29
    %p31 = scmp.ne.s32.totalorder %s23, %s26
    %p32 = scmp.eq.s32.totalorder %s13, 0
    %p33 = por %p31, %p32
    %p34 = scmp.ne.s32.totalorder %s23, %s26
    %p35 = scmp.eq.s32.totalorder %s18, 2
    %p36 = por %p34, %p35
    %p37 = scmp.ne.s32.totalorder %s26, %s27
    %p38 = scmp.eq.s32.totalorder %s18, 0
    %p39 = por %p37, %p38
    %p40 = scmp.ne.s32.totalorder %s26, %s27
    %p41 = scmp.eq.s32.totalorder %s19, 2
    %p42 = por %p40, %p41
    %p44 = scmp.ne.s32.totalorder %s27, %s43
    %p45 = scmp.eq.s32.totalorder %s19, 0
    %p46 = por %p44, %p45
    %s48 = sadd.s32 %s47, 1
    %p51 = scmp.eq.s32.totalorder %s13, 2
    %p52 = scmp.ne.s32.totalorder %s47, %s49
    %p53 = scmp.eq.s32.totalorder %s13, 0
    %p54 = por %p52, %p53
    %p55 = scmp.ne.s32.totalorder %s47, %s49
    %p56 = scmp.eq.s32.totalorder %s18, 2
    %p57 = por %p55, %p56
    %p58 = scmp.ne.s32.totalorder %s49, %s50
    %p59 = scmp.eq.s32.totalorder %s18, 0
    %p60 = por %p58, %p59
    %p61 = scmp.ne.s32.totalorder %s49, %s50
    %p62 = scmp.eq.s32.totalorder %s19, 2
    %p63 = por %p61, %p62
    %p65 = scmp.ne.s32.totalorder %s50, %s64
    %p66 = scmp.eq.s32.totalorder %s19, 0
    %p67 = por %p65, %p66
    %s69 = sadd.s32 %s68, 1
    %p72 = scmp.eq.s32.totalorder %s13, 2
    %p73 = scmp.ne.s32.totalorder %s68, %s70
    %p74 = scmp.eq.s32.totalorder %s13, 0
    %p75 = por %p73, %p74
    %p76 = scmp.ne.s32.totalorder %s68, %s70
    %p77 = scmp.eq.s32.totalorder %s18, 2
    %p78 = por %p76, %p77
    %p79 = scmp.ne.s32.totalorder %s70, %s71
    %p80 = scmp.eq.s32.totalorder %s18, 0
    %p81 = por %p79, %p80
    %p82 = scmp.ne.s32.totalorder %s70, %s71
    %p83 = scmp.eq.s32.totalorder %s19, 2
    %p84 = por %p82, %p83
    %p86 = scmp.ne.s32.totalorder %s71, %s85
    %p87 = scmp.eq.s32.totalorder %s19, 0
    %p88 = por %p86, %p87
    %s90 = sadd.s32 %s89, 1
    %p93 = scmp.eq.s32.totalorder %s13, 2
    %p94 = scmp.ne.s32.totalorder %s89, %s91
    %p95 = scmp.eq.s32.totalorder %s13, 0
    %p96 = por %p94, %p95
    %p97 = scmp.ne.s32.totalorder %s89, %s91
    %p98 = scmp.eq.s32.totalorder %s18, 2
    %p99 = por %p97, %p98
    %p100 = scmp.ne.s32.totalorder %s91, %s92
    %p101 = scmp.eq.s32.totalorder %s18, 0
    %p102 = por %p100, %p101
    %p103 = scmp.ne.s32.totalorder %s91, %s92
    %p104 = scmp.eq.s32.totalorder %s19, 2
    %p105 = por %p103, %p104
    %p107 = scmp.ne.s32.totalorder %s92, %s106
    %p108 = scmp.eq.s32.totalorder %s19, 0
    %p109 = por %p107, %p108
    %s111 = sadd.s32 %s110, 1
    %p114 = scmp.eq.s32.totalorder %s13, 2
    %p115 = scmp.ne.s32.totalorder %s110, %s112
    %p116 = scmp.eq.s32.totalorder %s13, 0
    %p117 = por %p115, %p116
    %p118 = scmp.ne.s32.totalorder %s110, %s112
    %p119 = scmp.eq.s32.totalorder %s18, 2
    %p120 = por %p118, %p119
    %p121 = scmp.ne.s32.totalorder %s112, %s113
    %p122 = scmp.eq.s32.totalorder %s18, 0
    %p123 = por %p121, %p122
    %p124 = scmp.ne.s32.totalorder %s112, %s113
    %p125 = scmp.eq.s32.totalorder %s19, 2
    %p126 = por %p124, %p125
    %p128 = scmp.ne.s32.totalorder %s113, %s127
    %p129 = scmp.eq.s32.totalorder %s19, 0
    %p130 = por %p128, %p129
    %s132 = sadd.s32 %s131, 1
    %p135 = scmp.eq.s32.totalorder %s13, 2
    %p136 = scmp.ne.s32.totalorder %s131, %s133
    %p137 = scmp.eq.s32.totalorder %s13, 0
    %p138 = por %p136, %p137
    %p139 = scmp.ne.s32.totalorder %s131, %s133
    %p140 = scmp.eq.s32.totalorder %s18, 2
    %p141 = por %p139, %p140
    %p142 = scmp.ne.s32.totalorder %s133, %s134
    %p143 = scmp.eq.s32.totalorder %s18, 0
    %p144 = por %p142, %p143
    %p145 = scmp.ne.s32.totalorder %s133, %s134
    %p146 = scmp.eq.s32.totalorder %s19, 2
    %p147 = por %p145, %p146
    %p149 = scmp.ne.s32.totalorder %s134, %s148
    %p150 = scmp.eq.s32.totalorder %s19, 0
    %p151 = por %p149, %p150
    %s153 = sadd.s32 %s152, 1
    %p156 = scmp.eq.s32.totalorder %s13, 2
    %p157 = scmp.ne.s32.totalorder %s152, %s154
    %p158 = scmp.eq.s32.totalorder %s13, 0
    %p159 = por %p157, %p158
    %p160 = scmp.ne.s32.totalorder %s152, %s154
    %p161 = scmp.eq.s32.totalorder %s18, 2
    %p162 = por %p160, %p161
    %p163 = scmp.ne.s32.totalorder %s154, %s155
    %p164 = scmp.eq.s32.totalorder %s18, 0
    %p165 = por %p163, %p164
    %p166 = scmp.ne.s32.totalorder %s154, %s155
    %p167 = scmp.eq.s32.totalorder %s19, 2
    %p168 = por %p166, %p167
    %p170 = scmp.ne.s32.totalorder %s155, %s169
    %p171 = scmp.eq.s32.totalorder %s19, 0
    %p172 = por %p170, %p171
    %s173 = ssub.s32 %s13, %s20
    %p174 = scmp.eq.s32.totalorder %s173, 0
    %s176 = sadd.s32 %s175, 1
    %s177 = scalar_select %p174, %s175, %s176
    %p180 = pneg %p174
    %p181 = scmp.eq.s32.totalorder %s13, 2
    %p182 = por %p180, %p181
    %p183 = scmp.ne.s32.totalorder %s175, %s178
    %p184 = scmp.eq.s32.totalorder %s13, 0
    %p185 = por %p183, %p184
    %p186 = scmp.ne.s32.totalorder %s175, %s178
    %p187 = scmp.eq.s32.totalorder %s18, 2
    %p188 = por %p186, %p187
    %p189 = scmp.ne.s32.totalorder %s178, %s179
    %p190 = scmp.eq.s32.totalorder %s18, 0
    %p191 = por %p189, %p190
    %p192 = scmp.ne.s32.totalorder %s178, %s179
    %p193 = scmp.eq.s32.totalorder %s19, 2
    %p194 = por %p192, %p193
    %p196 = scmp.ne.s32.totalorder %s179, %s195
    %p197 = scmp.eq.s32.totalorder %s19, 0
    %p198 = por %p196, %p197
    %p199 = scmp.le.s32.totalorder 1, %s13
    %p200 = scmp.lt.s32.totalorder %s13, 4
    %p201 = pnand %p199, %p200
    %p202 = pneg %p201
    // Predicated region
    $region9: #{densenet_forward.1} parent=5 // pred_check
      _
    $region10: #{densenet_forward.1} parent=5 // pred_check_branch
      %204 = sbr.rel (%p201) target = $region12
    $region11: #{densenet_forward.1} parent=5 // pred_region
      %s205 = ssub.s32 %s13, 1
      // Predicated region
      $region13: #{densenet_forward.1} parent=11 // pred_check
        %p206 = pneg %p60
      $region14: #{densenet_forward.1} parent=11 // pred_check_branch
        %208 = sbr.rel (%p206) target = $region16
      $region15: #{densenet_forward.1} parent=11 // pred_region
        _
      $region16: #{densenet_forward.1} parent=11 // pred_fallthru
        _
      // Predicated region
      $region17: #{densenet_forward.1} parent=11 // pred_check
        %p209 = pneg %p81
      $region18: #{densenet_forward.1} parent=11 // pred_check_branch
        %211 = sbr.rel (%p209) target = $region20
      $region19: #{densenet_forward.1} parent=11 // pred_region
        _
      $region20: #{densenet_forward.1} parent=11 // pred_fallthru
        _
      // Predicated region
      $region21: #{densenet_forward.1} parent=11 // pred_check
        %p212 = pneg %p102
      $region22: #{densenet_forward.1} parent=11 // pred_check_branch
        %214 = sbr.rel (%p212) target = $region24
      $region23: #{densenet_forward.1} parent=11 // pred_region
        _
      $region24: #{densenet_forward.1} parent=11 // pred_fallthru
        _
      // Predicated region
      $region25: #{densenet_forward.1} parent=11 // pred_check
        %p215 = pneg %p123
      $region26: #{densenet_forward.1} parent=11 // pred_check_branch
        %217 = sbr.rel (%p215) target = $region28
      $region27: #{densenet_forward.1} parent=11 // pred_region
        _
      $region28: #{densenet_forward.1} parent=11 // pred_fallthru
        _
      // Predicated region
      $region29: #{densenet_forward.1} parent=11 // pred_check
        %p218 = pneg %p144
      $region30: #{densenet_forward.1} parent=11 // pred_check_branch
        %220 = sbr.rel (%p218) target = $region32
      $region31: #{densenet_forward.1} parent=11 // pred_region
        _
      $region32: #{densenet_forward.1} parent=11 // pred_fallthru
        _
      // Predicated region
      $region33: #{densenet_forward.1} parent=11 // pred_check
        %p221 = pneg %p165
      $region34: #{densenet_forward.1} parent=11 // pred_check_branch
        %223 = sbr.rel (%p221) target = $region36
      $region35: #{densenet_forward.1} parent=11 // pred_region
        _
      $region36: #{densenet_forward.1} parent=11 // pred_fallthru
        _
    $region12: #{densenet_forward.1} parent=5 // pred_fallthru
      _
    %p224 = scmp.lt.s32.totalorder %s13, 3
    // Predicated region
    $region37: #{densenet_forward.1} parent=5 // pred_check
      %p225 = pneg %p224
    $region38: #{densenet_forward.1} parent=5 // pred_check_branch
      %227 = sbr.rel (%p225) target = $region40
    $region39: #{densenet_forward.1} parent=5 // pred_region
      // Predicated region
      $region41: #{densenet_forward.1} parent=39 // pred_check
        %p228 = pneg %p33
      $region42: #{densenet_forward.1} parent=39 // pred_check_branch
        %230 = sbr.rel (%p228) target = $region44
      $region43: #{densenet_forward.1} parent=39 // pred_region
        %p231 = scmp.lt.s32.totalorder %s13, 2
        %s232 = scalar_select %p231, %s13, 2
        %s233 = smul.addr %s232, 8
        %s234 = scalar_lea.vmem %s0, %s233
      $region44: #{densenet_forward.1} parent=39 // pred_fallthru
        _
    $region40: #{densenet_forward.1} parent=5 // pred_fallthru
      _
    %p235 = scmp.le.s32.totalorder 1, %s13
    %p236 = scmp.lt.s32.totalorder %s13, 4
    %p237 = pnand %p235, %p236
    %p238 = pneg %p237
    // Predicated region
    $region45: #{densenet_forward.1} parent=5 // pred_check
      _
    $region46: #{densenet_forward.1} parent=5 // pred_check_branch
      %240 = sbr.rel (%p237) target = $region48
    $region47: #{densenet_forward.1} parent=5 // pred_region
      %s241 = ssub.s32 %s13, 1
      %p242 = scmp.lt.s32.totalorder %s18, 2
      %s243 = scalar_select %p242, %s18, 2
      %s244 = smul.addr %s243, 8
      %s245 = scalar_lea.vmem %s0, %s244
      %p246 = pneg %p39
      %p247 = pneg %p36
      %p248 = pneg %p60
      %p249 = pneg %p57
      %p250 = pneg %p81
      %p251 = pneg %p78
      %p252 = pneg %p102
      %p253 = pneg %p99
      %p254 = pneg %p123
      %p255 = pneg %p120
      %p256 = pneg %p144
      %p257 = pneg %p141
      %p258 = pneg %p165
      %p259 = pneg %p162
      %p260 = pneg %p191
      %p261 = pneg %p188
      %p262 = scmp.lt.s32.totalorder %s18, 2
      %s263 = scalar_select %p262, %s18, 2
      %s264 = smul.addr %s263, 8
      %s265 = scalar_lea.vmem %s7, %s264
      %p266 = scmp.lt.s32.totalorder %s18, 2
      %s267 = scalar_select %p266, %s18, 2
      %s268 = smul.addr %s267, 8
      %s269 = scalar_lea.vmem %s0, %s268
      %p270 = scmp.lt.s32.totalorder %s18, 2
      %s271 = scalar_select %p270, %s18, 2
      %s272 = smul.addr %s271, 8
      %s273 = scalar_lea.vmem %s7, %s272
      %v274 = vld [vmem:[%s269] sm:$0xff]
      %v275 = vld [vmem:[%s1] sm:$0xff]
      %v276 = vld [vmem:[%s1 + $0x8] sm:$0xff]
      %v277 = vld [vmem:[%s1 + $0x10] sm:$0xff]
      %v278 = vld [vmem:[%s1 + $0x18] sm:$0xff]
      %v279 = vld [vmem:[%s1 + $0x20] sm:$0xff]
      %v280 = vld [vmem:[%s1 + $0x28] sm:$0xff]
      %v281 = vld [vmem:[%s1 + $0x30] sm:$0xff]
      %v282 = vld [vmem:[%s1 + $0x38] sm:$0xff]
      %v283 = vld [vmem:[%s1 + $0x40] sm:$0xff]
      %v284 = vld [vmem:[%s1 + $0x48] sm:$0xff]
      %v285 = vld [vmem:[%s1 + $0x50] sm:$0xff]
      %v286 = vld [vmem:[%s1 + $0x58] sm:$0xff]
      %v287 = vld [vmem:[%s1 + $0x60] sm:$0xff]
      %v288 = vld [vmem:[%s1 + $0x68] sm:$0xff]
      %v289 = vld [vmem:[%s1 + $0x70] sm:$0xff]
      %v290 = vld [vmem:[%s1 + $0x78] sm:$0xff]
      %v291 = vld [vmem:[%s1 + $0x80] sm:$0xff]
      %v292 = vld [vmem:[%s1 + $0x88] sm:$0xff]
      %v293 = vld [vmem:[%s1 + $0x90] sm:$0xff]
      %v294 = vld [vmem:[%s1 + $0x98] sm:$0xff]
      %v295 = vld [vmem:[%s1 + $0xa0] sm:$0xff]
      %v296 = vld [vmem:[%s1 + $0xa8] sm:$0xff]
      %v297 = vld [vmem:[%s1 + $0xb0] sm:$0xff]
      %v298 = vld [vmem:[%s1 + $0xb8] sm:$0xff]
      %v299 = vld [vmem:[%s1 + $0xc0] sm:$0xff]
      %v300 = vld [vmem:[%s1 + $0xc8] sm:$0xff]
      %v301 = vld [vmem:[%s1 + $0xd0] sm:$0xff]
      %v302 = vld [vmem:[%s1 + $0xd8] sm:$0xff]
      %v303 = vld [vmem:[%s1 + $0xe0] sm:$0xff]
      %v304 = vld [vmem:[%s1 + $0xe8] sm:$0xff]
      %v305 = vld [vmem:[%s1 + $0xf0] sm:$0xff]
      %v306 = vld [vmem:[%s1 + $0xf8] sm:$0xff]
      %v307 = vld [vmem:[%s1 + $0x100] sm:$0xff]
      %v308 = vld [vmem:[%s1 + $0x108] sm:$0xff]
      %v309 = vld [vmem:[%s1 + $0x110] sm:$0xff]
      %v310 = vld [vmem:[%s1 + $0x118] sm:$0xff]
      %v311 = vld [vmem:[%s1 + $0x120] sm:$0xff]
      %v312 = vld [vmem:[%s1 + $0x128] sm:$0xff]
      %v313 = vld [vmem:[%s1 + $0x130] sm:$0xff]
      %v314 = vld [vmem:[%s1 + $0x138] sm:$0xff]
      %v315 = vld [vmem:[%s1 + $0x140] sm:$0xff]
      %v316 = vld [vmem:[%s1 + $0x148] sm:$0xff]
      %v317 = vld [vmem:[%s1 + $0x150] sm:$0xff]
      %v318 = vld [vmem:[%s1 + $0x158] sm:$0xff]
      %v319 = vld [vmem:[%s1 + $0x160] sm:$0xff]
      %v320 = vld [vmem:[%s1 + $0x168] sm:$0xff]
      %v321 = vld [vmem:[%s1 + $0x170] sm:$0xff]
      %v322 = vld [vmem:[%s1 + $0x178] sm:$0xff]
      %v323 = vld [vmem:[%s1 + $0x180] sm:$0xff]
      %v324 = vld [vmem:[%s1 + $0x188] sm:$0xff]
      %v325 = vld [vmem:[%s1 + $0x190] sm:$0xff]
      %v326 = vld [vmem:[%s1 + $0x198] sm:$0xff]
      %v327 = vld [vmem:[%s1 + $0x1a0] sm:$0xff]
      %v328 = vld [vmem:[%s1 + $0x1a8] sm:$0xff]
      %v329 = vld [vmem:[%s1 + $0x1b0] sm:$0xff]
      %v330 = vld [vmem:[%s1 + $0x1b8] sm:$0xff]
      %v331 = vld [vmem:[%s1 + $0x1c0] sm:$0xff]
      %v332 = vld [vmem:[%s1 + $0x1c8] sm:$0xff]
      %v333 = vld [vmem:[%s1 + $0x1d0] sm:$0xff]
      %v334 = vld [vmem:[%s1 + $0x1d8] sm:$0xff]
      %v335 = vld [vmem:[%s1 + $0x1e0] sm:$0xff]
      %v336 = vld [vmem:[%s1 + $0x1e8] sm:$0xff]
      %v337 = vld [vmem:[%s1 + $0x1f0] sm:$0xff]
      %v338 = vld [vmem:[%s1 + $0x1f8] sm:$0x7f]
      %v339 = vld [vmem:[%s1 + $0x200] sm:$0x7f]
      %v340 = vld [vmem:[%s1 + $0x208] sm:$0x7f]
      %v341 = vld [vmem:[%s1 + $0x210] sm:$0x7f]
      %v342 = vld [vmem:[%s1 + $0x218] sm:$0x7f]
      %v343 = vld [vmem:[%s1 + $0x220] sm:$0x7f]
      %v344 = vld [vmem:[%s1 + $0x228] sm:$0x7f]
      %v345 = vld [vmem:[%s2] ss:$4 sm:$0x7f]
      %v347 = vperm.slane %v345, 0
      %v348 = vperm.slane %v345, 1
      %v349 = vperm.slane %v345, 2
      %v350 = vperm.slane %v345, 3
      %v351 = vperm.slane %v345, 4
      %v352 = vperm.slane %v345, 5
      %v353 = vperm.slane %v345, 6
      %vm361 = vcmask 646144
      %v363 = vsel %vm361, %v274, 0
      %vm365 = vcmask 1046528
      %v367 = vsel %vm365, %v338, 0
      %v370 = vsel %vm365, %v339, 0
      %v373 = vsel %vm365, %v340, 0
      %v376 = vsel %vm365, %v341, 0
      %v379 = vsel %vm365, %v342, 0
      %v382 = vsel %vm365, %v343, 0
      %v385 = vsel %vm365, %v344, 0
      %387 = vmatpush.msra.mxu0 0.0
      %388 = vmatpush.msra.mxu0 0.0
      %389 = vmatpush.msra.mxu0 0.0
      %390 = vmatpush.msra.mxu0 0.0
      %391 = vmatpush.msra.mxu0 0.0
      %392 = vmatpush.msra.mxu0 0.0
      %393 = vmatpush.msra.mxu0 %v367
      %394 = vmatpush.msra.mxu0 %v331
      %395 = vmatpush.msra.mxu0 %v324
      %396 = vmatpush.msra.mxu0 %v317
      %397 = vmatpush.msra.mxu0 %v310
      %398 = vmatpush.msra.mxu0 %v303
      %399 = vmatpush.msra.mxu0 %v296
      %400 = vmatpush.msra.mxu0 %v289
      %401 = vmatpush.msra.mxu0 %v282
      %402 = vmatpush.msra.mxu0 %v275
      %403 = vmatmul.f32.gmra.mxu0 %v363
      %v404 = vpop.f32.mrf.mxu0
      %v405 = vadd.f32 %v347, %v404
      %406 = vdwg.mxu0
      %407 = vmatpush.msra.mxu0 0.0
      %408 = vmatpush.msra.mxu0 0.0
      %409 = vmatpush.msra.mxu0 0.0
      %410 = vmatpush.msra.mxu0 0.0
      %411 = vmatpush.msra.mxu0 0.0
      %412 = vmatpush.msra.mxu0 0.0
      %413 = vmatpush.msra.mxu0 %v370
      %414 = vmatpush.msra.mxu0 %v332
      %415 = vmatpush.msra.mxu0 %v325
      %416 = vmatpush.msra.mxu0 %v318
      %417 = vmatpush.msra.mxu0 %v311
      %418 = vmatpush.msra.mxu0 %v304
      %419 = vmatpush.msra.mxu0 %v297
      %420 = vmatpush.msra.mxu0 %v290
      %421 = vmatpush.msra.mxu0 %v283
      %422 = vmatpush.msra.mxu0 %v276
      %423 = vmatmul.f32.gmra.mxu0 %v363
      %v424 = vpop.f32.mrf.mxu0
      %v425 = vadd.f32 %v348, %v424
      %426 = vdwg.mxu0
      %427 = vmatpush.msra.mxu0 0.0
      %428 = vmatpush.msra.mxu0 0.0
      %429 = vmatpush.msra.mxu0 0.0
      %430 = vmatpush.msra.mxu0 0.0
      %431 = vmatpush.msra.mxu0 0.0
      %432 = vmatpush.msra.mxu0 0.0
      %433 = vmatpush.msra.mxu0 %v373
      %434 = vmatpush.msra.mxu0 %v333
      %435 = vmatpush.msra.mxu0 %v326
      %436 = vmatpush.msra.mxu0 %v319
      %437 = vmatpush.msra.mxu0 %v312
      %438 = vmatpush.msra.mxu0 %v305
      %439 = vmatpush.msra.mxu0 %v298
      %440 = vmatpush.msra.mxu0 %v291
      %441 = vmatpush.msra.mxu0 %v284
      %442 = vmatpush.msra.mxu0 %v277
      %443 = vmatmul.f32.gmra.mxu0 %v363
      %v444 = vpop.f32.mrf.mxu0
      %v445 = vadd.f32 %v349, %v444
      %446 = vdwg.mxu0
      %447 = vmatpush.msra.mxu0 0.0
      %448 = vmatpush.msra.mxu0 0.0
      %449 = vmatpush.msra.mxu0 0.0
      %450 = vmatpush.msra.mxu0 0.0
      %451 = vmatpush.msra.mxu0 0.0
      %452 = vmatpush.msra.mxu0 0.0
      %453 = vmatpush.msra.mxu0 %v376
      %454 = vmatpush.msra.mxu0 %v334
      %455 = vmatpush.msra.mxu0 %v327
      %456 = vmatpush.msra.mxu0 %v320
      %457 = vmatpush.msra.mxu0 %v313
      %458 = vmatpush.msra.mxu0 %v306
      %459 = vmatpush.msra.mxu0 %v299
      %460 = vmatpush.msra.mxu0 %v292
      %461 = vmatpush.msra.mxu0 %v285
      %462 = vmatpush.msra.mxu0 %v278
      %463 = vmatmul.f32.gmra.mxu0 %v363
      %v464 = vpop.f32.mrf.mxu0
      %v465 = vadd.f32 %v350, %v464
      %466 = vdwg.mxu0
      %467 = vmatpush.msra.mxu0 0.0
      %468 = vmatpush.msra.mxu0 0.0
      %469 = vmatpush.msra.mxu0 0.0
      %470 = vmatpush.msra.mxu0 0.0
      %471 = vmatpush.msra.mxu0 0.0
      %472 = vmatpush.msra.mxu0 0.0
      %473 = vmatpush.msra.mxu0 %v379
      %474 = vmatpush.msra.mxu0 %v335
      %475 = vmatpush.msra.mxu0 %v328
      %476 = vmatpush.msra.mxu0 %v321
      %477 = vmatpush.msra.mxu0 %v314
      %478 = vmatpush.msra.mxu0 %v307
      %479 = vmatpush.msra.mxu0 %v300
      %480 = vmatpush.msra.mxu0 %v293
      %481 = vmatpush.msra.mxu0 %v286
      %482 = vmatpush.msra.mxu0 %v279
      %483 = vmatmul.f32.gmra.mxu0 %v363
      %v484 = vpop.f32.mrf.mxu0
      %v485 = vadd.f32 %v351, %v484
      %486 = vdwg.mxu0
      %487 = vmatpush.msra.mxu0 0.0
      %488 = vmatpush.msra.mxu0 0.0
      %489 = vmatpush.msra.mxu0 0.0
      %490 = vmatpush.msra.mxu0 0.0
      %491 = vmatpush.msra.mxu0 0.0
      %492 = vmatpush.msra.mxu0 0.0
      %493 = vmatpush.msra.mxu0 %v382
      %494 = vmatpush.msra.mxu0 %v336
      %495 = vmatpush.msra.mxu0 %v329
      %496 = vmatpush.msra.mxu0 %v322
      %497 = vmatpush.msra.mxu0 %v315
      %498 = vmatpush.msra.mxu0 %v308
      %499 = vmatpush.msra.mxu0 %v301
      %500 = vmatpush.msra.mxu0 %v294
      %501 = vmatpush.msra.mxu0 %v287
      %502 = vmatpush.msra.mxu0 %v280
      %503 = vmatmul.f32.gmra.mxu0 %v363
      %v504 = vpop.f32.mrf.mxu0
      %v505 = vadd.f32 %v352, %v504
      %506 = vdwg.mxu0
      %507 = vmatpush.msra.mxu0 0.0
      %508 = vmatpush.msra.mxu0 0.0
      %509 = vmatpush.msra.mxu0 0.0
      %510 = vmatpush.msra.mxu0 0.0
      %511 = vmatpush.msra.mxu0 0.0
      %512 = vmatpush.msra.mxu0 0.0
      %513 = vmatpush.msra.mxu0 %v385
      %514 = vmatpush.msra.mxu0 %v337
      %515 = vmatpush.msra.mxu0 %v330
      %516 = vmatpush.msra.mxu0 %v323
      %517 = vmatpush.msra.mxu0 %v316
      %518 = vmatpush.msra.mxu0 %v309
      %519 = vmatpush.msra.mxu0 %v302
      %520 = vmatpush.msra.mxu0 %v295
      %521 = vmatpush.msra.mxu0 %v288
      %522 = vmatpush.msra.mxu0 %v281
      %523 = vmatmul.f32.gmra.mxu0 %v363
      %v524 = vpop.f32.mrf.mxu0
      %v525 = vadd.f32 %v353, %v524
      %526 = vdwg.mxu0
      %v527 = vmax.f32 %v405, 0.0
      %v528 = vmax.f32 %v425, 0.0
      %v529 = vmax.f32 %v445, 0.0
      %v530 = vmax.f32 %v465, 0.0
      %v531 = vmax.f32 %v485, 0.0
      %v532 = vmax.f32 %v505, 0.0
      %v533 = vmax.f32 %v525, 0.0
      %s534 = scalar_lea.vmem %s2, 1
      %v535 = vld [vmem:[%s534] ss:$4 sm:$0x7f]
      %v537 = vperm.slane %v535, 0
      %v538 = vperm.slane %v535, 1
      %v539 = vperm.slane %v535, 2
      %v540 = vperm.slane %v535, 3
      %v541 = vperm.slane %v535, 4
      %v542 = vperm.slane %v535, 5
      %v543 = vperm.slane %v535, 6
      %v551 = vmul.f32 %v527, %v537
      %v552 = vmul.f32 %v528, %v538
      %v553 = vmul.f32 %v529, %v539
      %v554 = vmul.f32 %v530, %v540
      %v555 = vmul.f32 %v531, %v541
      %v556 = vmul.f32 %v532, %v542
      %v557 = vmul.f32 %v533, %v543
      %s558 = scalar_lea.vmem %s2, 2
      %v559 = vld [vmem:[%s558] ss:$4 sm:$0x7f]
      %v561 = vperm.slane %v559, 0
      %v562 = vperm.slane %v559, 1
      %v563 = vperm.slane %v559, 2
      %v564 = vperm.slane %v559, 3
      %v565 = vperm.slane %v559, 4
      %v566 = vperm.slane %v559, 5
      %v567 = vperm.slane %v559, 6
      %v575 = vadd.f32 %v551, %v561
      %v576 = vadd.f32 %v552, %v562
      %v577 = vadd.f32 %v553, %v563
      %v578 = vadd.f32 %v554, %v564
      %v579 = vadd.f32 %v555, %v565
      %v580 = vadd.f32 %v556, %v566
      %v581 = vadd.f32 %v557, %v567
      %v582 = vld [vmem:[%s3] sm:$0xff]
      %v583 = vld [vmem:[%s3 + $0x8] sm:$0xff]
      %v584 = vld [vmem:[%s3 + $0x10] sm:$0xff]
      %v585 = vld [vmem:[%s3 + $0x18] sm:$0xff]
      %v586 = vld [vmem:[%s3 + $0x20] sm:$0xff]
      %v587 = vld [vmem:[%s3 + $0x28] sm:$0xff]
      %v588 = vld [vmem:[%s3 + $0x30] sm:$0xff]
      %v589 = vld [vmem:[%s3 + $0x38] sm:$0xff]
      %v590 = vld [vmem:[%s3 + $0x40] sm:$0xff]
      %v591 = vld [vmem:[%s3 + $0x48] sm:$0xff]
      %v592 = vld [vmem:[%s3 + $0x50] sm:$0xff]
      %v593 = vld [vmem:[%s3 + $0x58] sm:$0xff]
      %v594 = vld [vmem:[%s3 + $0x60] sm:$0xff]
      %v595 = vld [vmem:[%s3 + $0x68] sm:$0xff]
      %v596 = vld [vmem:[%s3 + $0x70] sm:$0xff]
      %v597 = vld [vmem:[%s3 + $0x78] sm:$0xff]
      %v598 = vld [vmem:[%s3 + $0x80] sm:$0xff]
      %v599 = vld [vmem:[%s3 + $0x88] sm:$0xff]
      %v600 = vld [vmem:[%s3 + $0x90] sm:$0xff]
      %v601 = vld [vmem:[%s3 + $0x98] sm:$0xff]
      %v602 = vld [vmem:[%s3 + $0xa0] sm:$0xff]
      %v603 = vld [vmem:[%s3 + $0xa8] sm:$0xff]
      %v604 = vld [vmem:[%s3 + $0xb0] sm:$0xff]
      %v605 = vld [vmem:[%s3 + $0xb8] sm:$0xff]
      %v606 = vld [vmem:[%s3 + $0xc0] sm:$0xff]
      %v607 = vld [vmem:[%s3 + $0xc8] sm:$0xff]
      %v608 = vld [vmem:[%s3 + $0xd0] sm:$0xff]
      %v609 = vld [vmem:[%s3 + $0xd8] sm:$0xff]
      %v610 = vld [vmem:[%s3 + $0xe0] sm:$0xff]
      %v611 = vld [vmem:[%s3 + $0xe8] sm:$0xff]
      %v612 = vld [vmem:[%s3 + $0xf0] sm:$0xff]
      %v613 = vld [vmem:[%s3 + $0xf8] sm:$0xff]
      %v614 = vld [vmem:[%s3 + $0x100] sm:$0xff]
      %v615 = vld [vmem:[%s3 + $0x108] sm:$0xff]
      %v616 = vld [vmem:[%s3 + $0x110] sm:$0xff]
      %v617 = vld [vmem:[%s3 + $0x118] sm:$0xff]
      %v618 = vld [vmem:[%s3 + $0x120] sm:$0xff]
      %v619 = vld [vmem:[%s3 + $0x128] sm:$0xff]
      %v620 = vld [vmem:[%s3 + $0x130] sm:$0xff]
      %v621 = vld [vmem:[%s3 + $0x138] sm:$0xff]
      %v622 = vld [vmem:[%s3 + $0x140] sm:$0xff]
      %v623 = vld [vmem:[%s3 + $0x148] sm:$0xff]
      %v624 = vld [vmem:[%s3 + $0x150] sm:$0xff]
      %v625 = vld [vmem:[%s3 + $0x158] sm:$0xff]
      %v626 = vld [vmem:[%s3 + $0x160] sm:$0xff]
      %v627 = vld [vmem:[%s3 + $0x168] sm:$0xff]
      %v628 = vld [vmem:[%s3 + $0x170] sm:$0xff]
      %v629 = vld [vmem:[%s3 + $0x178] sm:$0xff]
      %v630 = vld [vmem:[%s3 + $0x180] sm:$0xff]
      %v631 = vld [vmem:[%s3 + $0x188] sm:$0xff]
      %v632 = vld [vmem:[%s3 + $0x190] sm:$0xff]
      %v633 = vld [vmem:[%s3 + $0x198] sm:$0xff]
      %v634 = vld [vmem:[%s3 + $0x1a0] sm:$0xff]
      %v635 = vld [vmem:[%s3 + $0x1a8] sm:$0xff]
      %v636 = vld [vmem:[%s3 + $0x1b0] sm:$0xff]
      %v637 = vld [vmem:[%s3 + $0x1b8] sm:$0xff]
      %v638 = vld [vmem:[%s3 + $0x1c0] sm:$0xff]
      %v639 = vld [vmem:[%s3 + $0x1c8] sm:$0xff]
      %v640 = vld [vmem:[%s3 + $0x1d0] sm:$0xff]
      %v641 = vld [vmem:[%s3 + $0x1d8] sm:$0xff]
      %v642 = vld [vmem:[%s3 + $0x1e0] sm:$0xff]
      %v643 = vld [vmem:[%s3 + $0x1e8] sm:$0xff]
      %v644 = vld [vmem:[%s3 + $0x1f0] sm:$0xff]
      %v645 = vld [vmem:[%s3 + $0x1f8] sm:$0xff]
      %v646 = vld [vmem:[%s3 + $0x200] sm:$0xff]
      %v647 = vld [vmem:[%s3 + $0x208] sm:$0xff]
      %v648 = vld [vmem:[%s3 + $0x210] sm:$0xff]
      %v649 = vld [vmem:[%s3 + $0x218] sm:$0xff]
      %v650 = vld [vmem:[%s3 + $0x220] sm:$0xff]
      %v651 = vld [vmem:[%s3 + $0x228] sm:$0xff]
      %v652 = vld [vmem:[%s3 + $0x230] sm:$0xff]
      %v653 = vld [vmem:[%s3 + $0x238] sm:$0xff]
      %v654 = vld [vmem:[%s3 + $0x240] sm:$0xff]
      %v655 = vld [vmem:[%s3 + $0x248] sm:$0xff]
      %v656 = vld [vmem:[%s3 + $0x250] sm:$0xff]
      %v657 = vld [vmem:[%s3 + $0x258] sm:$0xff]
      %v658 = vld [vmem:[%s3 + $0x260] sm:$0xff]
      %v659 = vld [vmem:[%s3 + $0x268] sm:$0xff]
      %v660 = vld [vmem:[%s3 + $0x270] sm:$0xff]
      %v661 = vld [vmem:[%s3 + $0x278] sm:$0xff]
      %v662 = vld [vmem:[%s3 + $0x280] sm:$0xff]
      %v663 = vld [vmem:[%s3 + $0x288] sm:$0xff]
      %v664 = vld [vmem:[%s3 + $0x290] sm:$0xff]
      %v665 = vld [vmem:[%s3 + $0x298] sm:$0xff]
      %v666 = vld [vmem:[%s3 + $0x2a0] sm:$0xff]
      %v667 = vld [vmem:[%s3 + $0x2a8] sm:$0xff]
      %v668 = vld [vmem:[%s3 + $0x2b0] sm:$0xff]
      %v669 = vld [vmem:[%s3 + $0x2b8] sm:$0xff]
      %v670 = vld [vmem:[%s3 + $0x2c0] sm:$0xff]
      %v671 = vld [vmem:[%s3 + $0x2c8] sm:$0xff]
      %v672 = vld [vmem:[%s3 + $0x2d0] sm:$0xff]
      %v673 = vld [vmem:[%s3 + $0x2d8] sm:$0xff]
      %v674 = vld [vmem:[%s3 + $0x2e0] sm:$0xff]
      %v675 = vld [vmem:[%s3 + $0x2e8] sm:$0xff]
      %v676 = vld [vmem:[%s3 + $0x2f0] sm:$0xff]
      %v677 = vld [vmem:[%s3 + $0x2f8] sm:$0xff]
      %v678 = vld [vmem:[%s3 + $0x300] sm:$0xff]
      %v679 = vld [vmem:[%s3 + $0x308] sm:$0xff]
      %v680 = vld [vmem:[%s3 + $0x310] sm:$0xff]
      %v681 = vld [vmem:[%s3 + $0x318] sm:$0xff]
      %v682 = vld [vmem:[%s3 + $0x320] sm:$0xff]
      %v683 = vld [vmem:[%s3 + $0x328] sm:$0xff]
      %v684 = vld [vmem:[%s3 + $0x330] sm:$0xff]
      %v685 = vld [vmem:[%s3 + $0x338] sm:$0xff]
      %v686 = vld [vmem:[%s3 + $0x340] sm:$0xff]
      %v687 = vld [vmem:[%s3 + $0x348] sm:$0xff]
      %v688 = vld [vmem:[%s3 + $0x350] sm:$0xff]
      %v689 = vld [vmem:[%s3 + $0x358] sm:$0xff]
      %v690 = vld [vmem:[%s3 + $0x360] sm:$0xff]
      %v691 = vld [vmem:[%s3 + $0x368] sm:$0xff]
      %v692 = vld [vmem:[%s3 + $0x370] sm:$0xff]
      %v693 = vld [vmem:[%s3 + $0x378] sm:$0xff]
      %v694 = vld [vmem:[%s3 + $0x380] sm:$0xff]
      %v695 = vld [vmem:[%s3 + $0x388] sm:$0xff]
      %v696 = vld [vmem:[%s3 + $0x390] sm:$0xff]
      %v697 = vld [vmem:[%s3 + $0x398] sm:$0xff]
      %v698 = vld [vmem:[%s3 + $0x3a0] sm:$0xff]
      %v699 = vld [vmem:[%s3 + $0x3a8] sm:$0xff]
      %v700 = vld [vmem:[%s3 + $0x3b0] sm:$0xff]
      %v701 = vld [vmem:[%s3 + $0x3b8] sm:$0xff]
      %v702 = vld [vmem:[%s3 + $0x3c0] sm:$0xff]
      %v703 = vld [vmem:[%s3 + $0x3c8] sm:$0xff]
      %v704 = vld [vmem:[%s3 + $0x3d0] sm:$0xff]
      %v705 = vld [vmem:[%s3 + $0x3d8] sm:$0xff]
      %v706 = vld [vmem:[%s3 + $0x3e0] sm:$0xff]
      %v707 = vld [vmem:[%s3 + $0x3e8] sm:$0xff]
      %v708 = vld [vmem:[%s3 + $0x3f0] sm:$0xff]
      %v709 = vld [vmem:[%s3 + $0x3f8] sm:$0xff]
      %v710 = vld [vmem:[%s3 + $0x400] sm:$0xff]
      %v711 = vld [vmem:[%s3 + $0x408] sm:$0xff]
      %v712 = vld [vmem:[%s3 + $0x410] sm:$0xff]
      %v713 = vld [vmem:[%s3 + $0x418] sm:$0xff]
      %v714 = vld [vmem:[%s3 + $0x420] sm:$0xff]
      %v715 = vld [vmem:[%s3 + $0x428] sm:$0xff]
      %v716 = vld [vmem:[%s3 + $0x430] sm:$0xff]
      %v717 = vld [vmem:[%s3 + $0x438] sm:$0xff]
      %v718 = vld [vmem:[%s3 + $0x440] sm:$0xff]
      %v719 = vld [vmem:[%s3 + $0x448] sm:$0xff]
      %v720 = vld [vmem:[%s3 + $0x450] sm:$0xff]
      %v721 = vld [vmem:[%s3 + $0x458] sm:$0xff]
      %v722 = vld [vmem:[%s3 + $0x460] sm:$0xff]
      %v723 = vld [vmem:[%s3 + $0x468] sm:$0xff]
      %v724 = vld [vmem:[%s3 + $0x470] sm:$0xff]
      %v725 = vld [vmem:[%s3 + $0x478] sm:$0xff]
      %v726 = vld [vmem:[%s3 + $0x480] sm:$0xff]
      %v727 = vld [vmem:[%s3 + $0x488] sm:$0xff]
      %v728 = vld [vmem:[%s3 + $0x490] sm:$0xff]
      %v729 = vld [vmem:[%s3 + $0x498] sm:$0xff]
      %v730 = vld [vmem:[%s3 + $0x4a0] sm:$0xff]
      %v731 = vld [vmem:[%s3 + $0x4a8] sm:$0xff]
      %v732 = vld [vmem:[%s3 + $0x4b0] sm:$0xff]
      %v733 = vld [vmem:[%s3 + $0x4b8] sm:$0xff]
      %v734 = vld [vmem:[%s3 + $0x4c0] sm:$0xff]
      %v735 = vld [vmem:[%s3 + $0x4c8] sm:$0xff]
      %v736 = vld [vmem:[%s3 + $0x4d0] sm:$0xff]
      %v737 = vld [vmem:[%s3 + $0x4d8] sm:$0xff]
      %v738 = vld [vmem:[%s3 + $0x4e0] sm:$0xff]
      %v739 = vld [vmem:[%s3 + $0x4e8] sm:$0xff]
      %v740 = vld [vmem:[%s3 + $0x4f0] sm:$0xff]
      %v741 = vld [vmem:[%s3 + $0x4f8] sm:$0xff]
      %v742 = vld [vmem:[%s3 + $0x500] sm:$0xff]
      %v743 = vld [vmem:[%s3 + $0x508] sm:$0xff]
      %v744 = vld [vmem:[%s3 + $0x510] sm:$0xff]
      %v745 = vld [vmem:[%s3 + $0x518] sm:$0xff]
      %v746 = vld [vmem:[%s3 + $0x520] sm:$0xff]
      %v747 = vld [vmem:[%s3 + $0x528] sm:$0xff]
      %v748 = vld [vmem:[%s3 + $0x530] sm:$0xff]
      %v749 = vld [vmem:[%s3 + $0x538] sm:$0xff]
      %v750 = vld [vmem:[%s3 + $0x540] sm:$0xff]
      %v751 = vld [vmem:[%s3 + $0x548] sm:$0xff]
      %v752 = vld [vmem:[%s3 + $0x550] sm:$0xff]
      %v753 = vld [vmem:[%s3 + $0x558] sm:$0xff]
      %v754 = vld [vmem:[%s3 + $0x560] sm:$0xff]
      %v755 = vld [vmem:[%s3 + $0x568] sm:$0xff]
      %v756 = vld [vmem:[%s3 + $0x570] sm:$0xff]
      %v757 = vld [vmem:[%s3 + $0x578] sm:$0xff]
      %v758 = vld [vmem:[%s3 + $0x580] sm:$0xff]
      %v759 = vld [vmem:[%s3 + $0x588] sm:$0xff]
      %v760 = vld [vmem:[%s3 + $0x590] sm:$0xff]
      %v761 = vld [vmem:[%s3 + $0x598] sm:$0xff]
      %v762 = vld [vmem:[%s3 + $0x5a0] sm:$0xff]
      %v763 = vld [vmem:[%s3 + $0x5a8] sm:$0xff]
      %v764 = vld [vmem:[%s3 + $0x5b0] sm:$0xff]
      %v765 = vld [vmem:[%s3 + $0x5b8] sm:$0xff]
      %v766 = vld [vmem:[%s3 + $0x5c0] sm:$0xff]
      %v767 = vld [vmem:[%s3 + $0x5c8] sm:$0xff]
      %v768 = vld [vmem:[%s3 + $0x5d0] sm:$0xff]
      %v769 = vld [vmem:[%s3 + $0x5d8] sm:$0xff]
      %v770 = vld [vmem:[%s3 + $0x5e0] sm:$0xff]
      %v771 = vld [vmem:[%s3 + $0x5e8] sm:$0xff]
      %v772 = vld [vmem:[%s3 + $0x5f0] sm:$0xff]
      %v773 = vld [vmem:[%s3 + $0x5f8] sm:$0xff]
      %v774 = vld [vmem:[%s3 + $0x600] sm:$0xff]
      %v775 = vld [vmem:[%s3 + $0x608] sm:$0xff]
      %v776 = vld [vmem:[%s3 + $0x610] sm:$0xff]
      %v777 = vld [vmem:[%s3 + $0x618] sm:$0xff]
      %v778 = vld [vmem:[%s3 + $0x620] sm:$0xff]
      %v779 = vld [vmem:[%s3 + $0x628] sm:$0xff]
      %v780 = vld [vmem:[%s3 + $0x630] sm:$0xff]
      %v781 = vld [vmem:[%s3 + $0x638] sm:$0xff]
      %v782 = vld [vmem:[%s3 + $0x640] sm:$0xff]
      %v783 = vld [vmem:[%s3 + $0x648] sm:$0xff]
      %v784 = vld [vmem:[%s3 + $0x650] sm:$0xff]
      %v785 = vld [vmem:[%s3 + $0x658] sm:$0xff]
      %v786 = vld [vmem:[%s3 + $0x660] sm:$0xff]
      %v787 = vld [vmem:[%s3 + $0x668] sm:$0xff]
      %v788 = vld [vmem:[%s3 + $0x670] sm:$0xff]
      %v789 = vld [vmem:[%s3 + $0x678] sm:$0xff]
      %v790 = vld [vmem:[%s3 + $0x680] sm:$0xff]
      %v791 = vld [vmem:[%s3 + $0x688] sm:$0xff]
      %v792 = vld [vmem:[%s3 + $0x690] sm:$0xff]
      %v793 = vld [vmem:[%s3 + $0x698] sm:$0xff]
      %v794 = vld [vmem:[%s3 + $0x6a0] sm:$0xff]
      %v795 = vld [vmem:[%s3 + $0x6a8] sm:$0xff]
      %v796 = vld [vmem:[%s3 + $0x6b0] sm:$0xff]
      %v797 = vld [vmem:[%s3 + $0x6b8] sm:$0xff]
      %v798 = vld [vmem:[%s3 + $0x6c0] sm:$0xff]
      %v799 = vld [vmem:[%s3 + $0x6c8] sm:$0xff]
      %v800 = vld [vmem:[%s3 + $0x6d0] sm:$0xff]
      %v801 = vld [vmem:[%s3 + $0x6d8] sm:$0xff]
      %v802 = vld [vmem:[%s3 + $0x6e0] sm:$0xff]
      %v803 = vld [vmem:[%s3 + $0x6e8] sm:$0xff]
      %v804 = vld [vmem:[%s3 + $0x6f0] sm:$0xff]
      %v805 = vld [vmem:[%s3 + $0x6f8] sm:$0xff]
      %v806 = vld [vmem:[%s3 + $0x700] sm:$0xff]
      %v807 = vld [vmem:[%s3 + $0x708] sm:$0xff]
      %v808 = vld [vmem:[%s3 + $0x710] sm:$0xff]
      %v809 = vld [vmem:[%s3 + $0x718] sm:$0xff]
      %v810 = vld [vmem:[%s3 + $0x720] sm:$0xff]
      %v811 = vld [vmem:[%s3 + $0x728] sm:$0xff]
      %v812 = vld [vmem:[%s3 + $0x730] sm:$0xff]
      %v813 = vld [vmem:[%s3 + $0x738] sm:$0xff]
      %v814 = vld [vmem:[%s3 + $0x740] sm:$0xff]
      %v815 = vld [vmem:[%s3 + $0x748] sm:$0xff]
      %v816 = vld [vmem:[%s3 + $0x750] sm:$0xff]
      %v817 = vld [vmem:[%s3 + $0x758] sm:$0xff]
      %v818 = vld [vmem:[%s3 + $0x760] sm:$0xff]
      %v819 = vld [vmem:[%s3 + $0x768] sm:$0xff]
      %v820 = vld [vmem:[%s3 + $0x770] sm:$0xff]
      %v821 = vld [vmem:[%s3 + $0x778] sm:$0xff]
      %v822 = vld [vmem:[%s3 + $0x780] sm:$0xff]
      %v823 = vld [vmem:[%s3 + $0x788] sm:$0xff]
      %v824 = vld [vmem:[%s3 + $0x790] sm:$0xff]
      %v825 = vld [vmem:[%s3 + $0x798] sm:$0xff]
      %v826 = vld [vmem:[%s3 + $0x7a0] sm:$0xff]
      %v827 = vld [vmem:[%s3 + $0x7a8] sm:$0xff]
      %v828 = vld [vmem:[%s3 + $0x7b0] sm:$0xff]
      %v829 = vld [vmem:[%s3 + $0x7b8] sm:$0xff]
      %v830 = vld [vmem:[%s3 + $0x7c0] sm:$0xff]
      %v831 = vld [vmem:[%s3 + $0x7c8] sm:$0xff]
      %v832 = vld [vmem:[%s3 + $0x7d0] sm:$0xff]
      %v833 = vld [vmem:[%s3 + $0x7d8] sm:$0xff]
      %v834 = vld [vmem:[%s3 + $0x7e0] sm:$0xff]
      %v835 = vld [vmem:[%s3 + $0x7e8] sm:$0xff]
      %v836 = vld [vmem:[%s3 + $0x7f0] sm:$0xff]
      %v837 = vld [vmem:[%s3 + $0x7f8] sm:$0xff]
      %v838 = vld [vmem:[%s3 + $0x800] sm:$0xff]
      %v839 = vld [vmem:[%s3 + $0x808] sm:$0xff]
      %v840 = vld [vmem:[%s3 + $0x810] sm:$0xff]
      %v841 = vld [vmem:[%s3 + $0x818] sm:$0xff]
      %v842 = vld [vmem:[%s3 + $0x820] sm:$0xff]
      %v843 = vld [vmem:[%s3 + $0x828] sm:$0xff]
      %v844 = vld [vmem:[%s3 + $0x830] sm:$0xff]
      %v845 = vld [vmem:[%s3 + $0x838] sm:$0xff]
      %v846 = vld [vmem:[%s3 + $0x840] sm:$0xff]
      %v847 = vld [vmem:[%s3 + $0x848] sm:$0xff]
      %v848 = vld [vmem:[%s3 + $0x850] sm:$0xff]
      %v849 = vld [vmem:[%s3 + $0x858] sm:$0xff]
      %v850 = vld [vmem:[%s3 + $0x860] sm:$0xff]
      %v851 = vld [vmem:[%s3 + $0x868] sm:$0xff]
      %v852 = vld [vmem:[%s3 + $0x870] sm:$0xff]
      %v853 = vld [vmem:[%s3 + $0x878] sm:$0xff]
      %v854 = vld [vmem:[%s3 + $0x880] sm:$0xff]
      %v855 = vld [vmem:[%s3 + $0x888] sm:$0xff]
      %v856 = vld [vmem:[%s3 + $0x890] sm:$0xff]
      %v857 = vld [vmem:[%s3 + $0x898] sm:$0xff]
      %v858 = vld [vmem:[%s3 + $0x8a0] sm:$0xff]
      %v859 = vld [vmem:[%s3 + $0x8a8] sm:$0xff]
      %v860 = vld [vmem:[%s3 + $0x8b0] sm:$0xff]
      %v861 = vld [vmem:[%s3 + $0x8b8] sm:$0xff]
      %v862 = vld [vmem:[%s3 + $0x8c0] sm:$0xff]
      %v863 = vld [vmem:[%s3 + $0x8c8] sm:$0xff]
      %v864 = vld [vmem:[%s3 + $0x8d0] sm:$0xff]
      %v865 = vld [vmem:[%s3 + $0x8d8] sm:$0xff]
      %v866 = vld [vmem:[%s3 + $0x8e0] sm:$0xff]
      %v867 = vld [vmem:[%s3 + $0x8e8] sm:$0xff]
      %v868 = vld [vmem:[%s3 + $0x8f0] sm:$0xff]
      %v869 = vld [vmem:[%s3 + $0x8f8] sm:$0xff]
      %v870 = vld [vmem:[%s3 + $0x900] sm:$0xff]
      %v871 = vld [vmem:[%s3 + $0x908] sm:$0xff]
      %v872 = vld [vmem:[%s3 + $0x910] sm:$0xff]
      %v873 = vld [vmem:[%s3 + $0x918] sm:$0xff]
      %v874 = vld [vmem:[%s3 + $0x920] sm:$0xff]
      %v875 = vld [vmem:[%s3 + $0x928] sm:$0xff]
      %v876 = vld [vmem:[%s3 + $0x930] sm:$0xff]
      %v877 = vld [vmem:[%s3 + $0x938] sm:$0xff]
      %v878 = vld [vmem:[%s3 + $0x940] sm:$0xff]
      %v879 = vld [vmem:[%s3 + $0x948] sm:$0xff]
      %v880 = vld [vmem:[%s3 + $0x950] sm:$0xff]
      %v881 = vld [vmem:[%s3 + $0x958] sm:$0xff]
      %v882 = vld [vmem:[%s3 + $0x960] sm:$0xff]
      %v883 = vld [vmem:[%s3 + $0x968] sm:$0xff]
      %v884 = vld [vmem:[%s3 + $0x970] sm:$0xff]
      %v885 = vld [vmem:[%s3 + $0x978] sm:$0xff]
      %v886 = vld [vmem:[%s3 + $0x980] sm:$0xff]
      %v887 = vld [vmem:[%s3 + $0x988] sm:$0xff]
      %v888 = vld [vmem:[%s3 + $0x990] sm:$0xff]
      %v889 = vld [vmem:[%s3 + $0x998] sm:$0xff]
      %v890 = vld [vmem:[%s3 + $0x9a0] sm:$0xff]
      %v891 = vld [vmem:[%s3 + $0x9a8] sm:$0xff]
      %v892 = vld [vmem:[%s3 + $0x9b0] sm:$0xff]
      %v893 = vld [vmem:[%s3 + $0x9b8] sm:$0xff]
      %v894 = vld [vmem:[%s3 + $0x9c0] sm:$0xff]
      %v895 = vld [vmem:[%s3 + $0x9c8] sm:$0xff]
      %v896 = vld [vmem:[%s3 + $0x9d0] sm:$0xff]
      %v897 = vld [vmem:[%s3 + $0x9d8] sm:$0xff]
      %v898 = vld [vmem:[%s3 + $0x9e0] sm:$0xff]
      %v899 = vld [vmem:[%s3 + $0x9e8] sm:$0xff]
      %v900 = vld [vmem:[%s3 + $0x9f0] sm:$0xff]
      %v901 = vld [vmem:[%s3 + $0x9f8] sm:$0xff]
      %v902 = vld [vmem:[%s3 + $0xa00] sm:$0xff]
      %v903 = vld [vmem:[%s3 + $0xa08] sm:$0xff]
      %v904 = vld [vmem:[%s3 + $0xa10] sm:$0xff]
      %v905 = vld [vmem:[%s3 + $0xa18] sm:$0xff]
      %v906 = vld [vmem:[%s3 + $0xa20] sm:$0xff]
      %v907 = vld [vmem:[%s3 + $0xa28] sm:$0xff]
      %v908 = vld [vmem:[%s3 + $0xa30] sm:$0xff]
      %v909 = vld [vmem:[%s3 + $0xa38] sm:$0xff]
      %v910 = vld [vmem:[%s3 + $0xa40] sm:$0xff]
      %v911 = vld [vmem:[%s3 + $0xa48] sm:$0xff]
      %v912 = vld [vmem:[%s3 + $0xa50] sm:$0xff]
      %v913 = vld [vmem:[%s3 + $0xa58] sm:$0xff]
      %v914 = vld [vmem:[%s3 + $0xa60] sm:$0xff]
      %v915 = vld [vmem:[%s3 + $0xa68] sm:$0xff]
      %v916 = vld [vmem:[%s3 + $0xa70] sm:$0xff]
      %v917 = vld [vmem:[%s3 + $0xa78] sm:$0xff]
      %v918 = vld [vmem:[%s3 + $0xa80] sm:$0xff]
      %v919 = vld [vmem:[%s3 + $0xa88] sm:$0xff]
      %v920 = vld [vmem:[%s3 + $0xa90] sm:$0xff]
      %v921 = vld [vmem:[%s3 + $0xa98] sm:$0xff]
      %v922 = vld [vmem:[%s3 + $0xaa0] sm:$0xff]
      %v923 = vld [vmem:[%s3 + $0xaa8] sm:$0xff]
      %v924 = vld [vmem:[%s3 + $0xab0] sm:$0xff]
      %v925 = vld [vmem:[%s3 + $0xab8] sm:$0xff]
      %v926 = vld [vmem:[%s3 + $0xac0] sm:$0xff]
      %v927 = vld [vmem:[%s3 + $0xac8] sm:$0xff]
      %v928 = vld [vmem:[%s3 + $0xad0] sm:$0xff]
      %v929 = vld [vmem:[%s3 + $0xad8] sm:$0xff]
      %v930 = vld [vmem:[%s3 + $0xae0] sm:$0xff]
      %v931 = vld [vmem:[%s3 + $0xae8] sm:$0xff]
      %v932 = vld [vmem:[%s3 + $0xaf0] sm:$0xff]
      %v933 = vld [vmem:[%s3 + $0xaf8] sm:$0xff]
      %v934 = vld [vmem:[%s3 + $0xb00] sm:$0xff]
      %v935 = vld [vmem:[%s3 + $0xb08] sm:$0xff]
      %v936 = vld [vmem:[%s3 + $0xb10] sm:$0xff]
      %v937 = vld [vmem:[%s3 + $0xb18] sm:$0xff]
      %v938 = vld [vmem:[%s3 + $0xb20] sm:$0xff]
      %v939 = vld [vmem:[%s3 + $0xb28] sm:$0xff]
      %v940 = vld [vmem:[%s3 + $0xb30] sm:$0xff]
      %v941 = vld [vmem:[%s3 + $0xb38] sm:$0xff]
      %v942 = vld [vmem:[%s3 + $0xb40] sm:$0xff]
      %v943 = vld [vmem:[%s3 + $0xb48] sm:$0xff]
      %v944 = vld [vmem:[%s3 + $0xb50] sm:$0xff]
      %v945 = vld [vmem:[%s3 + $0xb58] sm:$0xff]
      %v946 = vld [vmem:[%s3 + $0xb60] sm:$0xff]
      %v947 = vld [vmem:[%s3 + $0xb68] sm:$0xff]
      %v948 = vld [vmem:[%s3 + $0xb70] sm:$0xff]
      %v949 = vld [vmem:[%s3 + $0xb78] sm:$0xff]
      %v950 = vld [vmem:[%s3 + $0xb80] sm:$0xff]
      %v951 = vld [vmem:[%s3 + $0xb88] sm:$0xff]
      %v952 = vld [vmem:[%s3 + $0xb90] sm:$0xff]
      %v953 = vld [vmem:[%s3 + $0xb98] sm:$0xff]
      %v954 = vld [vmem:[%s3 + $0xba0] sm:$0xff]
      %v955 = vld [vmem:[%s3 + $0xba8] sm:$0xff]
      %v956 = vld [vmem:[%s3 + $0xbb0] sm:$0xff]
      %v957 = vld [vmem:[%s3 + $0xbb8] sm:$0xff]
      %v958 = vld [vmem:[%s3 + $0xbc0] sm:$0xff]
      %v959 = vld [vmem:[%s3 + $0xbc8] sm:$0xff]
      %v960 = vld [vmem:[%s3 + $0xbd0] sm:$0xff]
      %v961 = vld [vmem:[%s3 + $0xbd8] sm:$0xff]
      %v962 = vld [vmem:[%s3 + $0xbe0] sm:$0xff]
      %v963 = vld [vmem:[%s3 + $0xbe8] sm:$0xff]
      %v964 = vld [vmem:[%s3 + $0xbf0] sm:$0xff]
      %v965 = vld [vmem:[%s3 + $0xbf8] sm:$0xff]
      %v966 = vld [vmem:[%s3 + $0xc00] sm:$0xff]
      %v967 = vld [vmem:[%s3 + $0xc08] sm:$0xff]
      %v968 = vld [vmem:[%s3 + $0xc10] sm:$0xff]
      %v969 = vld [vmem:[%s3 + $0xc18] sm:$0xff]
      %v970 = vld [vmem:[%s3 + $0xc20] sm:$0xff]
      %v971 = vld [vmem:[%s3 + $0xc28] sm:$0xff]
      %v972 = vld [vmem:[%s3 + $0xc30] sm:$0xff]
      %v973 = vld [vmem:[%s3 + $0xc38] sm:$0xff]
      %v974 = vld [vmem:[%s3 + $0xc40] sm:$0xff]
      %v975 = vld [vmem:[%s3 + $0xc48] sm:$0xff]
      %v976 = vld [vmem:[%s3 + $0xc50] sm:$0xff]
      %v977 = vld [vmem:[%s3 + $0xc58] sm:$0xff]
      %v978 = vld [vmem:[%s3 + $0xc60] sm:$0xff]
      %v979 = vld [vmem:[%s3 + $0xc68] sm:$0xff]
      %v980 = vld [vmem:[%s3 + $0xc70] sm:$0xff]
      %v981 = vld [vmem:[%s3 + $0xc78] sm:$0xff]
      %v982 = vld [vmem:[%s3 + $0xc80] sm:$0xff]
      %v983 = vld [vmem:[%s3 + $0xc88] sm:$0xff]
      %v984 = vld [vmem:[%s3 + $0xc90] sm:$0xff]
      %v985 = vld [vmem:[%s3 + $0xc98] sm:$0xff]
      %v986 = vld [vmem:[%s3 + $0xca0] sm:$0xff]
      %v987 = vld [vmem:[%s3 + $0xca8] sm:$0xff]
      %v988 = vld [vmem:[%s3 + $0xcb0] sm:$0xff]
      %v989 = vld [vmem:[%s3 + $0xcb8] sm:$0xff]
      %v990 = vld [vmem:[%s3 + $0xcc0] sm:$0xff]
      %v991 = vld [vmem:[%s3 + $0xcc8] sm:$0xff]
      %v992 = vld [vmem:[%s3 + $0xcd0] sm:$0xff]
      %v993 = vld [vmem:[%s3 + $0xcd8] sm:$0xff]
      %v994 = vld [vmem:[%s3 + $0xce0] sm:$0xff]
      %v995 = vld [vmem:[%s3 + $0xce8] sm:$0xff]
      %v996 = vld [vmem:[%s3 + $0xcf0] sm:$0xff]
      %v997 = vld [vmem:[%s3 + $0xcf8] sm:$0xff]
      %v998 = vld [vmem:[%s3 + $0xd00] sm:$0xff]
      %v999 = vld [vmem:[%s3 + $0xd08] sm:$0xff]
      %v1000 = vld [vmem:[%s3 + $0xd10] sm:$0xff]
      %v1001 = vld [vmem:[%s3 + $0xd18] sm:$0xff]
      %v1002 = vld [vmem:[%s3 + $0xd20] sm:$0xff]
      %v1003 = vld [vmem:[%s3 + $0xd28] sm:$0xff]
      %v1004 = vld [vmem:[%s3 + $0xd30] sm:$0xff]
      %v1005 = vld [vmem:[%s3 + $0xd38] sm:$0xff]
      %v1006 = vld [vmem:[%s3 + $0xd40] sm:$0xff]
      %v1007 = vld [vmem:[%s3 + $0xd48] sm:$0xff]
      %v1008 = vld [vmem:[%s3 + $0xd50] sm:$0xff]
      %v1009 = vld [vmem:[%s3 + $0xd58] sm:$0xff]
      %v1010 = vld [vmem:[%s3 + $0xd60] sm:$0xff]
      %v1011 = vld [vmem:[%s3 + $0xd68] sm:$0xff]
      %v1012 = vld [vmem:[%s3 + $0xd70] sm:$0xff]
      %v1013 = vld [vmem:[%s3 + $0xd78] sm:$0xff]
      %v1014 = vld [vmem:[%s3 + $0xd80] sm:$0xff]
      %v1015 = vld [vmem:[%s3 + $0xd88] sm:$0xff]
      %v1016 = vld [vmem:[%s3 + $0xd90] sm:$0xff]
      %v1017 = vld [vmem:[%s3 + $0xd98] sm:$0xff]
      %v1018 = vld [vmem:[%s3 + $0xda0] sm:$0xff]
      %v1019 = vld [vmem:[%s3 + $0xda8] sm:$0xff]
      %v1020 = vld [vmem:[%s3 + $0xdb0] sm:$0xff]
      %v1021 = vld [vmem:[%s3 + $0xdb8] sm:$0xff]
      %v1022 = vld [vmem:[%s3 + $0xdc0] sm:$0xff]
      %v1023 = vld [vmem:[%s3 + $0xdc8] sm:$0xff]
      %v1024 = vld [vmem:[%s3 + $0xdd0] sm:$0xff]
      %v1025 = vld [vmem:[%s3 + $0xdd8] sm:$0xff]
      %v1026 = vld [vmem:[%s3 + $0xde0] sm:$0xff]
      %v1027 = vld [vmem:[%s3 + $0xde8] sm:$0xff]
      %v1028 = vld [vmem:[%s3 + $0xdf0] sm:$0xff]
      %v1029 = vld [vmem:[%s3 + $0xdf8] sm:$0xff]
      %v1030 = vld [vmem:[%s3 + $0xe00] sm:$0xff]
      %v1031 = vld [vmem:[%s3 + $0xe08] sm:$0xff]
      %v1032 = vld [vmem:[%s3 + $0xe10] sm:$0xff]
      %v1033 = vld [vmem:[%s3 + $0xe18] sm:$0xff]
      %v1034 = vld [vmem:[%s3 + $0xe20] sm:$0xff]
      %v1035 = vld [vmem:[%s3 + $0xe28] sm:$0xff]
      %v1036 = vld [vmem:[%s3 + $0xe30] sm:$0xff]
      %v1037 = vld [vmem:[%s3 + $0xe38] sm:$0xff]
      %v1038 = vld [vmem:[%s3 + $0xe40] sm:$0xff]
      %v1039 = vld [vmem:[%s3 + $0xe48] sm:$0xff]
      %v1040 = vld [vmem:[%s3 + $0xe50] sm:$0xff]
      %v1041 = vld [vmem:[%s3 + $0xe58] sm:$0xff]
      %v1042 = vld [vmem:[%s3 + $0xe60] sm:$0xff]
      %v1043 = vld [vmem:[%s3 + $0xe68] sm:$0xff]
      %v1044 = vld [vmem:[%s3 + $0xe70] sm:$0xff]
      %v1045 = vld [vmem:[%s3 + $0xe78] sm:$0xff]
      %v1046 = vld [vmem:[%s3 + $0xe80] sm:$0xff]
      %v1047 = vld [vmem:[%s3 + $0xe88] sm:$0xff]
      %v1048 = vld [vmem:[%s3 + $0xe90] sm:$0xff]
      %v1049 = vld [vmem:[%s3 + $0xe98] sm:$0xff]
      %v1050 = vld [vmem:[%s3 + $0xea0] sm:$0xff]
      %v1051 = vld [vmem:[%s3 + $0xea8] sm:$0xff]
      %v1052 = vld [vmem:[%s3 + $0xeb0] sm:$0xff]
      %v1053 = vld [vmem:[%s3 + $0xeb8] sm:$0xff]
      %v1054 = vld [vmem:[%s3 + $0xec0] sm:$0xff]
      %v1055 = vld [vmem:[%s3 + $0xec8] sm:$0xff]
      %v1056 = vld [vmem:[%s3 + $0xed0] sm:$0xff]
      %v1057 = vld [vmem:[%s3 + $0xed8] sm:$0xff]
      %v1058 = vld [vmem:[%s3 + $0xee0] sm:$0xff]
      %v1059 = vld [vmem:[%s3 + $0xee8] sm:$0xff]
      %v1060 = vld [vmem:[%s3 + $0xef0] sm:$0xff]
      %v1061 = vld [vmem:[%s3 + $0xef8] sm:$0xff]
      %v1062 = vld [vmem:[%s3 + $0xf00] sm:$0xff]
      %v1063 = vld [vmem:[%s3 + $0xf08] sm:$0xff]
      %v1064 = vld [vmem:[%s3 + $0xf10] sm:$0xff]
      %v1065 = vld [vmem:[%s3 + $0xf18] sm:$0xff]
      %v1066 = vld [vmem:[%s3 + $0xf20] sm:$0xff]
      %v1067 = vld [vmem:[%s3 + $0xf28] sm:$0xff]
      %v1068 = vld [vmem:[%s3 + $0xf30] sm:$0xff]
      %v1069 = vld [vmem:[%s3 + $0xf38] sm:$0xff]
      %v1070 = vld [vmem:[%s3 + $0xf40] sm:$0xff]
      %v1071 = vld [vmem:[%s3 + $0xf48] sm:$0xff]
      %v1072 = vld [vmem:[%s3 + $0xf50] sm:$0xff]
      %v1073 = vld [vmem:[%s3 + $0xf58] sm:$0xff]
      %v1074 = vld [vmem:[%s3 + $0xf60] sm:$0xff]
      %v1075 = vld [vmem:[%s3 + $0xf68] sm:$0xff]
      %v1076 = vld [vmem:[%s3 + $0xf70] sm:$0xff]
      %v1077 = vld [vmem:[%s3 + $0xf78] sm:$0xff]
      %v1078 = vld [vmem:[%s3 + $0xf80] sm:$0xff]
      %v1079 = vld [vmem:[%s3 + $0xf88] sm:$0xff]
      %v1080 = vld [vmem:[%s3 + $0xf90] sm:$0xff]
      %v1081 = vld [vmem:[%s3 + $0xf98] sm:$0xff]
      %v1082 = vld [vmem:[%s3 + $0xfa0] sm:$0xff]
      %v1083 = vld [vmem:[%s3 + $0xfa8] sm:$0xff]
      %v1084 = vld [vmem:[%s3 + $0xfb0] sm:$0xff]
      %v1085 = vld [vmem:[%s3 + $0xfb8] sm:$0xff]
      %v1086 = vld [vmem:[%s3 + $0xfc0] sm:$0xff]
      %v1087 = vld [vmem:[%s3 + $0xfc8] sm:$0xff]
      %v1088 = vld [vmem:[%s3 + $0xfd0] sm:$0xff]
      %v1089 = vld [vmem:[%s3 + $0xfd8] sm:$0xff]
      %v1090 = vld [vmem:[%s3 + $0xfe0] sm:$0xff]
      %v1091 = vld [vmem:[%s3 + $0xfe8] sm:$0xff]
      %v1092 = vld [vmem:[%s3 + $0xff0] sm:$0xff]
      %v1093 = vld [vmem:[%s3 + $0xff8] sm:$0xff]
      %v1094 = vld [vmem:[%s3 + $0x1000] sm:$0xff]
      %v1095 = vld [vmem:[%s3 + $0x1008] sm:$0xff]
      %v1096 = vld [vmem:[%s3 + $0x1010] sm:$0xff]
      %v1097 = vld [vmem:[%s3 + $0x1018] sm:$0xff]
      %v1098 = vld [vmem:[%s3 + $0x1020] sm:$0xff]
      %v1099 = vld [vmem:[%s3 + $0x1028] sm:$0xff]
      %v1100 = vld [vmem:[%s3 + $0x1030] sm:$0xff]
      %v1101 = vld [vmem:[%s3 + $0x1038] sm:$0xff]
      %v1102 = vld [vmem:[%s3 + $0x1040] sm:$0xff]
      %v1103 = vld [vmem:[%s3 + $0x1048] sm:$0xff]
      %v1104 = vld [vmem:[%s3 + $0x1050] sm:$0xff]
      %v1105 = vld [vmem:[%s3 + $0x1058] sm:$0xff]
      %v1106 = vld [vmem:[%s3 + $0x1060] sm:$0xff]
      %v1107 = vld [vmem:[%s3 + $0x1068] sm:$0xff]
      %v1108 = vld [vmem:[%s3 + $0x1070] sm:$0xff]
      %v1109 = vld [vmem:[%s3 + $0x1078] sm:$0xff]
      %v1110 = vld [vmem:[%s3 + $0x1080] sm:$0xff]
      %v1111 = vld [vmem:[%s3 + $0x1088] sm:$0xff]
      %v1112 = vld [vmem:[%s3 + $0x1090] sm:$0xff]
      %v1113 = vld [vmem:[%s3 + $0x1098] sm:$0xff]
      %v1114 = vld [vmem:[%s3 + $0x10a0] sm:$0xff]
      %v1115 = vld [vmem:[%s3 + $0x10a8] sm:$0xff]
      %v1116 = vld [vmem:[%s3 + $0x10b0] sm:$0xff]
      %v1117 = vld [vmem:[%s3 + $0x10b8] sm:$0xff]
      %v1118 = vld [vmem:[%s3 + $0x10c0] sm:$0xff]
      %v1119 = vld [vmem:[%s3 + $0x10c8] sm:$0xff]
      %v1120 = vld [vmem:[%s3 + $0x10d0] sm:$0xff]
      %v1121 = vld [vmem:[%s3 + $0x10d8] sm:$0xff]
      %v1122 = vld [vmem:[%s3 + $0x10e0] sm:$0xff]
      %v1123 = vld [vmem:[%s3 + $0x10e8] sm:$0xff]
      %v1124 = vld [vmem:[%s3 + $0x10f0] sm:$0xff]
      %v1125 = vld [vmem:[%s3 + $0x10f8] sm:$0xff]
      %v1126 = vld [vmem:[%s3 + $0x1100] sm:$0xff]
      %v1127 = vld [vmem:[%s3 + $0x1108] sm:$0xff]
      %v1128 = vld [vmem:[%s3 + $0x1110] sm:$0xff]
      %v1129 = vld [vmem:[%s3 + $0x1118] sm:$0xff]
      %v1130 = vld [vmem:[%s3 + $0x1120] sm:$0xff]
      %v1131 = vld [vmem:[%s3 + $0x1128] sm:$0xff]
      %v1132 = vld [vmem:[%s3 + $0x1130] sm:$0xff]
      %v1133 = vld [vmem:[%s3 + $0x1138] sm:$0xff]
      %v1134 = vld [vmem:[%s3 + $0x1140] sm:$0xff]
      %v1135 = vld [vmem:[%s3 + $0x1148] sm:$0xff]
      %v1136 = vld [vmem:[%s3 + $0x1150] sm:$0xff]
      %v1137 = vld [vmem:[%s3 + $0x1158] sm:$0xff]
      %v1138 = vld [vmem:[%s3 + $0x1160] sm:$0xff]
      %v1139 = vld [vmem:[%s3 + $0x1168] sm:$0xff]
      %v1140 = vld [vmem:[%s3 + $0x1170] sm:$0xff]
      %v1141 = vld [vmem:[%s3 + $0x1178] sm:$0xff]
      %v1142 = vld [vmem:[%s3 + $0x1180] sm:$0xff]
      %v1143 = vld [vmem:[%s3 + $0x1188] sm:$0xff]
      %v1144 = vld [vmem:[%s3 + $0x1190] sm:$0xff]
      %v1145 = vld [vmem:[%s3 + $0x1198] sm:$0xff]
      %v1146 = vld [vmem:[%s3 + $0x11a0] sm:$0xff]
      %v1147 = vld [vmem:[%s3 + $0x11a8] sm:$0xff]
      %v1148 = vld [vmem:[%s3 + $0x11b0] sm:$0xff]
      %v1149 = vld [vmem:[%s3 + $0x11b8] sm:$0xff]
      %v1150 = vld [vmem:[%s3 + $0x11c0] sm:$0xff]
      %v1151 = vld [vmem:[%s3 + $0x11c8] sm:$0xff]
      %v1152 = vld [vmem:[%s3 + $0x11d0] sm:$0xff]
      %v1153 = vld [vmem:[%s3 + $0x11d8] sm:$0xff]
      %v1154 = vld [vmem:[%s3 + $0x11e0] sm:$0xff]
      %v1155 = vld [vmem:[%s3 + $0x11e8] sm:$0xff]
      %v1156 = vld [vmem:[%s3 + $0x11f0] sm:$0xff]
      %v1157 = vld [vmem:[%s3 + $0x11f8] sm:$0xff]
      %v1158 = vld [vmem:[%s3 + $0x1200] sm:$0xff]
      %v1159 = vld [vmem:[%s3 + $0x1208] sm:$0xff]
      %v1160 = vld [vmem:[%s3 + $0x1210] sm:$0xff]
      %v1161 = vld [vmem:[%s3 + $0x1218] sm:$0xff]
      %v1162 = vld [vmem:[%s3 + $0x1220] sm:$0xff]
      %v1163 = vld [vmem:[%s3 + $0x1228] sm:$0xff]
      %v1164 = vld [vmem:[%s3 + $0x1230] sm:$0xff]
      %v1165 = vld [vmem:[%s3 + $0x1238] sm:$0xff]
      %v1166 = vld [vmem:[%s3 + $0x1240] sm:$0xff]
      %v1167 = vld [vmem:[%s3 + $0x1248] sm:$0xff]
      %v1168 = vld [vmem:[%s3 + $0x1250] sm:$0xff]
      %v1169 = vld [vmem:[%s3 + $0x1258] sm:$0xff]
      %v1170 = vld [vmem:[%s3 + $0x1260] sm:$0xff]
      %v1171 = vld [vmem:[%s3 + $0x1268] sm:$0xff]
      %v1172 = vld [vmem:[%s3 + $0x1270] sm:$0xff]
      %v1173 = vld [vmem:[%s3 + $0x1278] sm:$0xff]
      %v1174 = vld [vmem:[%s3 + $0x1280] sm:$0xff]
      %v1175 = vld [vmem:[%s3 + $0x1288] sm:$0xff]
      %v1176 = vld [vmem:[%s3 + $0x1290] sm:$0xff]
      %v1177 = vld [vmem:[%s3 + $0x1298] sm:$0xff]
      %v1178 = vld [vmem:[%s3 + $0x12a0] sm:$0xff]
      %v1179 = vld [vmem:[%s3 + $0x12a8] sm:$0xff]
      %v1180 = vld [vmem:[%s3 + $0x12b0] sm:$0xff]
      %v1181 = vld [vmem:[%s3 + $0x12b8] sm:$0xff]
      %v1182 = vld [vmem:[%s3 + $0x12c0] sm:$0xff]
      %v1183 = vld [vmem:[%s3 + $0x12c8] sm:$0xff]
      %v1184 = vld [vmem:[%s3 + $0x12d0] sm:$0xff]
      %v1185 = vld [vmem:[%s3 + $0x12d8] sm:$0xff]
      %v1186 = vld [vmem:[%s3 + $0x12e0] sm:$0xff]
      %v1187 = vld [vmem:[%s3 + $0x12e8] sm:$0xff]
      %v1188 = vld [vmem:[%s3 + $0x12f0] sm:$0xff]
      %v1189 = vld [vmem:[%s3 + $0x12f8] sm:$0xff]
      %v1190 = vld [vmem:[%s3 + $0x1300] sm:$0xff]
      %v1191 = vld [vmem:[%s3 + $0x1308] sm:$0xff]
      %v1192 = vld [vmem:[%s3 + $0x1310] sm:$0xff]
      %v1193 = vld [vmem:[%s3 + $0x1318] sm:$0xff]
      %v1194 = vld [vmem:[%s3 + $0x1320] sm:$0xff]
      %v1195 = vld [vmem:[%s3 + $0x1328] sm:$0xff]
      %v1196 = vld [vmem:[%s3 + $0x1330] sm:$0xff]
      %v1197 = vld [vmem:[%s3 + $0x1338] sm:$0xff]
      %v1198 = vld [vmem:[%s3 + $0x1340] sm:$0xff]
      %v1199 = vld [vmem:[%s3 + $0x1348] sm:$0xff]
      %v1200 = vld [vmem:[%s3 + $0x1350] sm:$0xff]
      %v1201 = vld [vmem:[%s3 + $0x1358] sm:$0xff]
      %v1202 = vld [vmem:[%s3 + $0x1360] sm:$0xff]
      %v1203 = vld [vmem:[%s3 + $0x1368] sm:$0xff]
      %v1204 = vld [vmem:[%s3 + $0x1370] sm:$0xff]
      %v1205 = vld [vmem:[%s3 + $0x1378] sm:$0xff]
      %v1206 = vld [vmem:[%s3 + $0x1380] sm:$0xff]
      %v1207 = vld [vmem:[%s3 + $0x1388] sm:$0xff]
      %v1208 = vld [vmem:[%s3 + $0x1390] sm:$0xff]
      %v1209 = vld [vmem:[%s3 + $0x1398] sm:$0xff]
      %v1210 = vld [vmem:[%s3 + $0x13a0] sm:$0xff]
      %v1211 = vld [vmem:[%s3 + $0x13a8] sm:$0xff]
      %v1212 = vld [vmem:[%s3 + $0x13b0] sm:$0xff]
      %v1213 = vld [vmem:[%s3 + $0x13b8] sm:$0xff]
      %v1214 = vld [vmem:[%s3 + $0x13c0] sm:$0xff]
      %v1215 = vld [vmem:[%s3 + $0x13c8] sm:$0xff]
      %v1216 = vld [vmem:[%s3 + $0x13d0] sm:$0xff]
      %v1217 = vld [vmem:[%s3 + $0x13d8] sm:$0xff]
      %v1218 = vld [vmem:[%s3 + $0x13e0] sm:$0xff]
      %v1219 = vld [vmem:[%s3 + $0x13e8] sm:$0xff]
      %v1220 = vld [vmem:[%s3 + $0x13f0] sm:$0xff]
      %v1221 = vld [vmem:[%s3 + $0x13f8] sm:$0xff]
      %v1222 = vld [vmem:[%s3 + $0x1400] sm:$0xff]
      %v1223 = vld [vmem:[%s3 + $0x1408] sm:$0xff]
      %v1224 = vld [vmem:[%s3 + $0x1410] sm:$0xff]
      %v1225 = vld [vmem:[%s3 + $0x1418] sm:$0xff]
      %v1226 = vld [vmem:[%s3 + $0x1420] sm:$0xff]
      %v1227 = vld [vmem:[%s3 + $0x1428] sm:$0xff]
      %v1228 = vld [vmem:[%s3 + $0x1430] sm:$0xff]
      %v1229 = vld [vmem:[%s3 + $0x1438] sm:$0xff]
      %v1230 = vld [vmem:[%s3 + $0x1440] sm:$0xff]
      %v1231 = vld [vmem:[%s3 + $0x1448] sm:$0xff]
      %v1232 = vld [vmem:[%s3 + $0x1450] sm:$0xff]
      %v1233 = vld [vmem:[%s3 + $0x1458] sm:$0xff]
      %v1234 = vld [vmem:[%s3 + $0x1460] sm:$0xff]
      %v1235 = vld [vmem:[%s3 + $0x1468] sm:$0xff]
      %v1236 = vld [vmem:[%s3 + $0x1470] sm:$0xff]
      %v1237 = vld [vmem:[%s3 + $0x1478] sm:$0xff]
      %v1238 = vld [vmem:[%s3 + $0x1480] sm:$0xff]
      %v1239 = vld [vmem:[%s3 + $0x1488] sm:$0xff]
      %v1240 = vld [vmem:[%s3 + $0x1490] sm:$0xff]
      %v1241 = vld [vmem:[%s3 + $0x1498] sm:$0xff]
      %v1242 = vld [vmem:[%s3 + $0x14a0] sm:$0xff]
      %v1243 = vld [vmem:[%s3 + $0x14a8] sm:$0xff]
      %v1244 = vld [vmem:[%s3 + $0x14b0] sm:$0xff]
      %v1245 = vld [vmem:[%s3 + $0x14b8] sm:$0xff]
      %v1246 = vld [vmem:[%s3 + $0x14c0] sm:$0xff]
      %v1247 = vld [vmem:[%s3 + $0x14c8] sm:$0xff]
      %v1248 = vld [vmem:[%s3 + $0x14d0] sm:$0xff]
      %v1249 = vld [vmem:[%s3 + $0x14d8] sm:$0xff]
      %v1250 = vld [vmem:[%s3 + $0x14e0] sm:$0xff]
      %v1251 = vld [vmem:[%s3 + $0x14e8] sm:$0xff]
      %v1252 = vld [vmem:[%s3 + $0x14f0] sm:$0xff]
      %v1253 = vld [vmem:[%s3 + $0x14f8] sm:$0xff]
      %v1254 = vld [vmem:[%s3 + $0x1500] sm:$0xff]
      %v1255 = vld [vmem:[%s3 + $0x1508] sm:$0xff]
      %v1256 = vld [vmem:[%s3 + $0x1510] sm:$0xff]
      %v1257 = vld [vmem:[%s3 + $0x1518] sm:$0xff]
      %v1258 = vld [vmem:[%s3 + $0x1520] sm:$0xff]
      %v1259 = vld [vmem:[%s3 + $0x1528] sm:$0xff]
      %v1260 = vld [vmem:[%s3 + $0x1530] sm:$0xff]
      %v1261 = vld [vmem:[%s3 + $0x1538] sm:$0xff]
      %v1262 = vld [vmem:[%s3 + $0x1540] sm:$0xff]
      %v1263 = vld [vmem:[%s3 + $0x1548] sm:$0xff]
      %v1264 = vld [vmem:[%s3 + $0x1550] sm:$0xff]
      %v1265 = vld [vmem:[%s3 + $0x1558] sm:$0xff]
      %v1266 = vld [vmem:[%s3 + $0x1560] sm:$0xff]
      %v1267 = vld [vmem:[%s3 + $0x1568] sm:$0xff]
      %v1268 = vld [vmem:[%s3 + $0x1570] sm:$0xff]
      %v1269 = vld [vmem:[%s3 + $0x1578] sm:$0xff]
      %v1270 = vld [vmem:[%s3 + $0x1580] sm:$0xff]
      %v1271 = vld [vmem:[%s3 + $0x1588] sm:$0xff]
      %v1272 = vld [vmem:[%s3 + $0x1590] sm:$0xff]
      %v1273 = vld [vmem:[%s3 + $0x1598] sm:$0xff]
      %v1274 = vld [vmem:[%s3 + $0x15a0] sm:$0xff]
      %v1275 = vld [vmem:[%s3 + $0x15a8] sm:$0xff]
      %v1276 = vld [vmem:[%s3 + $0x15b0] sm:$0xff]
      %v1277 = vld [vmem:[%s3 + $0x15b8] sm:$0xff]
      %v1278 = vld [vmem:[%s3 + $0x15c0] sm:$0xff]
      %v1279 = vld [vmem:[%s3 + $0x15c8] sm:$0xff]
      %v1280 = vld [vmem:[%s3 + $0x15d0] sm:$0xff]
      %v1281 = vld [vmem:[%s3 + $0x15d8] sm:$0xff]
      %v1282 = vld [vmem:[%s3 + $0x15e0] sm:$0xff]
      %v1283 = vld [vmem:[%s3 + $0x15e8] sm:$0xff]
      %v1284 = vld [vmem:[%s3 + $0x15f0] sm:$0xff]
      %v1285 = vld [vmem:[%s3 + $0x15f8] sm:$0xff]
      %v1286 = vld [vmem:[%s3 + $0x1600] sm:$0xff]
      %v1287 = vld [vmem:[%s3 + $0x1608] sm:$0xff]
      %v1288 = vld [vmem:[%s3 + $0x1610] sm:$0xff]
      %v1289 = vld [vmem:[%s3 + $0x1618] sm:$0xff]
      %v1290 = vld [vmem:[%s3 + $0x1620] sm:$0xff]
      %v1291 = vld [vmem:[%s3 + $0x1628] sm:$0xff]
      %v1292 = vld [vmem:[%s3 + $0x1630] sm:$0xff]
      %v1293 = vld [vmem:[%s3 + $0x1638] sm:$0xff]
      %v1294 = vld [vmem:[%s3 + $0x1640] sm:$0xff]
      %v1295 = vld [vmem:[%s3 + $0x1648] sm:$0xff]
      %v1296 = vld [vmem:[%s3 + $0x1650] sm:$0xff]
      %v1297 = vld [vmem:[%s3 + $0x1658] sm:$0xff]
      %v1298 = vld [vmem:[%s3 + $0x1660] sm:$0xff]
      %v1299 = vld [vmem:[%s3 + $0x1668] sm:$0xff]
      %v1300 = vld [vmem:[%s3 + $0x1670] sm:$0xff]
      %v1301 = vld [vmem:[%s3 + $0x1678] sm:$0xff]
      %v1302 = vld [vmem:[%s3 + $0x1680] sm:$0xff]
      %v1303 = vld [vmem:[%s3 + $0x1688] sm:$0xff]
      %v1304 = vld [vmem:[%s3 + $0x1690] sm:$0xff]
      %v1305 = vld [vmem:[%s3 + $0x1698] sm:$0xff]
      %v1306 = vld [vmem:[%s3 + $0x16a0] sm:$0xff]
      %v1307 = vld [vmem:[%s3 + $0x16a8] sm:$0xff]
      %v1308 = vld [vmem:[%s3 + $0x16b0] sm:$0xff]
      %v1309 = vld [vmem:[%s3 + $0x16b8] sm:$0xff]
      %v1310 = vld [vmem:[%s3 + $0x16c0] sm:$0xff]
      %v1311 = vld [vmem:[%s3 + $0x16c8] sm:$0xff]
      %v1312 = vld [vmem:[%s3 + $0x16d0] sm:$0xff]
      %v1313 = vld [vmem:[%s3 + $0x16d8] sm:$0xff]
      %v1314 = vld [vmem:[%s3 + $0x16e0] sm:$0xff]
      %v1315 = vld [vmem:[%s3 + $0x16e8] sm:$0xff]
      %v1316 = vld [vmem:[%s3 + $0x16f0] sm:$0xff]
      %v1317 = vld [vmem:[%s3 + $0x16f8] sm:$0xff]
      %v1318 = vld [vmem:[%s3 + $0x1700] sm:$0xff]
      %v1319 = vld [vmem:[%s3 + $0x1708] sm:$0xff]
      %v1320 = vld [vmem:[%s3 + $0x1710] sm:$0xff]
      %v1321 = vld [vmem:[%s3 + $0x1718] sm:$0xff]
      %v1322 = vld [vmem:[%s3 + $0x1720] sm:$0xff]
      %v1323 = vld [vmem:[%s3 + $0x1728] sm:$0xff]
      %v1324 = vld [vmem:[%s3 + $0x1730] sm:$0xff]
      %v1325 = vld [vmem:[%s3 + $0x1738] sm:$0xff]
      %v1326 = vld [vmem:[%s3 + $0x1740] sm:$0xff]
      %v1327 = vld [vmem:[%s3 + $0x1748] sm:$0xff]
      %v1328 = vld [vmem:[%s3 + $0x1750] sm:$0xff]
      %v1329 = vld [vmem:[%s3 + $0x1758] sm:$0xff]
      %v1330 = vld [vmem:[%s3 + $0x1760] sm:$0xff]
      %v1331 = vld [vmem:[%s3 + $0x1768] sm:$0xff]
      %v1332 = vld [vmem:[%s3 + $0x1770] sm:$0xff]
      %v1333 = vld [vmem:[%s3 + $0x1778] sm:$0xff]
      %v1334 = vld [vmem:[%s3 + $0x1780] sm:$0xff]
      %v1335 = vld [vmem:[%s3 + $0x1788] sm:$0xff]
      %v1336 = vld [vmem:[%s3 + $0x1790] sm:$0xff]
      %v1337 = vld [vmem:[%s3 + $0x1798] sm:$0xff]
      %v1338 = vld [vmem:[%s3 + $0x17a0] sm:$0xff]
      %v1339 = vld [vmem:[%s3 + $0x17a8] sm:$0xff]
      %v1340 = vld [vmem:[%s3 + $0x17b0] sm:$0xff]
      %v1341 = vld [vmem:[%s3 + $0x17b8] sm:$0xff]
      %v1342 = vld [vmem:[%s3 + $0x17c0] sm:$0xff]
      %v1343 = vld [vmem:[%s3 + $0x17c8] sm:$0xff]
      %v1344 = vld [vmem:[%s3 + $0x17d0] sm:$0xff]
      %v1345 = vld [vmem:[%s3 + $0x17d8] sm:$0xff]
      %v1346 = vld [vmem:[%s3 + $0x17e0] sm:$0xff]
      %v1347 = vld [vmem:[%s3 + $0x17e8] sm:$0xff]
      %v1348 = vld [vmem:[%s3 + $0x17f0] sm:$0xff]
      %v1349 = vld [vmem:[%s3 + $0x17f8] sm:$0xff]
      %v1350 = vld [vmem:[%s3 + $0x1800] sm:$0xff]
      %v1351 = vld [vmem:[%s3 + $0x1808] sm:$0xff]
      %v1352 = vld [vmem:[%s3 + $0x1810] sm:$0xff]
      %v1353 = vld [vmem:[%s3 + $0x1818] sm:$0xff]
      %v1354 = vld [vmem:[%s3 + $0x1820] sm:$0xff]
      %v1355 = vld [vmem:[%s3 + $0x1828] sm:$0xff]
      %v1356 = vld [vmem:[%s3 + $0x1830] sm:$0xff]
      %v1357 = vld [vmem:[%s3 + $0x1838] sm:$0xff]
      %v1358 = vld [vmem:[%s3 + $0x1840] sm:$0xff]
      %v1359 = vld [vmem:[%s3 + $0x1848] sm:$0xff]
      %v1360 = vld [vmem:[%s3 + $0x1850] sm:$0xff]
      %v1361 = vld [vmem:[%s3 + $0x1858] sm:$0xff]
      %v1362 = vld [vmem:[%s3 + $0x1860] sm:$0xff]
      %v1363 = vld [vmem:[%s3 + $0x1868] sm:$0xff]
      %v1364 = vld [vmem:[%s3 + $0x1870] sm:$0xff]
      %v1365 = vld [vmem:[%s3 + $0x1878] sm:$0xff]
      %v1366 = vld [vmem:[%s3 + $0x1880] sm:$0xff]
      %v1367 = vld [vmem:[%s3 + $0x1888] sm:$0xff]
      %v1368 = vld [vmem:[%s3 + $0x1890] sm:$0xff]
      %v1369 = vld [vmem:[%s3 + $0x1898] sm:$0xff]
      %v1370 = vld [vmem:[%s3 + $0x18a0] sm:$0xff]
      %v1371 = vld [vmem:[%s3 + $0x18a8] sm:$0xff]
      %v1372 = vld [vmem:[%s3 + $0x18b0] sm:$0xff]
      %v1373 = vld [vmem:[%s3 + $0x18b8] sm:$0xff]
      %v1374 = vld [vmem:[%s3 + $0x18c0] sm:$0xff]
      %v1375 = vld [vmem:[%s3 + $0x18c8] sm:$0xff]
      %v1376 = vld [vmem:[%s3 + $0x18d0] sm:$0xff]
      %v1377 = vld [vmem:[%s3 + $0x18d8] sm:$0xff]
      %v1378 = vld [vmem:[%s3 + $0x18e0] sm:$0xff]
      %v1379 = vld [vmem:[%s3 + $0x18e8] sm:$0xff]
      %v1380 = vld [vmem:[%s3 + $0x18f0] sm:$0xff]
      %v1381 = vld [vmem:[%s3 + $0x18f8] sm:$0xff]
      %v1382 = vld [vmem:[%s3 + $0x1900] sm:$0xff]
      %v1383 = vld [vmem:[%s3 + $0x1908] sm:$0xff]
      %v1384 = vld [vmem:[%s3 + $0x1910] sm:$0xff]
      %v1385 = vld [vmem:[%s3 + $0x1918] sm:$0xff]
      %v1386 = vld [vmem:[%s3 + $0x1920] sm:$0xff]
      %v1387 = vld [vmem:[%s3 + $0x1928] sm:$0xff]
      %v1388 = vld [vmem:[%s3 + $0x1930] sm:$0xff]
      %v1389 = vld [vmem:[%s3 + $0x1938] sm:$0xff]
      %v1390 = vld [vmem:[%s3 + $0x1940] sm:$0xff]
      %v1391 = vld [vmem:[%s3 + $0x1948] sm:$0xff]
      %v1392 = vld [vmem:[%s3 + $0x1950] sm:$0xff]
      %v1393 = vld [vmem:[%s3 + $0x1958] sm:$0xff]
      %v1394 = vld [vmem:[%s3 + $0x1960] sm:$0xff]
      %v1395 = vld [vmem:[%s3 + $0x1968] sm:$0xff]
      %v1396 = vld [vmem:[%s3 + $0x1970] sm:$0xff]
      %v1397 = vld [vmem:[%s3 + $0x1978] sm:$0xff]
      %v1398 = vld [vmem:[%s3 + $0x1980] sm:$0xff]
      %v1399 = vld [vmem:[%s3 + $0x1988] sm:$0xff]
      %v1400 = vld [vmem:[%s3 + $0x1990] sm:$0xff]
      %v1401 = vld [vmem:[%s3 + $0x1998] sm:$0xff]
      %v1402 = vld [vmem:[%s3 + $0x19a0] sm:$0xff]
      %v1403 = vld [vmem:[%s3 + $0x19a8] sm:$0xff]
      %v1404 = vld [vmem:[%s3 + $0x19b0] sm:$0xff]
      %v1405 = vld [vmem:[%s3 + $0x19b8] sm:$0xff]
      %v1406 = vld [vmem:[%s3 + $0x19c0] sm:$0xff]
      %v1407 = vld [vmem:[%s3 + $0x19c8] sm:$0xff]
      %v1408 = vld [vmem:[%s3 + $0x19d0] sm:$0xff]
      %v1409 = vld [vmem:[%s3 + $0x19d8] sm:$0xff]
      %v1410 = vld [vmem:[%s3 + $0x19e0] sm:$0xff]
      %v1411 = vld [vmem:[%s3 + $0x19e8] sm:$0xff]
      %v1412 = vld [vmem:[%s3 + $0x19f0] sm:$0xff]
      %v1413 = vld [vmem:[%s3 + $0x19f8] sm:$0xff]
      %v1414 = vld [vmem:[%s3 + $0x1a00] sm:$0xff]
      %v1415 = vld [vmem:[%s3 + $0x1a08] sm:$0xff]
      %v1416 = vld [vmem:[%s3 + $0x1a10] sm:$0xff]
      %v1417 = vld [vmem:[%s3 + $0x1a18] sm:$0xff]
      %v1418 = vld [vmem:[%s3 + $0x1a20] sm:$0xff]
      %v1419 = vld [vmem:[%s3 + $0x1a28] sm:$0xff]
      %v1420 = vld [vmem:[%s3 + $0x1a30] sm:$0xff]
      %v1421 = vld [vmem:[%s3 + $0x1a38] sm:$0xff]
      %v1422 = vld [vmem:[%s3 + $0x1a40] sm:$0xff]
      %v1423 = vld [vmem:[%s3 + $0x1a48] sm:$0xff]
      %v1424 = vld [vmem:[%s3 + $0x1a50] sm:$0xff]
      %v1425 = vld [vmem:[%s3 + $0x1a58] sm:$0xff]
      %v1426 = vld [vmem:[%s3 + $0x1a60] sm:$0xff]
      %v1427 = vld [vmem:[%s3 + $0x1a68] sm:$0xff]
      %v1428 = vld [vmem:[%s3 + $0x1a70] sm:$0xff]
      %v1429 = vld [vmem:[%s3 + $0x1a78] sm:$0xff]
      %v1430 = vld [vmem:[%s3 + $0x1a80] sm:$0xff]
      %v1431 = vld [vmem:[%s3 + $0x1a88] sm:$0xff]
      %v1432 = vld [vmem:[%s3 + $0x1a90] sm:$0xff]
      %v1433 = vld [vmem:[%s3 + $0x1a98] sm:$0xff]
      %v1434 = vld [vmem:[%s3 + $0x1aa0] sm:$0xff]
      %v1435 = vld [vmem:[%s3 + $0x1aa8] sm:$0xff]
      %v1436 = vld [vmem:[%s3 + $0x1ab0] sm:$0xff]
      %v1437 = vld [vmem:[%s3 + $0x1ab8] sm:$0xff]
      %v1438 = vld [vmem:[%s3 + $0x1ac0] sm:$0xff]
      %v1439 = vld [vmem:[%s3 + $0x1ac8] sm:$0xff]
      %v1440 = vld [vmem:[%s3 + $0x1ad0] sm:$0xff]
      %v1441 = vld [vmem:[%s3 + $0x1ad8] sm:$0xff]
      %v1442 = vld [vmem:[%s3 + $0x1ae0] sm:$0xff]
      %v1443 = vld [vmem:[%s3 + $0x1ae8] sm:$0xff]
      %v1444 = vld [vmem:[%s3 + $0x1af0] sm:$0xff]
      %v1445 = vld [vmem:[%s3 + $0x1af8] sm:$0xff]
      %v1446 = vld [vmem:[%s3 + $0x1b00] sm:$0xff]
      %v1447 = vld [vmem:[%s3 + $0x1b08] sm:$0xff]
      %v1448 = vld [vmem:[%s3 + $0x1b10] sm:$0xff]
      %v1449 = vld [vmem:[%s3 + $0x1b18] sm:$0xff]
      %v1450 = vld [vmem:[%s3 + $0x1b20] sm:$0xff]
      %v1451 = vld [vmem:[%s3 + $0x1b28] sm:$0xff]
      %v1452 = vld [vmem:[%s3 + $0x1b30] sm:$0xff]
      %v1453 = vld [vmem:[%s3 + $0x1b38] sm:$0xff]
      %v1454 = vld [vmem:[%s3 + $0x1b40] sm:$0xff]
      %v1455 = vld [vmem:[%s3 + $0x1b48] sm:$0xff]
      %v1456 = vld [vmem:[%s3 + $0x1b50] sm:$0xff]
      %v1457 = vld [vmem:[%s3 + $0x1b58] sm:$0xff]
      %v1458 = vld [vmem:[%s3 + $0x1b60] sm:$0xff]
      %v1459 = vld [vmem:[%s3 + $0x1b68] sm:$0xff]
      %v1460 = vld [vmem:[%s3 + $0x1b70] sm:$0xff]
      %v1461 = vld [vmem:[%s3 + $0x1b78] sm:$0xff]
      %v1462 = vld [vmem:[%s3 + $0x1b80] sm:$0xff]
      %v1463 = vld [vmem:[%s3 + $0x1b88] sm:$0xff]
      %v1464 = vld [vmem:[%s3 + $0x1b90] sm:$0xff]
      %v1465 = vld [vmem:[%s3 + $0x1b98] sm:$0xff]
      %v1466 = vld [vmem:[%s3 + $0x1ba0] sm:$0xff]
      %v1467 = vld [vmem:[%s3 + $0x1ba8] sm:$0xff]
      %v1468 = vld [vmem:[%s3 + $0x1bb0] sm:$0xff]
      %v1469 = vld [vmem:[%s3 + $0x1bb8] sm:$0xff]
      %v1470 = vld [vmem:[%s3 + $0x1bc0] sm:$0xff]
      %v1471 = vld [vmem:[%s3 + $0x1bc8] sm:$0xff]
      %v1472 = vld [vmem:[%s3 + $0x1bd0] sm:$0xff]
      %v1473 = vld [vmem:[%s3 + $0x1bd8] sm:$0xff]
      %v1474 = vld [vmem:[%s3 + $0x1be0] sm:$0xff]
      %v1475 = vld [vmem:[%s3 + $0x1be8] sm:$0xff]
      %v1476 = vld [vmem:[%s3 + $0x1bf0] sm:$0xff]
      %v1477 = vld [vmem:[%s3 + $0x1bf8] sm:$0xff]
      %v1478 = vld [vmem:[%s3 + $0x1c00] sm:$0xff]
      %v1479 = vld [vmem:[%s3 + $0x1c08] sm:$0xff]
      %v1480 = vld [vmem:[%s3 + $0x1c10] sm:$0xff]
      %v1481 = vld [vmem:[%s3 + $0x1c18] sm:$0xff]
      %v1482 = vld [vmem:[%s3 + $0x1c20] sm:$0xff]
      %v1483 = vld [vmem:[%s3 + $0x1c28] sm:$0xff]
      %v1484 = vld [vmem:[%s3 + $0x1c30] sm:$0xff]
      %v1485 = vld [vmem:[%s3 + $0x1c38] sm:$0xff]
      %v1486 = vld [vmem:[%s3 + $0x1c40] sm:$0xff]
      %v1487 = vld [vmem:[%s3 + $0x1c48] sm:$0xff]
      %v1488 = vld [vmem:[%s3 + $0x1c50] sm:$0xff]
      %v1489 = vld [vmem:[%s3 + $0x1c58] sm:$0xff]
      %v1490 = vld [vmem:[%s3 + $0x1c60] sm:$0xff]
      %v1491 = vld [vmem:[%s3 + $0x1c68] sm:$0xff]
      %v1492 = vld [vmem:[%s3 + $0x1c70] sm:$0xff]
      %v1493 = vld [vmem:[%s3 + $0x1c78] sm:$0xff]
      %v1494 = vld [vmem:[%s3 + $0x1c80] sm:$0xff]
      %v1495 = vld [vmem:[%s3 + $0x1c88] sm:$0xff]
      %v1496 = vld [vmem:[%s3 + $0x1c90] sm:$0xff]
      %v1497 = vld [vmem:[%s3 + $0x1c98] sm:$0xff]
      %v1498 = vld [vmem:[%s3 + $0x1ca0] sm:$0xff]
      %v1499 = vld [vmem:[%s3 + $0x1ca8] sm:$0xff]
      %v1500 = vld [vmem:[%s3 + $0x1cb0] sm:$0xff]
      %v1501 = vld [vmem:[%s3 + $0x1cb8] sm:$0xff]
      %v1502 = vld [vmem:[%s3 + $0x1cc0] sm:$0xff]
      %v1503 = vld [vmem:[%s3 + $0x1cc8] sm:$0xff]
      %v1504 = vld [vmem:[%s3 + $0x1cd0] sm:$0xff]
      %v1505 = vld [vmem:[%s3 + $0x1cd8] sm:$0xff]
      %v1506 = vld [vmem:[%s3 + $0x1ce0] sm:$0xff]
      %v1507 = vld [vmem:[%s3 + $0x1ce8] sm:$0xff]
      %v1508 = vld [vmem:[%s3 + $0x1cf0] sm:$0xff]
      %v1509 = vld [vmem:[%s3 + $0x1cf8] sm:$0xff]
      %v1510 = vld [vmem:[%s3 + $0x1d00] sm:$0xff]
      %v1511 = vld [vmem:[%s3 + $0x1d08] sm:$0xff]
      %v1512 = vld [vmem:[%s3 + $0x1d10] sm:$0xff]
      %v1513 = vld [vmem:[%s3 + $0x1d18] sm:$0xff]
      %v1514 = vld [vmem:[%s3 + $0x1d20] sm:$0xff]
      %v1515 = vld [vmem:[%s3 + $0x1d28] sm:$0xff]
      %v1516 = vld [vmem:[%s3 + $0x1d30] sm:$0xff]
      %v1517 = vld [vmem:[%s3 + $0x1d38] sm:$0xff]
      %v1518 = vld [vmem:[%s3 + $0x1d40] sm:$0xff]
      %v1519 = vld [vmem:[%s3 + $0x1d48] sm:$0xff]
      %v1520 = vld [vmem:[%s3 + $0x1d50] sm:$0xff]
      %v1521 = vld [vmem:[%s3 + $0x1d58] sm:$0xff]
      %v1522 = vld [vmem:[%s3 + $0x1d60] sm:$0xff]
      %v1523 = vld [vmem:[%s3 + $0x1d68] sm:$0xff]
      %v1524 = vld [vmem:[%s3 + $0x1d70] sm:$0xff]
      %v1525 = vld [vmem:[%s3 + $0x1d78] sm:$0xff]
      %v1526 = vld [vmem:[%s3 + $0x1d80] sm:$0xff]
      %v1527 = vld [vmem:[%s3 + $0x1d88] sm:$0xff]
      %v1528 = vld [vmem:[%s3 + $0x1d90] sm:$0xff]
      %v1529 = vld [vmem:[%s3 + $0x1d98] sm:$0xff]
      %v1530 = vld [vmem:[%s3 + $0x1da0] sm:$0xff]
      %v1531 = vld [vmem:[%s3 + $0x1da8] sm:$0xff]
      %v1532 = vld [vmem:[%s3 + $0x1db0] sm:$0xff]
      %v1533 = vld [vmem:[%s3 + $0x1db8] sm:$0xff]
      %v1534 = vld [vmem:[%s3 + $0x1dc0] sm:$0xff]
      %v1535 = vld [vmem:[%s3 + $0x1dc8] sm:$0xff]
      %v1536 = vld [vmem:[%s3 + $0x1dd0] sm:$0xff]
      %v1537 = vld [vmem:[%s3 + $0x1dd8] sm:$0xff]
      %v1538 = vld [vmem:[%s3 + $0x1de0] sm:$0xff]
      %v1539 = vld [vmem:[%s3 + $0x1de8] sm:$0xff]
      %v1540 = vld [vmem:[%s3 + $0x1df0] sm:$0xff]
      %v1541 = vld [vmem:[%s3 + $0x1df8] sm:$0xff]
      %v1542 = vld [vmem:[%s3 + $0x1e00] sm:$0xff]
      %v1543 = vld [vmem:[%s3 + $0x1e08] sm:$0xff]
      %v1544 = vld [vmem:[%s3 + $0x1e10] sm:$0xff]
      %v1545 = vld [vmem:[%s3 + $0x1e18] sm:$0xff]
      %v1546 = vld [vmem:[%s3 + $0x1e20] sm:$0xff]
      %v1547 = vld [vmem:[%s3 + $0x1e28] sm:$0xff]
      %v1548 = vld [vmem:[%s3 + $0x1e30] sm:$0xff]
      %v1549 = vld [vmem:[%s3 + $0x1e38] sm:$0xff]
      %v1550 = vld [vmem:[%s3 + $0x1e40] sm:$0xff]
      %v1551 = vld [vmem:[%s3 + $0x1e48] sm:$0xff]
      %v1552 = vld [vmem:[%s3 + $0x1e50] sm:$0xff]
      %v1553 = vld [vmem:[%s3 + $0x1e58] sm:$0xff]
      %v1554 = vld [vmem:[%s3 + $0x1e60] sm:$0xff]
      %v1555 = vld [vmem:[%s3 + $0x1e68] sm:$0xff]
      %v1556 = vld [vmem:[%s3 + $0x1e70] sm:$0xff]
      %v1557 = vld [vmem:[%s3 + $0x1e78] sm:$0xff]
      %v1558 = vld [vmem:[%s3 + $0x1e80] sm:$0xff]
      %v1559 = vld [vmem:[%s3 + $0x1e88] sm:$0xff]
      %v1560 = vld [vmem:[%s3 + $0x1e90] sm:$0xff]
      %v1561 = vld [vmem:[%s3 + $0x1e98] sm:$0xff]
      %v1562 = vld [vmem:[%s3 + $0x1ea0] sm:$0xff]
      %v1563 = vld [vmem:[%s3 + $0x1ea8] sm:$0xff]
      %v1564 = vld [vmem:[%s3 + $0x1eb0] sm:$0xff]
      %v1565 = vld [vmem:[%s3 + $0x1eb8] sm:$0xff]
      %v1566 = vld [vmem:[%s3 + $0x1ec0] sm:$0xff]
      %v1567 = vld [vmem:[%s3 + $0x1ec8] sm:$0xff]
      %v1568 = vld [vmem:[%s3 + $0x1ed0] sm:$0xff]
      %v1569 = vld [vmem:[%s3 + $0x1ed8] sm:$0xff]
      %v1570 = vld [vmem:[%s3 + $0x1ee0] sm:$0xff]
      %v1571 = vld [vmem:[%s3 + $0x1ee8] sm:$0xff]
      %v1572 = vld [vmem:[%s3 + $0x1ef0] sm:$0xff]
      %v1573 = vld [vmem:[%s3 + $0x1ef8] sm:$0xff]
      %v1574 = vld [vmem:[%s3 + $0x1f00] sm:$0xff]
      %v1575 = vld [vmem:[%s3 + $0x1f08] sm:$0xff]
      %v1576 = vld [vmem:[%s3 + $0x1f10] sm:$0xff]
      %v1577 = vld [vmem:[%s3 + $0x1f18] sm:$0xff]
      %v1578 = vld [vmem:[%s3 + $0x1f20] sm:$0xff]
      %v1579 = vld [vmem:[%s3 + $0x1f28] sm:$0xff]
      %v1580 = vld [vmem:[%s3 + $0x1f30] sm:$0xff]
      %v1581 = vld [vmem:[%s3 + $0x1f38] sm:$0xff]
      %v1582 = vld [vmem:[%s3 + $0x1f40] sm:$0xff]
      %v1583 = vld [vmem:[%s3 + $0x1f48] sm:$0xff]
      %v1584 = vld [vmem:[%s3 + $0x1f50] sm:$0xff]
      %v1585 = vld [vmem:[%s3 + $0x1f58] sm:$0xff]
      %v1586 = vld [vmem:[%s3 + $0x1f60] sm:$0xff]
      %v1587 = vld [vmem:[%s3 + $0x1f68] sm:$0xff]
      %v1588 = vld [vmem:[%s3 + $0x1f70] sm:$0xff]
      %v1589 = vld [vmem:[%s3 + $0x1f78] sm:$0xff]
      %v1590 = vld [vmem:[%s3 + $0x1f80] sm:$0xff]
      %v1591 = vld [vmem:[%s3 + $0x1f88] sm:$0xff]
      %v1592 = vld [vmem:[%s3 + $0x1f90] sm:$0xff]
      %v1593 = vld [vmem:[%s3 + $0x1f98] sm:$0xff]
      %v1594 = vld [vmem:[%s3 + $0x1fa0] sm:$0xff]
      %v1595 = vld [vmem:[%s3 + $0x1fa8] sm:$0xff]
      %v1596 = vld [vmem:[%s3 + $0x1fb0] sm:$0xff]
      %v1597 = vld [vmem:[%s3 + $0x1fb8] sm:$0xff]
      %v1598 = vld [vmem:[%s3 + $0x1fc0] sm:$0xff]
      %v1599 = vld [vmem:[%s3 + $0x1fc8] sm:$0xff]
      %v1600 = vld [vmem:[%s3 + $0x1fd0] sm:$0xff]
      %v1601 = vld [vmem:[%s3 + $0x1fd8] sm:$0xff]
      %v1602 = vld [vmem:[%s3 + $0x1fe0] sm:$0xff]
      %v1603 = vld [vmem:[%s3 + $0x1fe8] sm:$0xff]
      %v1604 = vld [vmem:[%s3 + $0x1ff0] sm:$0xff]
      %v1605 = vld [vmem:[%s3 + $0x1ff8] sm:$0xff]
      %v1606 = vld [vmem:[%s3 + $0x2000] sm:$0xff]
      %v1607 = vld [vmem:[%s3 + $0x2008] sm:$0xff]
      %v1608 = vld [vmem:[%s3 + $0x2010] sm:$0xff]
      %v1609 = vld [vmem:[%s3 + $0x2018] sm:$0xff]
      %v1610 = vld [vmem:[%s3 + $0x2020] sm:$0xff]
      %v1611 = vld [vmem:[%s3 + $0x2028] sm:$0xff]
      %v1612 = vld [vmem:[%s3 + $0x2030] sm:$0xff]
      %v1613 = vld [vmem:[%s3 + $0x2038] sm:$0xff]
      %v1614 = vld [vmem:[%s3 + $0x2040] sm:$0xff]
      %v1615 = vld [vmem:[%s3 + $0x2048] sm:$0xff]
      %v1616 = vld [vmem:[%s3 + $0x2050] sm:$0xff]
      %v1617 = vld [vmem:[%s3 + $0x2058] sm:$0xff]
      %v1618 = vld [vmem:[%s3 + $0x2060] sm:$0xff]
      %v1619 = vld [vmem:[%s3 + $0x2068] sm:$0xff]
      %v1620 = vld [vmem:[%s3 + $0x2070] sm:$0xff]
      %v1621 = vld [vmem:[%s3 + $0x2078] sm:$0xff]
      %v1622 = vld [vmem:[%s3 + $0x2080] sm:$0xff]
      %v1623 = vld [vmem:[%s3 + $0x2088] sm:$0xff]
      %v1624 = vld [vmem:[%s3 + $0x2090] sm:$0xff]
      %v1625 = vld [vmem:[%s3 + $0x2098] sm:$0xff]
      %v1626 = vld [vmem:[%s3 + $0x20a0] sm:$0xff]
      %v1627 = vld [vmem:[%s3 + $0x20a8] sm:$0xff]
      %v1628 = vld [vmem:[%s3 + $0x20b0] sm:$0xff]
      %v1629 = vld [vmem:[%s3 + $0x20b8] sm:$0xff]
      %v1630 = vld [vmem:[%s3 + $0x20c0] sm:$0xff]
      %v1631 = vld [vmem:[%s3 + $0x20c8] sm:$0xff]
      %v1632 = vld [vmem:[%s3 + $0x20d0] sm:$0xff]
      %v1633 = vld [vmem:[%s3 + $0x20d8] sm:$0xff]
      %v1634 = vld [vmem:[%s3 + $0x20e0] sm:$0xff]
      %v1635 = vld [vmem:[%s3 + $0x20e8] sm:$0xff]
      %v1636 = vld [vmem:[%s3 + $0x20f0] sm:$0xff]
      %v1637 = vld [vmem:[%s3 + $0x20f8] sm:$0xff]
      %v1638 = vld [vmem:[%s3 + $0x2100] sm:$0xff]
      %v1639 = vld [vmem:[%s3 + $0x2108] sm:$0xff]
      %v1640 = vld [vmem:[%s3 + $0x2110] sm:$0xff]
      %v1641 = vld [vmem:[%s3 + $0x2118] sm:$0xff]
      %v1642 = vld [vmem:[%s3 + $0x2120] sm:$0xff]
      %v1643 = vld [vmem:[%s3 + $0x2128] sm:$0xff]
      %v1644 = vld [vmem:[%s3 + $0x2130] sm:$0xff]
      %v1645 = vld [vmem:[%s3 + $0x2138] sm:$0xff]
      %v1646 = vld [vmem:[%s3 + $0x2140] sm:$0xff]
      %v1647 = vld [vmem:[%s3 + $0x2148] sm:$0xff]
      %v1648 = vld [vmem:[%s3 + $0x2150] sm:$0xff]
      %v1649 = vld [vmem:[%s3 + $0x2158] sm:$0xff]
      %v1650 = vld [vmem:[%s3 + $0x2160] sm:$0xff]
      %v1651 = vld [vmem:[%s3 + $0x2168] sm:$0xff]
      %v1652 = vld [vmem:[%s3 + $0x2170] sm:$0xff]
      %v1653 = vld [vmem:[%s3 + $0x2178] sm:$0xff]
      %v1654 = vld [vmem:[%s3 + $0x2180] sm:$0xff]
      %v1655 = vld [vmem:[%s3 + $0x2188] sm:$0xff]
      %v1656 = vld [vmem:[%s3 + $0x2190] sm:$0xff]
      %v1657 = vld [vmem:[%s3 + $0x2198] sm:$0xff]
      %v1658 = vld [vmem:[%s3 + $0x21a0] sm:$0xff]
      %v1659 = vld [vmem:[%s3 + $0x21a8] sm:$0xff]
      %v1660 = vld [vmem:[%s3 + $0x21b0] sm:$0xff]
      %v1661 = vld [vmem:[%s3 + $0x21b8] sm:$0xff]
      %v1662 = vld [vmem:[%s3 + $0x21c0] sm:$0xff]
      %v1663 = vld [vmem:[%s3 + $0x21c8] sm:$0xff]
      %v1664 = vld [vmem:[%s3 + $0x21d0] sm:$0xff]
      %v1665 = vld [vmem:[%s3 + $0x21d8] sm:$0xff]
      %v1666 = vld [vmem:[%s3 + $0x21e0] sm:$0xff]
      %v1667 = vld [vmem:[%s3 + $0x21e8] sm:$0xff]
      %v1668 = vld [vmem:[%s3 + $0x21f0] sm:$0xff]
      %v1669 = vld [vmem:[%s3 + $0x21f8] sm:$0xff]
      %v1670 = vld [vmem:[%s3 + $0x2200] sm:$0xff]
      %v1671 = vld [vmem:[%s3 + $0x2208] sm:$0xff]
      %v1672 = vld [vmem:[%s3 + $0x2210] sm:$0xff]
      %v1673 = vld [vmem:[%s3 + $0x2218] sm:$0xff]
      %v1674 = vld [vmem:[%s3 + $0x2220] sm:$0xff]
      %v1675 = vld [vmem:[%s3 + $0x2228] sm:$0xff]
      %v1676 = vld [vmem:[%s3 + $0x2230] sm:$0xff]
      %v1677 = vld [vmem:[%s3 + $0x2238] sm:$0xff]
      %v1678 = vld [vmem:[%s3 + $0x2240] sm:$0xff]
      %v1679 = vld [vmem:[%s3 + $0x2248] sm:$0xff]
      %v1680 = vld [vmem:[%s3 + $0x2250] sm:$0xff]
      %v1681 = vld [vmem:[%s3 + $0x2258] sm:$0xff]
      %v1682 = vld [vmem:[%s3 + $0x2260] sm:$0xff]
      %v1683 = vld [vmem:[%s3 + $0x2268] sm:$0xff]
      %v1684 = vld [vmem:[%s3 + $0x2270] sm:$0xff]
      %v1685 = vld [vmem:[%s3 + $0x2278] sm:$0xff]
      %v1686 = vld [vmem:[%s3 + $0x2280] sm:$0xff]
      %v1687 = vld [vmem:[%s3 + $0x2288] sm:$0xff]
      %v1688 = vld [vmem:[%s3 + $0x2290] sm:$0xff]
      %v1689 = vld [vmem:[%s3 + $0x2298] sm:$0xff]
      %v1690 = vld [vmem:[%s3 + $0x22a0] sm:$0xff]
      %v1691 = vld [vmem:[%s3 + $0x22a8] sm:$0xff]
      %v1692 = vld [vmem:[%s3 + $0x22b0] sm:$0xff]
      %v1693 = vld [vmem:[%s3 + $0x22b8] sm:$0xff]
      %v1694 = vld [vmem:[%s3 + $0x22c0] sm:$0xff]
      %v1695 = vld [vmem:[%s3 + $0x22c8] sm:$0xff]
      %v1696 = vld [vmem:[%s3 + $0x22d0] sm:$0xff]
      %v1697 = vld [vmem:[%s3 + $0x22d8] sm:$0xff]
      %v1698 = vld [vmem:[%s3 + $0x22e0] sm:$0xff]
      %v1699 = vld [vmem:[%s3 + $0x22e8] sm:$0xff]
      %v1700 = vld [vmem:[%s3 + $0x22f0] sm:$0xff]
      %v1701 = vld [vmem:[%s3 + $0x22f8] sm:$0xff]
      %v1702 = vld [vmem:[%s3 + $0x2300] sm:$0xff]
      %v1703 = vld [vmem:[%s3 + $0x2308] sm:$0xff]
      %v1704 = vld [vmem:[%s3 + $0x2310] sm:$0xff]
      %v1705 = vld [vmem:[%s3 + $0x2318] sm:$0xff]
      %v1706 = vld [vmem:[%s3 + $0x2320] sm:$0xff]
      %v1707 = vld [vmem:[%s3 + $0x2328] sm:$0xff]
      %v1708 = vld [vmem:[%s3 + $0x2330] sm:$0xff]
      %v1709 = vld [vmem:[%s3 + $0x2338] sm:$0xff]
      %v1710 = vld [vmem:[%s3 + $0x2340] sm:$0xff]
      %v1711 = vld [vmem:[%s3 + $0x2348] sm:$0xff]
      %v1712 = vld [vmem:[%s3 + $0x2350] sm:$0xff]
      %v1713 = vld [vmem:[%s3 + $0x2358] sm:$0xff]
      %v1714 = vld [vmem:[%s3 + $0x2360] sm:$0xff]
      %v1715 = vld [vmem:[%s3 + $0x2368] sm:$0xff]
      %v1716 = vld [vmem:[%s3 + $0x2370] sm:$0xff]
      %v1717 = vld [vmem:[%s3 + $0x2378] sm:$0xff]
      %v1718 = vld [vmem:[%s3 + $0x2380] sm:$0xff]
      %v1719 = vld [vmem:[%s3 + $0x2388] sm:$0xff]
      %v1720 = vld [vmem:[%s3 + $0x2390] sm:$0xff]
      %v1721 = vld [vmem:[%s3 + $0x2398] sm:$0xff]
      %v1722 = vld [vmem:[%s3 + $0x23a0] sm:$0xff]
      %v1723 = vld [vmem:[%s3 + $0x23a8] sm:$0xff]
      %v1724 = vld [vmem:[%s3 + $0x23b0] sm:$0xff]
      %v1725 = vld [vmem:[%s3 + $0x23b8] sm:$0xff]
      %v1726 = vld [vmem:[%s3 + $0x23c0] sm:$0xff]
      %v1727 = vld [vmem:[%s3 + $0x23c8] sm:$0xff]
      %v1728 = vld [vmem:[%s3 + $0x23d0] sm:$0xff]
      %v1729 = vld [vmem:[%s3 + $0x23d8] sm:$0xff]
      %v1730 = vld [vmem:[%s3 + $0x23e0] sm:$0xff]
      %v1731 = vld [vmem:[%s3 + $0x23e8] sm:$0xff]
      %v1732 = vld [vmem:[%s3 + $0x23f0] sm:$0xff]
      %v1733 = vld [vmem:[%s3 + $0x23f8] sm:$0xff]
      %v1734 = vld [vmem:[%s3 + $0x2400] sm:$0xff]
      %v1735 = vld [vmem:[%s3 + $0x2408] sm:$0xff]
      %v1736 = vld [vmem:[%s3 + $0x2410] sm:$0xff]
      %v1737 = vld [vmem:[%s3 + $0x2418] sm:$0xff]
      %v1738 = vld [vmem:[%s3 + $0x2420] sm:$0xff]
      %v1739 = vld [vmem:[%s3 + $0x2428] sm:$0xff]
      %v1740 = vld [vmem:[%s3 + $0x2430] sm:$0xff]
      %v1741 = vld [vmem:[%s3 + $0x2438] sm:$0xff]
      %v1742 = vld [vmem:[%s3 + $0x2440] sm:$0xff]
      %v1743 = vld [vmem:[%s3 + $0x2448] sm:$0xff]
      %v1744 = vld [vmem:[%s3 + $0x2450] sm:$0xff]
      %v1745 = vld [vmem:[%s3 + $0x2458] sm:$0xff]
      %v1746 = vld [vmem:[%s3 + $0x2460] sm:$0xff]
      %v1747 = vld [vmem:[%s3 + $0x2468] sm:$0xff]
      %v1748 = vld [vmem:[%s3 + $0x2470] sm:$0xff]
      %v1749 = vld [vmem:[%s3 + $0x2478] sm:$0xff]
      %v1750 = vld [vmem:[%s3 + $0x2480] sm:$0xff]
      %v1751 = vld [vmem:[%s3 + $0x2488] sm:$0xff]
      %v1752 = vld [vmem:[%s3 + $0x2490] sm:$0xff]
      %v1753 = vld [vmem:[%s3 + $0x2498] sm:$0xff]
      %v1754 = vld [vmem:[%s3 + $0x24a0] sm:$0xff]
      %v1755 = vld [vmem:[%s3 + $0x24a8] sm:$0xff]
      %v1756 = vld [vmem:[%s3 + $0x24b0] sm:$0xff]
      %v1757 = vld [vmem:[%s3 + $0x24b8] sm:$0xff]
      %v1758 = vld [vmem:[%s3 + $0x24c0] sm:$0xff]
      %v1759 = vld [vmem:[%s3 + $0x24c8] sm:$0xff]
      %v1760 = vld [vmem:[%s3 + $0x24d0] sm:$0xff]
      %v1761 = vld [vmem:[%s3 + $0x24d8] sm:$0xff]
      %v1762 = vld [vmem:[%s3 + $0x24e0] sm:$0xff]
      %v1763 = vld [vmem:[%s3 + $0x24e8] sm:$0xff]
      %v1764 = vld [vmem:[%s3 + $0x24f0] sm:$0xff]
      %v1765 = vld [vmem:[%s3 + $0x24f8] sm:$0xff]
      %v1766 = vld [vmem:[%s3 + $0x2500] sm:$0xff]
      %v1767 = vld [vmem:[%s3 + $0x2508] sm:$0xff]
      %v1768 = vld [vmem:[%s3 + $0x2510] sm:$0xff]
      %v1769 = vld [vmem:[%s3 + $0x2518] sm:$0xff]
      %v1770 = vld [vmem:[%s3 + $0x2520] sm:$0xff]
      %v1771 = vld [vmem:[%s3 + $0x2528] sm:$0xff]
      %v1772 = vld [vmem:[%s3 + $0x2530] sm:$0xff]
      %v1773 = vld [vmem:[%s3 + $0x2538] sm:$0xff]
      %v1774 = vld [vmem:[%s3 + $0x2540] sm:$0xff]
      %v1775 = vld [vmem:[%s3 + $0x2548] sm:$0xff]
      %v1776 = vld [vmem:[%s3 + $0x2550] sm:$0xff]
      %v1777 = vld [vmem:[%s3 + $0x2558] sm:$0xff]
      %v1778 = vld [vmem:[%s3 + $0x2560] sm:$0xff]
      %v1779 = vld [vmem:[%s3 + $0x2568] sm:$0xff]
      %v1780 = vld [vmem:[%s3 + $0x2570] sm:$0xff]
      %v1781 = vld [vmem:[%s3 + $0x2578] sm:$0xff]
      %v1782 = vld [vmem:[%s3 + $0x2580] sm:$0xff]
      %v1783 = vld [vmem:[%s3 + $0x2588] sm:$0xff]
      %v1784 = vld [vmem:[%s3 + $0x2590] sm:$0xff]
      %v1785 = vld [vmem:[%s3 + $0x2598] sm:$0xff]
      %v1786 = vld [vmem:[%s3 + $0x25a0] sm:$0xff]
      %v1787 = vld [vmem:[%s3 + $0x25a8] sm:$0xff]
      %v1788 = vld [vmem:[%s3 + $0x25b0] sm:$0xff]
      %v1789 = vld [vmem:[%s3 + $0x25b8] sm:$0xff]
      %v1790 = vld [vmem:[%s3 + $0x25c0] sm:$0xff]
      %v1791 = vld [vmem:[%s3 + $0x25c8] sm:$0xff]
      %v1792 = vld [vmem:[%s3 + $0x25d0] sm:$0xff]
      %v1793 = vld [vmem:[%s3 + $0x25d8] sm:$0xff]
      %v1794 = vld [vmem:[%s3 + $0x25e0] sm:$0xff]
      %v1795 = vld [vmem:[%s3 + $0x25e8] sm:$0xff]
      %v1796 = vld [vmem:[%s3 + $0x25f0] sm:$0xff]
      %v1797 = vld [vmem:[%s3 + $0x25f8] sm:$0xff]
      %v1798 = vld [vmem:[%s3 + $0x2600] sm:$0xff]
      %v1799 = vld [vmem:[%s3 + $0x2608] sm:$0xff]
      %v1800 = vld [vmem:[%s3 + $0x2610] sm:$0xff]
      %v1801 = vld [vmem:[%s3 + $0x2618] sm:$0xff]
      %v1802 = vld [vmem:[%s3 + $0x2620] sm:$0xff]
      %v1803 = vld [vmem:[%s3 + $0x2628] sm:$0xff]
      %v1804 = vld [vmem:[%s3 + $0x2630] sm:$0xff]
      %v1805 = vld [vmem:[%s3 + $0x2638] sm:$0xff]
      %v1806 = vld [vmem:[%s3 + $0x2640] sm:$0xff]
      %v1807 = vld [vmem:[%s3 + $0x2648] sm:$0xff]
      %v1808 = vld [vmem:[%s3 + $0x2650] sm:$0xff]
      %v1809 = vld [vmem:[%s3 + $0x2658] sm:$0xff]
      %v1810 = vld [vmem:[%s3 + $0x2660] sm:$0xff]
      %v1811 = vld [vmem:[%s3 + $0x2668] sm:$0xff]
      %v1812 = vld [vmem:[%s3 + $0x2670] sm:$0xff]
      %v1813 = vld [vmem:[%s3 + $0x2678] sm:$0xff]
      %v1814 = vld [vmem:[%s3 + $0x2680] sm:$0xff]
      %v1815 = vld [vmem:[%s3 + $0x2688] sm:$0xff]
      %v1816 = vld [vmem:[%s3 + $0x2690] sm:$0xff]
      %v1817 = vld [vmem:[%s3 + $0x2698] sm:$0xff]
      %v1818 = vld [vmem:[%s3 + $0x26a0] sm:$0xff]
      %v1819 = vld [vmem:[%s3 + $0x26a8] sm:$0xff]
      %v1820 = vld [vmem:[%s3 + $0x26b0] sm:$0xff]
      %v1821 = vld [vmem:[%s3 + $0x26b8] sm:$0xff]
      %v1822 = vld [vmem:[%s3 + $0x26c0] sm:$0xff]
      %v1823 = vld [vmem:[%s3 + $0x26c8] sm:$0xff]
      %v1824 = vld [vmem:[%s3 + $0x26d0] sm:$0xff]
      %v1825 = vld [vmem:[%s3 + $0x26d8] sm:$0xff]
      %v1826 = vld [vmem:[%s3 + $0x26e0] sm:$0xff]
      %v1827 = vld [vmem:[%s3 + $0x26e8] sm:$0xff]
      %v1828 = vld [vmem:[%s3 + $0x26f0] sm:$0xff]
      %v1829 = vld [vmem:[%s3 + $0x26f8] sm:$0xff]
      %v1830 = vld [vmem:[%s3 + $0x2700] sm:$0xff]
      %v1831 = vld [vmem:[%s3 + $0x2708] sm:$0xff]
      %v1832 = vld [vmem:[%s3 + $0x2710] sm:$0xff]
      %v1833 = vld [vmem:[%s3 + $0x2718] sm:$0xff]
      %v1834 = vld [vmem:[%s3 + $0x2720] sm:$0xff]
      %v1835 = vld [vmem:[%s3 + $0x2728] sm:$0xff]
      %v1836 = vld [vmem:[%s3 + $0x2730] sm:$0xff]
      %v1837 = vld [vmem:[%s3 + $0x2738] sm:$0xff]
      %v1838 = vld [vmem:[%s3 + $0x2740] sm:$0xff]
      %v1839 = vld [vmem:[%s3 + $0x2748] sm:$0xff]
      %v1840 = vld [vmem:[%s3 + $0x2750] sm:$0xff]
      %v1841 = vld [vmem:[%s3 + $0x2758] sm:$0xff]
      %v1842 = vld [vmem:[%s3 + $0x2760] sm:$0xff]
      %v1843 = vld [vmem:[%s3 + $0x2768] sm:$0xff]
      %v1844 = vld [vmem:[%s3 + $0x2770] sm:$0xff]
      %v1845 = vld [vmem:[%s3 + $0x2778] sm:$0xff]
      %v1846 = vld [vmem:[%s3 + $0x2780] sm:$0xff]
      %v1847 = vld [vmem:[%s3 + $0x2788] sm:$0xff]
      %v1848 = vld [vmem:[%s3 + $0x2790] sm:$0xff]
      %v1849 = vld [vmem:[%s3 + $0x2798] sm:$0xff]
      %v1850 = vld [vmem:[%s3 + $0x27a0] sm:$0xff]
      %v1851 = vld [vmem:[%s3 + $0x27a8] sm:$0xff]
      %v1852 = vld [vmem:[%s3 + $0x27b0] sm:$0xff]
      %v1853 = vld [vmem:[%s3 + $0x27b8] sm:$0xff]
      %v1854 = vld [vmem:[%s3 + $0x27c0] sm:$0xff]
      %v1855 = vld [vmem:[%s3 + $0x27c8] sm:$0xff]
      %v1856 = vld [vmem:[%s3 + $0x27d0] sm:$0xff]
      %v1857 = vld [vmem:[%s3 + $0x27d8] sm:$0xff]
      %v1858 = vld [vmem:[%s3 + $0x27e0] sm:$0xff]
      %v1859 = vld [vmem:[%s3 + $0x27e8] sm:$0xff]
      %v1860 = vld [vmem:[%s3 + $0x27f0] sm:$0xff]
      %v1861 = vld [vmem:[%s3 + $0x27f8] sm:$0xff]
      %v1862 = vld [vmem:[%s3 + $0x2800] sm:$0xff]
      %v1863 = vld [vmem:[%s3 + $0x2808] sm:$0xff]
      %v1864 = vld [vmem:[%s3 + $0x2810] sm:$0xff]
      %v1865 = vld [vmem:[%s3 + $0x2818] sm:$0xff]
      %v1866 = vld [vmem:[%s3 + $0x2820] sm:$0xff]
      %v1867 = vld [vmem:[%s3 + $0x2828] sm:$0xff]
      %v1868 = vld [vmem:[%s3 + $0x2830] sm:$0xff]
      %v1869 = vld [vmem:[%s3 + $0x2838] sm:$0xff]
      %v1870 = vld [vmem:[%s3 + $0x2840] sm:$0xff]
      %v1871 = vld [vmem:[%s3 + $0x2848] sm:$0xff]
      %v1872 = vld [vmem:[%s3 + $0x2850] sm:$0xff]
      %v1873 = vld [vmem:[%s3 + $0x2858] sm:$0xff]
      %v1874 = vld [vmem:[%s3 + $0x2860] sm:$0xff]
      %v1875 = vld [vmem:[%s3 + $0x2868] sm:$0xff]
      %v1876 = vld [vmem:[%s3 + $0x2870] sm:$0xff]
      %v1877 = vld [vmem:[%s3 + $0x2878] sm:$0xff]
      %v1878 = vld [vmem:[%s3 + $0x2880] sm:$0xff]
      %v1879 = vld [vmem:[%s3 + $0x2888] sm:$0xff]
      %v1880 = vld [vmem:[%s3 + $0x2890] sm:$0xff]
      %v1881 = vld [vmem:[%s3 + $0x2898] sm:$0xff]
      %v1882 = vld [vmem:[%s3 + $0x28a0] sm:$0xff]
      %v1883 = vld [vmem:[%s3 + $0x28a8] sm:$0xff]
      %v1884 = vld [vmem:[%s3 + $0x28b0] sm:$0xff]
      %v1885 = vld [vmem:[%s3 + $0x28b8] sm:$0xff]
      %v1886 = vld [vmem:[%s3 + $0x28c0] sm:$0xff]
      %v1887 = vld [vmem:[%s3 + $0x28c8] sm:$0xff]
      %v1888 = vld [vmem:[%s3 + $0x28d0] sm:$0xff]
      %v1889 = vld [vmem:[%s3 + $0x28d8] sm:$0xff]
      %v1890 = vld [vmem:[%s3 + $0x28e0] sm:$0xff]
      %v1891 = vld [vmem:[%s3 + $0x28e8] sm:$0xff]
      %v1892 = vld [vmem:[%s3 + $0x28f0] sm:$0xff]
      %v1893 = vld [vmem:[%s3 + $0x28f8] sm:$0xff]
      %v1894 = vld [vmem:[%s3 + $0x2900] sm:$0xff]
      %v1895 = vld [vmem:[%s3 + $0x2908] sm:$0xff]
      %v1896 = vld [vmem:[%s3 + $0x2910] sm:$0xff]
      %v1897 = vld [vmem:[%s3 + $0x2918] sm:$0xff]
      %v1898 = vld [vmem:[%s3 + $0x2920] sm:$0xff]
      %v1899 = vld [vmem:[%s3 + $0x2928] sm:$0xff]
      %v1900 = vld [vmem:[%s3 + $0x2930] sm:$0xff]
      %v1901 = vld [vmem:[%s3 + $0x2938] sm:$0xff]
      %v1902 = vld [vmem:[%s3 + $0x2940] sm:$0xff]
      %v1903 = vld [vmem:[%s3 + $0x2948] sm:$0xff]
      %v1904 = vld [vmem:[%s3 + $0x2950] sm:$0xff]
      %v1905 = vld [vmem:[%s3 + $0x2958] sm:$0xff]
      %v1906 = vld [vmem:[%s3 + $0x2960] sm:$0xff]
      %v1907 = vld [vmem:[%s3 + $0x2968] sm:$0xff]
      %v1908 = vld [vmem:[%s3 + $0x2970] sm:$0xff]
      %v1909 = vld [vmem:[%s3 + $0x2978] sm:$0xff]
      %v1910 = vld [vmem:[%s3 + $0x2980] sm:$0xff]
      %v1911 = vld [vmem:[%s3 + $0x2988] sm:$0xff]
      %v1912 = vld [vmem:[%s3 + $0x2990] sm:$0xff]
      %v1913 = vld [vmem:[%s3 + $0x2998] sm:$0xff]
      %v1914 = vld [vmem:[%s3 + $0x29a0] sm:$0xff]
      %v1915 = vld [vmem:[%s3 + $0x29a8] sm:$0xff]
      %v1916 = vld [vmem:[%s3 + $0x29b0] sm:$0xff]
      %v1917 = vld [vmem:[%s3 + $0x29b8] sm:$0xff]
      %v1918 = vld [vmem:[%s3 + $0x29c0] sm:$0xff]
      %v1919 = vld [vmem:[%s3 + $0x29c8] sm:$0xff]
      %v1920 = vld [vmem:[%s3 + $0x29d0] sm:$0xff]
      %v1921 = vld [vmem:[%s3 + $0x29d8] sm:$0xff]
      %v1922 = vld [vmem:[%s3 + $0x29e0] sm:$0xff]
      %v1923 = vld [vmem:[%s3 + $0x29e8] sm:$0xff]
      %v1924 = vld [vmem:[%s3 + $0x29f0] sm:$0xff]
      %v1925 = vld [vmem:[%s3 + $0x29f8] sm:$0xff]
      %v1926 = vld [vmem:[%s3 + $0x2a00] sm:$0xff]
      %v1927 = vld [vmem:[%s3 + $0x2a08] sm:$0xff]
      %v1928 = vld [vmem:[%s3 + $0x2a10] sm:$0xff]
      %v1929 = vld [vmem:[%s3 + $0x2a18] sm:$0xff]
      %v1930 = vld [vmem:[%s3 + $0x2a20] sm:$0xff]
      %v1931 = vld [vmem:[%s3 + $0x2a28] sm:$0xff]
      %v1932 = vld [vmem:[%s3 + $0x2a30] sm:$0xff]
      %v1933 = vld [vmem:[%s3 + $0x2a38] sm:$0xff]
      %v1934 = vld [vmem:[%s3 + $0x2a40] sm:$0xff]
      %v1935 = vld [vmem:[%s3 + $0x2a48] sm:$0xff]
      %v1936 = vld [vmem:[%s3 + $0x2a50] sm:$0xff]
      %v1937 = vld [vmem:[%s3 + $0x2a58] sm:$0xff]
      %v1938 = vld [vmem:[%s3 + $0x2a60] sm:$0xff]
      %v1939 = vld [vmem:[%s3 + $0x2a68] sm:$0xff]
      %v1940 = vld [vmem:[%s3 + $0x2a70] sm:$0xf]
      %v1941 = vld [vmem:[%s3 + $0x2a78] sm:$0xf]
      %v1942 = vld [vmem:[%s3 + $0x2a80] sm:$0xf]
      %v1943 = vld [vmem:[%s3 + $0x2a88] sm:$0xf]
      %v1944 = vld [vmem:[%s3 + $0x2a90] sm:$0xf]
      %v1945 = vld [vmem:[%s3 + $0x2a98] sm:$0xf]
      %v1946 = vld [vmem:[%s3 + $0x2aa0] sm:$0xf]
      %v1947 = vld [vmem:[%s3 + $0x2aa8] sm:$0xf]
      %v1948 = vld [vmem:[%s3 + $0x2ab0] sm:$0xf]
      %v1949 = vld [vmem:[%s3 + $0x2ab8] sm:$0xf]
      %v1950 = vld [vmem:[%s3 + $0x2ac0] sm:$0xf]
      %v1951 = vld [vmem:[%s3 + $0x2ac8] sm:$0xf]
      %v1952 = vld [vmem:[%s3 + $0x2ad0] sm:$0xf]
      %v1953 = vld [vmem:[%s3 + $0x2ad8] sm:$0xf]
      %v1954 = vld [vmem:[%s4] ss:$4 sm:$0xff]
      %s1955 = scalar_lea.vmem %s4, 32
      %v1956 = vld [vmem:[%s1955] ss:$4 sm:$0x3f]
      %v1959 = vperm.slane %v1954, 0
      %v1960 = vperm.slane %v1954, 1
      %v1961 = vperm.slane %v1954, 2
      %v1962 = vperm.slane %v1954, 3
      %v1963 = vperm.slane %v1954, 4
      %v1964 = vperm.slane %v1954, 5
      %v1965 = vperm.slane %v1954, 6
      %v1966 = vperm.slane %v1954, 7
      %v1967 = vperm.slane %v1956, 0
      %v1968 = vperm.slane %v1956, 1
      %v1969 = vperm.slane %v1956, 2
      %v1970 = vperm.slane %v1956, 3
      %v1971 = vperm.slane %v1956, 4
      %v1972 = vperm.slane %v1956, 5
      %vm1987 = vcmask 97280
      %v1989 = vsel %vm1987, %v581, 0
      %vm1991 = vcmask 1043456
      %v1993 = vsel %vm1991, %v1940, 0
      %v1996 = vsel %vm1991, %v1941, 0
      %v1999 = vsel %vm1991, %v1942, 0
      %v2002 = vsel %vm1991, %v1943, 0
      %v2005 = vsel %vm1991, %v1944, 0
      %v2008 = vsel %vm1991, %v1945, 0
      %v2011 = vsel %vm1991, %v1946, 0
      %v2014 = vsel %vm1991, %v1947, 0
      %v2017 = vsel %vm1991, %v1948, 0
      %v2020 = vsel %vm1991, %v1949, 0
      %v2023 = vsel %vm1991, %v1950, 0
      %v2026 = vsel %vm1991, %v1951, 0
      %v2029 = vsel %vm1991, %v1952, 0
      %v2032 = vsel %vm1991, %v1953, 0
      %2034 = vmatpush.msra.mxu0 %v792
      %2035 = vmatpush.msra.mxu0 %v778
      %2036 = vmatpush.msra.mxu0 %v764
      %2037 = vmatpush.msra.mxu0 %v750
      %2038 = vmatpush.msra.mxu0 %v736
      %2039 = vmatpush.msra.mxu0 %v722
      %2040 = vmatpush.msra.mxu0 %v708
      %2041 = vmatpush.msra.mxu0 %v694
      %2042 = vmatpush.msra.mxu0 %v680
      %2043 = vmatpush.msra.mxu0 %v666
      %2044 = vmatpush.msra.mxu0 %v652
      %2045 = vmatpush.msra.mxu0 %v638
      %2046 = vmatpush.msra.mxu0 %v624
      %2047 = vmatpush.msra.mxu0 %v610
      %2048 = vmatpush.msra.mxu0 %v596
      %2049 = vmatpush.msra.mxu0 %v582
      %2050 = vmatmul.f32.gmra.mxu0 %v575
      %v2051 = vpop.f32.mrf.mxu0
      %v2052 = vadd.f32 %v1959, %v2051
      %2053 = vdwg.mxu0
      %2054 = vmatpush.msra.mxu0 %v1016
      %2055 = vmatpush.msra.mxu0 %v1002
      %2056 = vmatpush.msra.mxu0 %v988
      %2057 = vmatpush.msra.mxu0 %v974
      %2058 = vmatpush.msra.mxu0 %v960
      %2059 = vmatpush.msra.mxu0 %v946
      %2060 = vmatpush.msra.mxu0 %v932
      %2061 = vmatpush.msra.mxu0 %v918
      %2062 = vmatpush.msra.mxu0 %v904
      %2063 = vmatpush.msra.mxu0 %v890
      %2064 = vmatpush.msra.mxu0 %v876
      %2065 = vmatpush.msra.mxu0 %v862
      %2066 = vmatpush.msra.mxu0 %v848
      %2067 = vmatpush.msra.mxu0 %v834
      %2068 = vmatpush.msra.mxu0 %v820
      %2069 = vmatpush.msra.mxu0 %v806
      %2070 = vmatmul.f32.gmra.mxu0 %v576
      %v2071 = vpop.f32.mrf.mxu0
      %v2072 = vadd.f32 %v2052, %v2071
      %2073 = vdwg.mxu0
      %2074 = vmatpush.msra.mxu0 %v1240
      %2075 = vmatpush.msra.mxu0 %v1226
      %2076 = vmatpush.msra.mxu0 %v1212
      %2077 = vmatpush.msra.mxu0 %v1198
      %2078 = vmatpush.msra.mxu0 %v1184
      %2079 = vmatpush.msra.mxu0 %v1170
      %2080 = vmatpush.msra.mxu0 %v1156
      %2081 = vmatpush.msra.mxu0 %v1142
      %2082 = vmatpush.msra.mxu0 %v1128
      %2083 = vmatpush.msra.mxu0 %v1114
      %2084 = vmatpush.msra.mxu0 %v1100
      %2085 = vmatpush.msra.mxu0 %v1086
      %2086 = vmatpush.msra.mxu0 %v1072
      %2087 = vmatpush.msra.mxu0 %v1058
      %2088 = vmatpush.msra.mxu0 %v1044
      %2089 = vmatpush.msra.mxu0 %v1030
      %2090 = vmatmul.f32.gmra.mxu0 %v577
      %v2091 = vpop.f32.mrf.mxu0
      %v2092 = vadd.f32 %v2072, %v2091
      %2093 = vdwg.mxu0
      %2094 = vmatpush.msra.mxu0 %v1464
      %2095 = vmatpush.msra.mxu0 %v1450
      %2096 = vmatpush.msra.mxu0 %v1436
      %2097 = vmatpush.msra.mxu0 %v1422
      %2098 = vmatpush.msra.mxu0 %v1408
      %2099 = vmatpush.msra.mxu0 %v1394
      %2100 = vmatpush.msra.mxu0 %v1380
      %2101 = vmatpush.msra.mxu0 %v1366
      %2102 = vmatpush.msra.mxu0 %v1352
      %2103 = vmatpush.msra.mxu0 %v1338
      %2104 = vmatpush.msra.mxu0 %v1324
      %2105 = vmatpush.msra.mxu0 %v1310
      %2106 = vmatpush.msra.mxu0 %v1296
      %2107 = vmatpush.msra.mxu0 %v1282
      %2108 = vmatpush.msra.mxu0 %v1268
      %2109 = vmatpush.msra.mxu0 %v1254
      %2110 = vmatmul.f32.gmra.mxu0 %v578
      %v2111 = vpop.f32.mrf.mxu0
      %v2112 = vadd.f32 %v2092, %v2111
      %2113 = vdwg.mxu0
      %2114 = vmatpush.msra.mxu0 %v1688
      %2115 = vmatpush.msra.mxu0 %v1674
      %2116 = vmatpush.msra.mxu0 %v1660
      %2117 = vmatpush.msra.mxu0 %v1646
      %2118 = vmatpush.msra.mxu0 %v1632
      %2119 = vmatpush.msra.mxu0 %v1618
      %2120 = vmatpush.msra.mxu0 %v1604
      %2121 = vmatpush.msra.mxu0 %v1590
      %2122 = vmatpush.msra.mxu0 %v1576
      %2123 = vmatpush.msra.mxu0 %v1562
      %2124 = vmatpush.msra.mxu0 %v1548
      %2125 = vmatpush.msra.mxu0 %v1534
      %2126 = vmatpush.msra.mxu0 %v1520
      %2127 = vmatpush.msra.mxu0 %v1506
      %2128 = vmatpush.msra.mxu0 %v1492
      %2129 = vmatpush.msra.mxu0 %v1478
      %2130 = vmatmul.f32.gmra.mxu0 %v579
      %v2131 = vpop.f32.mrf.mxu0
      %v2132 = vadd.f32 %v2112, %v2131
      %2133 = vdwg.mxu0
      %2134 = vmatpush.msra.mxu0 %v1912
      %2135 = vmatpush.msra.mxu0 %v1898
      %2136 = vmatpush.msra.mxu0 %v1884
      %2137 = vmatpush.msra.mxu0 %v1870
      %2138 = vmatpush.msra.mxu0 %v1856
      %2139 = vmatpush.msra.mxu0 %v1842
      %2140 = vmatpush.msra.mxu0 %v1828
      %2141 = vmatpush.msra.mxu0 %v1814
      %2142 = vmatpush.msra.mxu0 %v1800
      %2143 = vmatpush.msra.mxu0 %v1786
      %2144 = vmatpush.msra.mxu0 %v1772
      %2145 = vmatpush.msra.mxu0 %v1758
      %2146 = vmatpush.msra.mxu0 %v1744
      %2147 = vmatpush.msra.mxu0 %v1730
      %2148 = vmatpush.msra.mxu0 %v1716
      %2149 = vmatpush.msra.mxu0 %v1702
      %2150 = vmatmul.f32.gmra.mxu0 %v580
      %v2151 = vpop.f32.mrf.mxu0
      %v2152 = vadd.f32 %v2132, %v2151
      %2153 = vdwg.mxu0
      %2154 = vmatpush.msra.mxu0 0.0
      %2155 = vmatpush.msra.mxu0 0.0
      %2156 = vmatpush.msra.mxu0 0.0
      %2157 = vmatpush.msra.mxu0 0.0
      %2158 = vmatpush.msra.mxu0 0.0
      %2159 = vmatpush.msra.mxu0 0.0
      %2160 = vmatpush.msra.mxu0 0.0
      %2161 = vmatpush.msra.mxu0 0.0
      %2162 = vmatpush.msra.mxu0 0.0
      %2163 = vmatpush.msra.mxu0 0.0
      %2164 = vmatpush.msra.mxu0 0.0
      %2165 = vmatpush.msra.mxu0 0.0
      %2166 = vmatpush.msra.mxu0 0.0
      %2167 = vmatpush.msra.mxu0 0.0
      %2168 = vmatpush.msra.mxu0 %v1993
      %2169 = vmatpush.msra.mxu0 %v1926
      %2170 = vmatmul.f32.gmra.mxu0 %v1989
      %v2171 = vpop.f32.mrf.mxu0
      %v2172 = vadd.f32 %v2152, %v2171
      %2173 = vdwg.mxu0
      %2174 = vmatpush.msra.mxu0 %v793
      %2175 = vmatpush.msra.mxu0 %v779
      %2176 = vmatpush.msra.mxu0 %v765
      %2177 = vmatpush.msra.mxu0 %v751
      %2178 = vmatpush.msra.mxu0 %v737
      %2179 = vmatpush.msra.mxu0 %v723
      %2180 = vmatpush.msra.mxu0 %v709
      %2181 = vmatpush.msra.mxu0 %v695
      %2182 = vmatpush.msra.mxu0 %v681
      %2183 = vmatpush.msra.mxu0 %v667
      %2184 = vmatpush.msra.mxu0 %v653
      %2185 = vmatpush.msra.mxu0 %v639
      %2186 = vmatpush.msra.mxu0 %v625
      %2187 = vmatpush.msra.mxu0 %v611
      %2188 = vmatpush.msra.mxu0 %v597
      %2189 = vmatpush.msra.mxu0 %v583
      %2190 = vmatmul.f32.gmra.mxu0 %v575
      %v2191 = vpop.f32.mrf.mxu0
      %v2192 = vadd.f32 %v1960, %v2191
      %2193 = vdwg.mxu0
      %2194 = vmatpush.msra.mxu0 %v1017
      %2195 = vmatpush.msra.mxu0 %v1003
      %2196 = vmatpush.msra.mxu0 %v989
      %2197 = vmatpush.msra.mxu0 %v975
      %2198 = vmatpush.msra.mxu0 %v961
      %2199 = vmatpush.msra.mxu0 %v947
      %2200 = vmatpush.msra.mxu0 %v933
      %2201 = vmatpush.msra.mxu0 %v919
      %2202 = vmatpush.msra.mxu0 %v905
      %2203 = vmatpush.msra.mxu0 %v891
      %2204 = vmatpush.msra.mxu0 %v877
      %2205 = vmatpush.msra.mxu0 %v863
      %2206 = vmatpush.msra.mxu0 %v849
      %2207 = vmatpush.msra.mxu0 %v835
      %2208 = vmatpush.msra.mxu0 %v821
      %2209 = vmatpush.msra.mxu0 %v807
      %2210 = vmatmul.f32.gmra.mxu0 %v576
      %v2211 = vpop.f32.mrf.mxu0
      %v2212 = vadd.f32 %v2192, %v2211
      %2213 = vdwg.mxu0
      %2214 = vmatpush.msra.mxu0 %v1241
      %2215 = vmatpush.msra.mxu0 %v1227
      %2216 = vmatpush.msra.mxu0 %v1213
      %2217 = vmatpush.msra.mxu0 %v1199
      %2218 = vmatpush.msra.mxu0 %v1185
      %2219 = vmatpush.msra.mxu0 %v1171
      %2220 = vmatpush.msra.mxu0 %v1157
      %2221 = vmatpush.msra.mxu0 %v1143
      %2222 = vmatpush.msra.mxu0 %v1129
      %2223 = vmatpush.msra.mxu0 %v1115
      %2224 = vmatpush.msra.mxu0 %v1101
      %2225 = vmatpush.msra.mxu0 %v1087
      %2226 = vmatpush.msra.mxu0 %v1073
      %2227 = vmatpush.msra.mxu0 %v1059
      %2228 = vmatpush.msra.mxu0 %v1045
      %2229 = vmatpush.msra.mxu0 %v1031
      %2230 = vmatmul.f32.gmra.mxu0 %v577
      %v2231 = vpop.f32.mrf.mxu0
      %v2232 = vadd.f32 %v2212, %v2231
      %2233 = vdwg.mxu0
      %2234 = vmatpush.msra.mxu0 %v1465
      %2235 = vmatpush.msra.mxu0 %v1451
      %2236 = vmatpush.msra.mxu0 %v1437
      %2237 = vmatpush.msra.mxu0 %v1423
      %2238 = vmatpush.msra.mxu0 %v1409
      %2239 = vmatpush.msra.mxu0 %v1395
      %2240 = vmatpush.msra.mxu0 %v1381
      %2241 = vmatpush.msra.mxu0 %v1367
      %2242 = vmatpush.msra.mxu0 %v1353
      %2243 = vmatpush.msra.mxu0 %v1339
      %2244 = vmatpush.msra.mxu0 %v1325
      %2245 = vmatpush.msra.mxu0 %v1311
      %2246 = vmatpush.msra.mxu0 %v1297
      %2247 = vmatpush.msra.mxu0 %v1283
      %2248 = vmatpush.msra.mxu0 %v1269
      %2249 = vmatpush.msra.mxu0 %v1255
      %2250 = vmatmul.f32.gmra.mxu0 %v578
      %v2251 = vpop.f32.mrf.mxu0
      %v2252 = vadd.f32 %v2232, %v2251
      %2253 = vdwg.mxu0
      %2254 = vmatpush.msra.mxu0 %v1689
      %2255 = vmatpush.msra.mxu0 %v1675
      %2256 = vmatpush.msra.mxu0 %v1661
      %2257 = vmatpush.msra.mxu0 %v1647
      %2258 = vmatpush.msra.mxu0 %v1633
      %2259 = vmatpush.msra.mxu0 %v1619
      %2260 = vmatpush.msra.mxu0 %v1605
      %2261 = vmatpush.msra.mxu0 %v1591
      %2262 = vmatpush.msra.mxu0 %v1577
      %2263 = vmatpush.msra.mxu0 %v1563
      %2264 = vmatpush.msra.mxu0 %v1549
      %2265 = vmatpush.msra.mxu0 %v1535
      %2266 = vmatpush.msra.mxu0 %v1521
      %2267 = vmatpush.msra.mxu0 %v1507
      %2268 = vmatpush.msra.mxu0 %v1493
      %2269 = vmatpush.msra.mxu0 %v1479
      %2270 = vmatmul.f32.gmra.mxu0 %v579
      %v2271 = vpop.f32.mrf.mxu0
      %v2272 = vadd.f32 %v2252, %v2271
      %2273 = vdwg.mxu0
      %2274 = vmatpush.msra.mxu0 %v1913
      %2275 = vmatpush.msra.mxu0 %v1899
      %2276 = vmatpush.msra.mxu0 %v1885
      %2277 = vmatpush.msra.mxu0 %v1871
      %2278 = vmatpush.msra.mxu0 %v1857
      %2279 = vmatpush.msra.mxu0 %v1843
      %2280 = vmatpush.msra.mxu0 %v1829
      %2281 = vmatpush.msra.mxu0 %v1815
      %2282 = vmatpush.msra.mxu0 %v1801
      %2283 = vmatpush.msra.mxu0 %v1787
      %2284 = vmatpush.msra.mxu0 %v1773
      %2285 = vmatpush.msra.mxu0 %v1759
      %2286 = vmatpush.msra.mxu0 %v1745
      %2287 = vmatpush.msra.mxu0 %v1731
      %2288 = vmatpush.msra.mxu0 %v1717
      %2289 = vmatpush.msra.mxu0 %v1703
      %2290 = vmatmul.f32.gmra.mxu0 %v580
      %v2291 = vpop.f32.mrf.mxu0
      %v2292 = vadd.f32 %v2272, %v2291
      %2293 = vdwg.mxu0
      %2294 = vmatpush.msra.mxu0 0.0
      %2295 = vmatpush.msra.mxu0 0.0
      %2296 = vmatpush.msra.mxu0 0.0
      %2297 = vmatpush.msra.mxu0 0.0
      %2298 = vmatpush.msra.mxu0 0.0
      %2299 = vmatpush.msra.mxu0 0.0
      %2300 = vmatpush.msra.mxu0 0.0
      %2301 = vmatpush.msra.mxu0 0.0
      %2302 = vmatpush.msra.mxu0 0.0
      %2303 = vmatpush.msra.mxu0 0.0
      %2304 = vmatpush.msra.mxu0 0.0
      %2305 = vmatpush.msra.mxu0 0.0
      %2306 = vmatpush.msra.mxu0 0.0
      %2307 = vmatpush.msra.mxu0 0.0
      %2308 = vmatpush.msra.mxu0 %v1996
      %2309 = vmatpush.msra.mxu0 %v1927
      %2310 = vmatmul.f32.gmra.mxu0 %v1989
      %v2311 = vpop.f32.mrf.mxu0
      %v2312 = vadd.f32 %v2292, %v2311
      %2313 = vdwg.mxu0
      %2314 = vmatpush.msra.mxu0 %v794
      %2315 = vmatpush.msra.mxu0 %v780
      %2316 = vmatpush.msra.mxu0 %v766
      %2317 = vmatpush.msra.mxu0 %v752
      %2318 = vmatpush.msra.mxu0 %v738
      %2319 = vmatpush.msra.mxu0 %v724
      %2320 = vmatpush.msra.mxu0 %v710
      %2321 = vmatpush.msra.mxu0 %v696
      %2322 = vmatpush.msra.mxu0 %v682
      %2323 = vmatpush.msra.mxu0 %v668
      %2324 = vmatpush.msra.mxu0 %v654
      %2325 = vmatpush.msra.mxu0 %v640
      %2326 = vmatpush.msra.mxu0 %v626
      %2327 = vmatpush.msra.mxu0 %v612
      %2328 = vmatpush.msra.mxu0 %v598
      %2329 = vmatpush.msra.mxu0 %v584
      %2330 = vmatmul.f32.gmra.mxu0 %v575
      %v2331 = vpop.f32.mrf.mxu0
      %v2332 = vadd.f32 %v1961, %v2331
      %2333 = vdwg.mxu0
      %2334 = vmatpush.msra.mxu0 %v1018
      %2335 = vmatpush.msra.mxu0 %v1004
      %2336 = vmatpush.msra.mxu0 %v990
      %2337 = vmatpush.msra.mxu0 %v976
      %2338 = vmatpush.msra.mxu0 %v962
      %2339 = vmatpush.msra.mxu0 %v948
      %2340 = vmatpush.msra.mxu0 %v934
      %2341 = vmatpush.msra.mxu0 %v920
      %2342 = vmatpush.msra.mxu0 %v906
      %2343 = vmatpush.msra.mxu0 %v892
      %2344 = vmatpush.msra.mxu0 %v878
      %2345 = vmatpush.msra.mxu0 %v864
      %2346 = vmatpush.msra.mxu0 %v850
      %2347 = vmatpush.msra.mxu0 %v836
      %2348 = vmatpush.msra.mxu0 %v822
      %2349 = vmatpush.msra.mxu0 %v808
      %2350 = vmatmul.f32.gmra.mxu0 %v576
      %v2351 = vpop.f32.mrf.mxu0
      %v2352 = vadd.f32 %v2332, %v2351
      %2353 = vdwg.mxu0
      %2354 = vmatpush.msra.mxu0 %v1242
      %2355 = vmatpush.msra.mxu0 %v1228
      %2356 = vmatpush.msra.mxu0 %v1214
      %2357 = vmatpush.msra.mxu0 %v1200
      %2358 = vmatpush.msra.mxu0 %v1186
      %2359 = vmatpush.msra.mxu0 %v1172
      %2360 = vmatpush.msra.mxu0 %v1158
      %2361 = vmatpush.msra.mxu0 %v1144
      %2362 = vmatpush.msra.mxu0 %v1130
      %2363 = vmatpush.msra.mxu0 %v1116
      %2364 = vmatpush.msra.mxu0 %v1102
      %2365 = vmatpush.msra.mxu0 %v1088
      %2366 = vmatpush.msra.mxu0 %v1074
      %2367 = vmatpush.msra.mxu0 %v1060
      %2368 = vmatpush.msra.mxu0 %v1046
      %2369 = vmatpush.msra.mxu0 %v1032
      %2370 = vmatmul.f32.gmra.mxu0 %v577
      %v2371 = vpop.f32.mrf.mxu0
      %v2372 = vadd.f32 %v2352, %v2371
      %2373 = vdwg.mxu0
      %2374 = vmatpush.msra.mxu0 %v1466
      %2375 = vmatpush.msra.mxu0 %v1452
      %2376 = vmatpush.msra.mxu0 %v1438
      %2377 = vmatpush.msra.mxu0 %v1424
      %2378 = vmatpush.msra.mxu0 %v1410
      %2379 = vmatpush.msra.mxu0 %v1396
      %2380 = vmatpush.msra.mxu0 %v1382
      %2381 = vmatpush.msra.mxu0 %v1368
      %2382 = vmatpush.msra.mxu0 %v1354
      %2383 = vmatpush.msra.mxu0 %v1340
      %2384 = vmatpush.msra.mxu0 %v1326
      %2385 = vmatpush.msra.mxu0 %v1312
      %2386 = vmatpush.msra.mxu0 %v1298
      %2387 = vmatpush.msra.mxu0 %v1284
      %2388 = vmatpush.msra.mxu0 %v1270
      %2389 = vmatpush.msra.mxu0 %v1256
      %2390 = vmatmul.f32.gmra.mxu0 %v578
      %v2391 = vpop.f32.mrf.mxu0
      %v2392 = vadd.f32 %v2372, %v2391
      %2393 = vdwg.mxu0
      %2394 = vmatpush.msra.mxu0 %v1690
      %2395 = vmatpush.msra.mxu0 %v1676
      %2396 = vmatpush.msra.mxu0 %v1662
      %2397 = vmatpush.msra.mxu0 %v1648
      %2398 = vmatpush.msra.mxu0 %v1634
      %2399 = vmatpush.msra.mxu0 %v1620
      %2400 = vmatpush.msra.mxu0 %v1606
      %2401 = vmatpush.msra.mxu0 %v1592
      %2402 = vmatpush.msra.mxu0 %v1578
      %2403 = vmatpush.msra.mxu0 %v1564
      %2404 = vmatpush.msra.mxu0 %v1550
      %2405 = vmatpush.msra.mxu0 %v1536
      %2406 = vmatpush.msra.mxu0 %v1522
      %2407 = vmatpush.msra.mxu0 %v1508
      %2408 = vmatpush.msra.mxu0 %v1494
      %2409 = vmatpush.msra.mxu0 %v1480
      %2410 = vmatmul.f32.gmra.mxu0 %v579
      %v2411 = vpop.f32.mrf.mxu0
      %v2412 = vadd.f32 %v2392, %v2411
      %2413 = vdwg.mxu0
      %2414 = vmatpush.msra.mxu0 %v1914
      %2415 = vmatpush.msra.mxu0 %v1900
      %2416 = vmatpush.msra.mxu0 %v1886
      %2417 = vmatpush.msra.mxu0 %v1872
      %2418 = vmatpush.msra.mxu0 %v1858
      %2419 = vmatpush.msra.mxu0 %v1844
      %2420 = vmatpush.msra.mxu0 %v1830
      %2421 = vmatpush.msra.mxu0 %v1816
      %2422 = vmatpush.msra.mxu0 %v1802
      %2423 = vmatpush.msra.mxu0 %v1788
      %2424 = vmatpush.msra.mxu0 %v1774
      %2425 = vmatpush.msra.mxu0 %v1760
      %2426 = vmatpush.msra.mxu0 %v1746
      %2427 = vmatpush.msra.mxu0 %v1732
      %2428 = vmatpush.msra.mxu0 %v1718
      %2429 = vmatpush.msra.mxu0 %v1704
      %2430 = vmatmul.f32.gmra.mxu0 %v580
      %v2431 = vpop.f32.mrf.mxu0
      %v2432 = vadd.f32 %v2412, %v2431
      %2433 = vdwg.mxu0
      %2434 = vmatpush.msra.mxu0 0.0
      %2435 = vmatpush.msra.mxu0 0.0
      %2436 = vmatpush.msra.mxu0 0.0
      %2437 = vmatpush.msra.mxu0 0.0
      %2438 = vmatpush.msra.mxu0 0.0
      %2439 = vmatpush.msra.mxu0 0.0
      %2440 = vmatpush.msra.mxu0 0.0
      %2441 = vmatpush.msra.mxu0 0.0
      %2442 = vmatpush.msra.mxu0 0.0
      %2443 = vmatpush.msra.mxu0 0.0
      %2444 = vmatpush.msra.mxu0 0.0
      %2445 = vmatpush.msra.mxu0 0.0
      %2446 = vmatpush.msra.mxu0 0.0
      %2447 = vmatpush.msra.mxu0 0.0
      %2448 = vmatpush.msra.mxu0 %v1999
      %2449 = vmatpush.msra.mxu0 %v1928
      %2450 = vmatmul.f32.gmra.mxu0 %v1989
      %v2451 = vpop.f32.mrf.mxu0
      %v2452 = vadd.f32 %v2432, %v2451
      %2453 = vdwg.mxu0
      %2454 = vmatpush.msra.mxu0 %v795
      %2455 = vmatpush.msra.mxu0 %v781
      %2456 = vmatpush.msra.mxu0 %v767
      %2457 = vmatpush.msra.mxu0 %v753
      %2458 = vmatpush.msra.mxu0 %v739
      %2459 = vmatpush.msra.mxu0 %v725
      %2460 = vmatpush.msra.mxu0 %v711
      %2461 = vmatpush.msra.mxu0 %v697
      %2462 = vmatpush.msra.mxu0 %v683
      %2463 = vmatpush.msra.mxu0 %v669
      %2464 = vmatpush.msra.mxu0 %v655
      %2465 = vmatpush.msra.mxu0 %v641
      %2466 = vmatpush.msra.mxu0 %v627
      %2467 = vmatpush.msra.mxu0 %v613
      %2468 = vmatpush.msra.mxu0 %v599
      %2469 = vmatpush.msra.mxu0 %v585
      %2470 = vmatmul.f32.gmra.mxu0 %v575
      %v2471 = vpop.f32.mrf.mxu0
      %v2472 = vadd.f32 %v1962, %v2471
      %2473 = vdwg.mxu0
      %2474 = vmatpush.msra.mxu0 %v1019
      %2475 = vmatpush.msra.mxu0 %v1005
      %2476 = vmatpush.msra.mxu0 %v991
      %2477 = vmatpush.msra.mxu0 %v977
      %2478 = vmatpush.msra.mxu0 %v963
      %2479 = vmatpush.msra.mxu0 %v949
      %2480 = vmatpush.msra.mxu0 %v935
      %2481 = vmatpush.msra.mxu0 %v921
      %2482 = vmatpush.msra.mxu0 %v907
      %2483 = vmatpush.msra.mxu0 %v893
      %2484 = vmatpush.msra.mxu0 %v879
      %2485 = vmatpush.msra.mxu0 %v865
      %2486 = vmatpush.msra.mxu0 %v851
      %2487 = vmatpush.msra.mxu0 %v837
      %2488 = vmatpush.msra.mxu0 %v823
      %2489 = vmatpush.msra.mxu0 %v809
      %2490 = vmatmul.f32.gmra.mxu0 %v576
      %v2491 = vpop.f32.mrf.mxu0
      %v2492 = vadd.f32 %v2472, %v2491
      %2493 = vdwg.mxu0
      %2494 = vmatpush.msra.mxu0 %v1243
      %2495 = vmatpush.msra.mxu0 %v1229
      %2496 = vmatpush.msra.mxu0 %v1215
      %2497 = vmatpush.msra.mxu0 %v1201
      %2498 = vmatpush.msra.mxu0 %v1187
      %2499 = vmatpush.msra.mxu0 %v1173
      %2500 = vmatpush.msra.mxu0 %v1159
      %2501 = vmatpush.msra.mxu0 %v1145
      %2502 = vmatpush.msra.mxu0 %v1131
      %2503 = vmatpush.msra.mxu0 %v1117
      %2504 = vmatpush.msra.mxu0 %v1103
      %2505 = vmatpush.msra.mxu0 %v1089
      %2506 = vmatpush.msra.mxu0 %v1075
      %2507 = vmatpush.msra.mxu0 %v1061
      %2508 = vmatpush.msra.mxu0 %v1047
      %2509 = vmatpush.msra.mxu0 %v1033
      %2510 = vmatmul.f32.gmra.mxu0 %v577
      %v2511 = vpop.f32.mrf.mxu0
      %v2512 = vadd.f32 %v2492, %v2511
      %2513 = vdwg.mxu0
      %2514 = vmatpush.msra.mxu0 %v1467
      %2515 = vmatpush.msra.mxu0 %v1453
      %2516 = vmatpush.msra.mxu0 %v1439
      %2517 = vmatpush.msra.mxu0 %v1425
      %2518 = vmatpush.msra.mxu0 %v1411
      %2519 = vmatpush.msra.mxu0 %v1397
      %2520 = vmatpush.msra.mxu0 %v1383
      %2521 = vmatpush.msra.mxu0 %v1369
      %2522 = vmatpush.msra.mxu0 %v1355
      %2523 = vmatpush.msra.mxu0 %v1341
      %2524 = vmatpush.msra.mxu0 %v1327
      %2525 = vmatpush.msra.mxu0 %v1313
      %2526 = vmatpush.msra.mxu0 %v1299
      %2527 = vmatpush.msra.mxu0 %v1285
      %2528 = vmatpush.msra.mxu0 %v1271
      %2529 = vmatpush.msra.mxu0 %v1257
      %2530 = vmatmul.f32.gmra.mxu0 %v578
      %v2531 = vpop.f32.mrf.mxu0
      %v2532 = vadd.f32 %v2512, %v2531
      %2533 = vdwg.mxu0
      %2534 = vmatpush.msra.mxu0 %v1691
      %2535 = vmatpush.msra.mxu0 %v1677
      %2536 = vmatpush.msra.mxu0 %v1663
      %2537 = vmatpush.msra.mxu0 %v1649
      %2538 = vmatpush.msra.mxu0 %v1635
      %2539 = vmatpush.msra.mxu0 %v1621
      %2540 = vmatpush.msra.mxu0 %v1607
      %2541 = vmatpush.msra.mxu0 %v1593
      %2542 = vmatpush.msra.mxu0 %v1579
      %2543 = vmatpush.msra.mxu0 %v1565
      %2544 = vmatpush.msra.mxu0 %v1551
      %2545 = vmatpush.msra.mxu0 %v1537
      %2546 = vmatpush.msra.mxu0 %v1523
      %2547 = vmatpush.msra.mxu0 %v1509
      %2548 = vmatpush.msra.mxu0 %v1495
      %2549 = vmatpush.msra.mxu0 %v1481
      %2550 = vmatmul.f32.gmra.mxu0 %v579
      %v2551 = vpop.f32.mrf.mxu0
      %v2552 = vadd.f32 %v2532, %v2551
      %2553 = vdwg.mxu0
      %2554 = vmatpush.msra.mxu0 %v1915
      %2555 = vmatpush.msra.mxu0 %v1901
      %2556 = vmatpush.msra.mxu0 %v1887
      %2557 = vmatpush.msra.mxu0 %v1873
      %2558 = vmatpush.msra.mxu0 %v1859
      %2559 = vmatpush.msra.mxu0 %v1845
      %2560 = vmatpush.msra.mxu0 %v1831
      %2561 = vmatpush.msra.mxu0 %v1817
      %2562 = vmatpush.msra.mxu0 %v1803
      %2563 = vmatpush.msra.mxu0 %v1789
      %2564 = vmatpush.msra.mxu0 %v1775
      %2565 = vmatpush.msra.mxu0 %v1761
      %2566 = vmatpush.msra.mxu0 %v1747
      %2567 = vmatpush.msra.mxu0 %v1733
      %2568 = vmatpush.msra.mxu0 %v1719
      %2569 = vmatpush.msra.mxu0 %v1705
      %2570 = vmatmul.f32.gmra.mxu0 %v580
      %v2571 = vpop.f32.mrf.mxu0
      %v2572 = vadd.f32 %v2552, %v2571
      %2573 = vdwg.mxu0
      %2574 = vmatpush.msra.mxu0 0.0
      %2575 = vmatpush.msra.mxu0 0.0
      %2576 = vmatpush.msra.mxu0 0.0
      %2577 = vmatpush.msra.mxu0 0.0
      %2578 = vmatpush.msra.mxu0 0.0
      %2579 = vmatpush.msra.mxu0 0.0
      %2580 = vmatpush.msra.mxu0 0.0
      %2581 = vmatpush.msra.mxu0 0.0
      %2582 = vmatpush.msra.mxu0 0.0
      %2583 = vmatpush.msra.mxu0 0.0
      %2584 = vmatpush.msra.mxu0 0.0
      %2585 = vmatpush.msra.mxu0 0.0
      %2586 = vmatpush.msra.mxu0 0.0
      %2587 = vmatpush.msra.mxu0 0.0
      %2588 = vmatpush.msra.mxu0 %v2002
      %2589 = vmatpush.msra.mxu0 %v1929
      %2590 = vmatmul.f32.gmra.mxu0 %v1989
      %v2591 = vpop.f32.mrf.mxu0
      %v2592 = vadd.f32 %v2572, %v2591
      %2593 = vdwg.mxu0
      %2594 = vmatpush.msra.mxu0 %v796
      %2595 = vmatpush.msra.mxu0 %v782
      %2596 = vmatpush.msra.mxu0 %v768
      %2597 = vmatpush.msra.mxu0 %v754
      %2598 = vmatpush.msra.mxu0 %v740
      %2599 = vmatpush.msra.mxu0 %v726
      %2600 = vmatpush.msra.mxu0 %v712
      %2601 = vmatpush.msra.mxu0 %v698
      %2602 = vmatpush.msra.mxu0 %v684
      %2603 = vmatpush.msra.mxu0 %v670
      %2604 = vmatpush.msra.mxu0 %v656
      %2605 = vmatpush.msra.mxu0 %v642
      %2606 = vmatpush.msra.mxu0 %v628
      %2607 = vmatpush.msra.mxu0 %v614
      %2608 = vmatpush.msra.mxu0 %v600
      %2609 = vmatpush.msra.mxu0 %v586
      %2610 = vmatmul.f32.gmra.mxu0 %v575
      %v2611 = vpop.f32.mrf.mxu0
      %v2612 = vadd.f32 %v1963, %v2611
      %2613 = vdwg.mxu0
      %2614 = vmatpush.msra.mxu0 %v1020
      %2615 = vmatpush.msra.mxu0 %v1006
      %2616 = vmatpush.msra.mxu0 %v992
      %2617 = vmatpush.msra.mxu0 %v978
      %2618 = vmatpush.msra.mxu0 %v964
      %2619 = vmatpush.msra.mxu0 %v950
      %2620 = vmatpush.msra.mxu0 %v936
      %2621 = vmatpush.msra.mxu0 %v922
      %2622 = vmatpush.msra.mxu0 %v908
      %2623 = vmatpush.msra.mxu0 %v894
      %2624 = vmatpush.msra.mxu0 %v880
      %2625 = vmatpush.msra.mxu0 %v866
      %2626 = vmatpush.msra.mxu0 %v852
      %2627 = vmatpush.msra.mxu0 %v838
      %2628 = vmatpush.msra.mxu0 %v824
      %2629 = vmatpush.msra.mxu0 %v810
      %2630 = vmatmul.f32.gmra.mxu0 %v576
      %v2631 = vpop.f32.mrf.mxu0
      %v2632 = vadd.f32 %v2612, %v2631
      %2633 = vdwg.mxu0
      %2634 = vmatpush.msra.mxu0 %v1244
      %2635 = vmatpush.msra.mxu0 %v1230
      %2636 = vmatpush.msra.mxu0 %v1216
      %2637 = vmatpush.msra.mxu0 %v1202
      %2638 = vmatpush.msra.mxu0 %v1188
      %2639 = vmatpush.msra.mxu0 %v1174
      %2640 = vmatpush.msra.mxu0 %v1160
      %2641 = vmatpush.msra.mxu0 %v1146
      %2642 = vmatpush.msra.mxu0 %v1132
      %2643 = vmatpush.msra.mxu0 %v1118
      %2644 = vmatpush.msra.mxu0 %v1104
      %2645 = vmatpush.msra.mxu0 %v1090
      %2646 = vmatpush.msra.mxu0 %v1076
      %2647 = vmatpush.msra.mxu0 %v1062
      %2648 = vmatpush.msra.mxu0 %v1048
      %2649 = vmatpush.msra.mxu0 %v1034
      %2650 = vmatmul.f32.gmra.mxu0 %v577
      %v2651 = vpop.f32.mrf.mxu0
      %v2652 = vadd.f32 %v2632, %v2651
      %2653 = vdwg.mxu0
      %2654 = vmatpush.msra.mxu0 %v1468
      %2655 = vmatpush.msra.mxu0 %v1454
      %2656 = vmatpush.msra.mxu0 %v1440
      %2657 = vmatpush.msra.mxu0 %v1426
      %2658 = vmatpush.msra.mxu0 %v1412
      %2659 = vmatpush.msra.mxu0 %v1398
      %2660 = vmatpush.msra.mxu0 %v1384
      %2661 = vmatpush.msra.mxu0 %v1370
      %2662 = vmatpush.msra.mxu0 %v1356
      %2663 = vmatpush.msra.mxu0 %v1342
      %2664 = vmatpush.msra.mxu0 %v1328
      %2665 = vmatpush.msra.mxu0 %v1314
      %2666 = vmatpush.msra.mxu0 %v1300
      %2667 = vmatpush.msra.mxu0 %v1286
      %2668 = vmatpush.msra.mxu0 %v1272
      %2669 = vmatpush.msra.mxu0 %v1258
      %2670 = vmatmul.f32.gmra.mxu0 %v578
      %v2671 = vpop.f32.mrf.mxu0
      %v2672 = vadd.f32 %v2652, %v2671
      %2673 = vdwg.mxu0
      %2674 = vmatpush.msra.mxu0 %v1692
      %2675 = vmatpush.msra.mxu0 %v1678
      %2676 = vmatpush.msra.mxu0 %v1664
      %2677 = vmatpush.msra.mxu0 %v1650
      %2678 = vmatpush.msra.mxu0 %v1636
      %2679 = vmatpush.msra.mxu0 %v1622
      %2680 = vmatpush.msra.mxu0 %v1608
      %2681 = vmatpush.msra.mxu0 %v1594
      %2682 = vmatpush.msra.mxu0 %v1580
      %2683 = vmatpush.msra.mxu0 %v1566
      %2684 = vmatpush.msra.mxu0 %v1552
      %2685 = vmatpush.msra.mxu0 %v1538
      %2686 = vmatpush.msra.mxu0 %v1524
      %2687 = vmatpush.msra.mxu0 %v1510
      %2688 = vmatpush.msra.mxu0 %v1496
      %2689 = vmatpush.msra.mxu0 %v1482
      %2690 = vmatmul.f32.gmra.mxu0 %v579
      %v2691 = vpop.f32.mrf.mxu0
      %v2692 = vadd.f32 %v2672, %v2691
      %2693 = vdwg.mxu0
      %2694 = vmatpush.msra.mxu0 %v1916
      %2695 = vmatpush.msra.mxu0 %v1902
      %2696 = vmatpush.msra.mxu0 %v1888
      %2697 = vmatpush.msra.mxu0 %v1874
      %2698 = vmatpush.msra.mxu0 %v1860
      %2699 = vmatpush.msra.mxu0 %v1846
      %2700 = vmatpush.msra.mxu0 %v1832
      %2701 = vmatpush.msra.mxu0 %v1818
      %2702 = vmatpush.msra.mxu0 %v1804
      %2703 = vmatpush.msra.mxu0 %v1790
      %2704 = vmatpush.msra.mxu0 %v1776
      %2705 = vmatpush.msra.mxu0 %v1762
      %2706 = vmatpush.msra.mxu0 %v1748
      %2707 = vmatpush.msra.mxu0 %v1734
      %2708 = vmatpush.msra.mxu0 %v1720
      %2709 = vmatpush.msra.mxu0 %v1706
      %2710 = vmatmul.f32.gmra.mxu0 %v580
      %v2711 = vpop.f32.mrf.mxu0
      %v2712 = vadd.f32 %v2692, %v2711
      %2713 = vdwg.mxu0
      %2714 = vmatpush.msra.mxu0 0.0
      %2715 = vmatpush.msra.mxu0 0.0
      %2716 = vmatpush.msra.mxu0 0.0
      %2717 = vmatpush.msra.mxu0 0.0
      %2718 = vmatpush.msra.mxu0 0.0
      %2719 = vmatpush.msra.mxu0 0.0
      %2720 = vmatpush.msra.mxu0 0.0
      %2721 = vmatpush.msra.mxu0 0.0
      %2722 = vmatpush.msra.mxu0 0.0
      %2723 = vmatpush.msra.mxu0 0.0
      %2724 = vmatpush.msra.mxu0 0.0
      %2725 = vmatpush.msra.mxu0 0.0
      %2726 = vmatpush.msra.mxu0 0.0
      %2727 = vmatpush.msra.mxu0 0.0
      %2728 = vmatpush.msra.mxu0 %v2005
      %2729 = vmatpush.msra.mxu0 %v1930
      %2730 = vmatmul.f32.gmra.mxu0 %v1989
      %v2731 = vpop.f32.mrf.mxu0
      %v2732 = vadd.f32 %v2712, %v2731
      %2733 = vdwg.mxu0
      %2734 = vmatpush.msra.mxu0 %v797
      %2735 = vmatpush.msra.mxu0 %v783
      %2736 = vmatpush.msra.mxu0 %v769
      %2737 = vmatpush.msra.mxu0 %v755
      %2738 = vmatpush.msra.mxu0 %v741
      %2739 = vmatpush.msra.mxu0 %v727
      %2740 = vmatpush.msra.mxu0 %v713
      %2741 = vmatpush.msra.mxu0 %v699
      %2742 = vmatpush.msra.mxu0 %v685
      %2743 = vmatpush.msra.mxu0 %v671
      %2744 = vmatpush.msra.mxu0 %v657
      %2745 = vmatpush.msra.mxu0 %v643
      %2746 = vmatpush.msra.mxu0 %v629
      %2747 = vmatpush.msra.mxu0 %v615
      %2748 = vmatpush.msra.mxu0 %v601
      %2749 = vmatpush.msra.mxu0 %v587
      %2750 = vmatmul.f32.gmra.mxu0 %v575
      %v2751 = vpop.f32.mrf.mxu0
      %v2752 = vadd.f32 %v1964, %v2751
      %2753 = vdwg.mxu0
      %2754 = vmatpush.msra.mxu0 %v1021
      %2755 = vmatpush.msra.mxu0 %v1007
      %2756 = vmatpush.msra.mxu0 %v993
      %2757 = vmatpush.msra.mxu0 %v979
      %2758 = vmatpush.msra.mxu0 %v965
      %2759 = vmatpush.msra.mxu0 %v951
      %2760 = vmatpush.msra.mxu0 %v937
      %2761 = vmatpush.msra.mxu0 %v923
      %2762 = vmatpush.msra.mxu0 %v909
      %2763 = vmatpush.msra.mxu0 %v895
      %2764 = vmatpush.msra.mxu0 %v881
      %2765 = vmatpush.msra.mxu0 %v867
      %2766 = vmatpush.msra.mxu0 %v853
      %2767 = vmatpush.msra.mxu0 %v839
      %2768 = vmatpush.msra.mxu0 %v825
      %2769 = vmatpush.msra.mxu0 %v811
      %2770 = vmatmul.f32.gmra.mxu0 %v576
      %v2771 = vpop.f32.mrf.mxu0
      %v2772 = vadd.f32 %v2752, %v2771
      %2773 = vdwg.mxu0
      %2774 = vmatpush.msra.mxu0 %v1245
      %2775 = vmatpush.msra.mxu0 %v1231
      %2776 = vmatpush.msra.mxu0 %v1217
      %2777 = vmatpush.msra.mxu0 %v1203
      %2778 = vmatpush.msra.mxu0 %v1189
      %2779 = vmatpush.msra.mxu0 %v1175
      %2780 = vmatpush.msra.mxu0 %v1161
      %2781 = vmatpush.msra.mxu0 %v1147
      %2782 = vmatpush.msra.mxu0 %v1133
      %2783 = vmatpush.msra.mxu0 %v1119
      %2784 = vmatpush.msra.mxu0 %v1105
      %2785 = vmatpush.msra.mxu0 %v1091
      %2786 = vmatpush.msra.mxu0 %v1077
      %2787 = vmatpush.msra.mxu0 %v1063
      %2788 = vmatpush.msra.mxu0 %v1049
      %2789 = vmatpush.msra.mxu0 %v1035
      %2790 = vmatmul.f32.gmra.mxu0 %v577
      %v2791 = vpop.f32.mrf.mxu0
      %v2792 = vadd.f32 %v2772, %v2791
      %2793 = vdwg.mxu0
      %2794 = vmatpush.msra.mxu0 %v1469
      %2795 = vmatpush.msra.mxu0 %v1455
      %2796 = vmatpush.msra.mxu0 %v1441
      %2797 = vmatpush.msra.mxu0 %v1427
      %2798 = vmatpush.msra.mxu0 %v1413
      %2799 = vmatpush.msra.mxu0 %v1399
      %2800 = vmatpush.msra.mxu0 %v1385
      %2801 = vmatpush.msra.mxu0 %v1371
      %2802 = vmatpush.msra.mxu0 %v1357
      %2803 = vmatpush.msra.mxu0 %v1343
      %2804 = vmatpush.msra.mxu0 %v1329
      %2805 = vmatpush.msra.mxu0 %v1315
      %2806 = vmatpush.msra.mxu0 %v1301
      %2807 = vmatpush.msra.mxu0 %v1287
      %2808 = vmatpush.msra.mxu0 %v1273
      %2809 = vmatpush.msra.mxu0 %v1259
      %2810 = vmatmul.f32.gmra.mxu0 %v578
      %v2811 = vpop.f32.mrf.mxu0
      %v2812 = vadd.f32 %v2792, %v2811
      %2813 = vdwg.mxu0
      %2814 = vmatpush.msra.mxu0 %v1693
      %2815 = vmatpush.msra.mxu0 %v1679
      %2816 = vmatpush.msra.mxu0 %v1665
      %2817 = vmatpush.msra.mxu0 %v1651
      %2818 = vmatpush.msra.mxu0 %v1637
      %2819 = vmatpush.msra.mxu0 %v1623
      %2820 = vmatpush.msra.mxu0 %v1609
      %2821 = vmatpush.msra.mxu0 %v1595
      %2822 = vmatpush.msra.mxu0 %v1581
      %2823 = vmatpush.msra.mxu0 %v1567
      %2824 = vmatpush.msra.mxu0 %v1553
      %2825 = vmatpush.msra.mxu0 %v1539
      %2826 = vmatpush.msra.mxu0 %v1525
      %2827 = vmatpush.msra.mxu0 %v1511
      %2828 = vmatpush.msra.mxu0 %v1497
      %2829 = vmatpush.msra.mxu0 %v1483
      %2830 = vmatmul.f32.gmra.mxu0 %v579
      %v2831 = vpop.f32.mrf.mxu0
      %v2832 = vadd.f32 %v2812, %v2831
      %2833 = vdwg.mxu0
      %2834 = vmatpush.msra.mxu0 %v1917
      %2835 = vmatpush.msra.mxu0 %v1903
      %2836 = vmatpush.msra.mxu0 %v1889
      %2837 = vmatpush.msra.mxu0 %v1875
      %2838 = vmatpush.msra.mxu0 %v1861
      %2839 = vmatpush.msra.mxu0 %v1847
      %2840 = vmatpush.msra.mxu0 %v1833
      %2841 = vmatpush.msra.mxu0 %v1819
      %2842 = vmatpush.msra.mxu0 %v1805
      %2843 = vmatpush.msra.mxu0 %v1791
      %2844 = vmatpush.msra.mxu0 %v1777
      %2845 = vmatpush.msra.mxu0 %v1763
      %2846 = vmatpush.msra.mxu0 %v1749
      %2847 = vmatpush.msra.mxu0 %v1735
      %2848 = vmatpush.msra.mxu0 %v1721
      %2849 = vmatpush.msra.mxu0 %v1707
      %2850 = vmatmul.f32.gmra.mxu0 %v580
      %v2851 = vpop.f32.mrf.mxu0
      %v2852 = vadd.f32 %v2832, %v2851
      %2853 = vdwg.mxu0
      %2854 = vmatpush.msra.mxu0 0.0
      %2855 = vmatpush.msra.mxu0 0.0
      %2856 = vmatpush.msra.mxu0 0.0
      %2857 = vmatpush.msra.mxu0 0.0
      %2858 = vmatpush.msra.mxu0 0.0
      %2859 = vmatpush.msra.mxu0 0.0
      %2860 = vmatpush.msra.mxu0 0.0
      %2861 = vmatpush.msra.mxu0 0.0
      %2862 = vmatpush.msra.mxu0 0.0
      %2863 = vmatpush.msra.mxu0 0.0
      %2864 = vmatpush.msra.mxu0 0.0
      %2865 = vmatpush.msra.mxu0 0.0
      %2866 = vmatpush.msra.mxu0 0.0
      %2867 = vmatpush.msra.mxu0 0.0
      %2868 = vmatpush.msra.mxu0 %v2008
      %2869 = vmatpush.msra.mxu0 %v1931
      %2870 = vmatmul.f32.gmra.mxu0 %v1989
      %v2871 = vpop.f32.mrf.mxu0
      %v2872 = vadd.f32 %v2852, %v2871
      %2873 = vdwg.mxu0
      %2874 = vmatpush.msra.mxu0 %v798
      %2875 = vmatpush.msra.mxu0 %v784
      %2876 = vmatpush.msra.mxu0 %v770
      %2877 = vmatpush.msra.mxu0 %v756
      %2878 = vmatpush.msra.mxu0 %v742
      %2879 = vmatpush.msra.mxu0 %v728
      %2880 = vmatpush.msra.mxu0 %v714
      %2881 = vmatpush.msra.mxu0 %v700
      %2882 = vmatpush.msra.mxu0 %v686
      %2883 = vmatpush.msra.mxu0 %v672
      %2884 = vmatpush.msra.mxu0 %v658
      %2885 = vmatpush.msra.mxu0 %v644
      %2886 = vmatpush.msra.mxu0 %v630
      %2887 = vmatpush.msra.mxu0 %v616
      %2888 = vmatpush.msra.mxu0 %v602
      %2889 = vmatpush.msra.mxu0 %v588
      %2890 = vmatmul.f32.gmra.mxu0 %v575
      %v2891 = vpop.f32.mrf.mxu0
      %v2892 = vadd.f32 %v1965, %v2891
      %2893 = vdwg.mxu0
      %2894 = vmatpush.msra.mxu0 %v1022
      %2895 = vmatpush.msra.mxu0 %v1008
      %2896 = vmatpush.msra.mxu0 %v994
      %2897 = vmatpush.msra.mxu0 %v980
      %2898 = vmatpush.msra.mxu0 %v966
      %2899 = vmatpush.msra.mxu0 %v952
      %2900 = vmatpush.msra.mxu0 %v938
      %2901 = vmatpush.msra.mxu0 %v924
      %2902 = vmatpush.msra.mxu0 %v910
      %2903 = vmatpush.msra.mxu0 %v896
      %2904 = vmatpush.msra.mxu0 %v882
      %2905 = vmatpush.msra.mxu0 %v868
      %2906 = vmatpush.msra.mxu0 %v854
      %2907 = vmatpush.msra.mxu0 %v840
      %2908 = vmatpush.msra.mxu0 %v826
      %2909 = vmatpush.msra.mxu0 %v812
      %2910 = vmatmul.f32.gmra.mxu0 %v576
      %v2911 = vpop.f32.mrf.mxu0
      %v2912 = vadd.f32 %v2892, %v2911
      %2913 = vdwg.mxu0
      %2914 = vmatpush.msra.mxu0 %v1246
      %2915 = vmatpush.msra.mxu0 %v1232
      %2916 = vmatpush.msra.mxu0 %v1218
      %2917 = vmatpush.msra.mxu0 %v1204
      %2918 = vmatpush.msra.mxu0 %v1190
      %2919 = vmatpush.msra.mxu0 %v1176
      %2920 = vmatpush.msra.mxu0 %v1162
      %2921 = vmatpush.msra.mxu0 %v1148
      %2922 = vmatpush.msra.mxu0 %v1134
      %2923 = vmatpush.msra.mxu0 %v1120
      %2924 = vmatpush.msra.mxu0 %v1106
      %2925 = vmatpush.msra.mxu0 %v1092
      %2926 = vmatpush.msra.mxu0 %v1078
      %2927 = vmatpush.msra.mxu0 %v1064
      %2928 = vmatpush.msra.mxu0 %v1050
      %2929 = vmatpush.msra.mxu0 %v1036
      %2930 = vmatmul.f32.gmra.mxu0 %v577
      %v2931 = vpop.f32.mrf.mxu0
      %v2932 = vadd.f32 %v2912, %v2931
      %2933 = vdwg.mxu0
      %2934 = vmatpush.msra.mxu0 %v1470
      %2935 = vmatpush.msra.mxu0 %v1456
      %2936 = vmatpush.msra.mxu0 %v1442
      %2937 = vmatpush.msra.mxu0 %v1428
      %2938 = vmatpush.msra.mxu0 %v1414
      %2939 = vmatpush.msra.mxu0 %v1400
      %2940 = vmatpush.msra.mxu0 %v1386
      %2941 = vmatpush.msra.mxu0 %v1372
      %2942 = vmatpush.msra.mxu0 %v1358
      %2943 = vmatpush.msra.mxu0 %v1344
      %2944 = vmatpush.msra.mxu0 %v1330
      %2945 = vmatpush.msra.mxu0 %v1316
      %2946 = vmatpush.msra.mxu0 %v1302
      %2947 = vmatpush.msra.mxu0 %v1288
      %2948 = vmatpush.msra.mxu0 %v1274
      %2949 = vmatpush.msra.mxu0 %v1260
      %2950 = vmatmul.f32.gmra.mxu0 %v578
      %v2951 = vpop.f32.mrf.mxu0
      %v2952 = vadd.f32 %v2932, %v2951
      %2953 = vdwg.mxu0
      %2954 = vmatpush.msra.mxu0 %v1694
      %2955 = vmatpush.msra.mxu0 %v1680
      %2956 = vmatpush.msra.mxu0 %v1666
      %2957 = vmatpush.msra.mxu0 %v1652
      %2958 = vmatpush.msra.mxu0 %v1638
      %2959 = vmatpush.msra.mxu0 %v1624
      %2960 = vmatpush.msra.mxu0 %v1610
      %2961 = vmatpush.msra.mxu0 %v1596
      %2962 = vmatpush.msra.mxu0 %v1582
      %2963 = vmatpush.msra.mxu0 %v1568
      %2964 = vmatpush.msra.mxu0 %v1554
      %2965 = vmatpush.msra.mxu0 %v1540
      %2966 = vmatpush.msra.mxu0 %v1526
      %2967 = vmatpush.msra.mxu0 %v1512
      %2968 = vmatpush.msra.mxu0 %v1498
      %2969 = vmatpush.msra.mxu0 %v1484
      %2970 = vmatmul.f32.gmra.mxu0 %v579
      %v2971 = vpop.f32.mrf.mxu0
      %v2972 = vadd.f32 %v2952, %v2971
      %2973 = vdwg.mxu0
      %2974 = vmatpush.msra.mxu0 %v1918
      %2975 = vmatpush.msra.mxu0 %v1904
      %2976 = vmatpush.msra.mxu0 %v1890
      %2977 = vmatpush.msra.mxu0 %v1876
      %2978 = vmatpush.msra.mxu0 %v1862
      %2979 = vmatpush.msra.mxu0 %v1848
      %2980 = vmatpush.msra.mxu0 %v1834
      %2981 = vmatpush.msra.mxu0 %v1820
      %2982 = vmatpush.msra.mxu0 %v1806
      %2983 = vmatpush.msra.mxu0 %v1792
      %2984 = vmatpush.msra.mxu0 %v1778
      %2985 = vmatpush.msra.mxu0 %v1764
      %2986 = vmatpush.msra.mxu0 %v1750
      %2987 = vmatpush.msra.mxu0 %v1736
      %2988 = vmatpush.msra.mxu0 %v1722
      %2989 = vmatpush.msra.mxu0 %v1708
      %2990 = vmatmul.f32.gmra.mxu0 %v580
      %v2991 = vpop.f32.mrf.mxu0
      %v2992 = vadd.f32 %v2972, %v2991
      %2993 = vdwg.mxu0
      %2994 = vmatpush.msra.mxu0 0.0
      %2995 = vmatpush.msra.mxu0 0.0
      %2996 = vmatpush.msra.mxu0 0.0
      %2997 = vmatpush.msra.mxu0 0.0
      %2998 = vmatpush.msra.mxu0 0.0
      %2999 = vmatpush.msra.mxu0 0.0
      %3000 = vmatpush.msra.mxu0 0.0
      %3001 = vmatpush.msra.mxu0 0.0
      %3002 = vmatpush.msra.mxu0 0.0
      %3003 = vmatpush.msra.mxu0 0.0
      %3004 = vmatpush.msra.mxu0 0.0
      %3005 = vmatpush.msra.mxu0 0.0
      %3006 = vmatpush.msra.mxu0 0.0
      %3007 = vmatpush.msra.mxu0 0.0
      %3008 = vmatpush.msra.mxu0 %v2011
      %3009 = vmatpush.msra.mxu0 %v1932
      %3010 = vmatmul.f32.gmra.mxu0 %v1989
      %v3011 = vpop.f32.mrf.mxu0
      %v3012 = vadd.f32 %v2992, %v3011
      %3013 = vdwg.mxu0
      %3014 = vmatpush.msra.mxu0 %v799
      %3015 = vmatpush.msra.mxu0 %v785
      %3016 = vmatpush.msra.mxu0 %v771
      %3017 = vmatpush.msra.mxu0 %v757
      %3018 = vmatpush.msra.mxu0 %v743
      %3019 = vmatpush.msra.mxu0 %v729
      %3020 = vmatpush.msra.mxu0 %v715
      %3021 = vmatpush.msra.mxu0 %v701
      %3022 = vmatpush.msra.mxu0 %v687
      %3023 = vmatpush.msra.mxu0 %v673
      %3024 = vmatpush.msra.mxu0 %v659
      %3025 = vmatpush.msra.mxu0 %v645
      %3026 = vmatpush.msra.mxu0 %v631
      %3027 = vmatpush.msra.mxu0 %v617
      %3028 = vmatpush.msra.mxu0 %v603
      %3029 = vmatpush.msra.mxu0 %v589
      %3030 = vmatmul.f32.gmra.mxu0 %v575
      %v3031 = vpop.f32.mrf.mxu0
      %v3032 = vadd.f32 %v1966, %v3031
      %3033 = vdwg.mxu0
      %3034 = vmatpush.msra.mxu0 %v1023
      %3035 = vmatpush.msra.mxu0 %v1009
      %3036 = vmatpush.msra.mxu0 %v995
      %3037 = vmatpush.msra.mxu0 %v981
      %3038 = vmatpush.msra.mxu0 %v967
      %3039 = vmatpush.msra.mxu0 %v953
      %3040 = vmatpush.msra.mxu0 %v939
      %3041 = vmatpush.msra.mxu0 %v925
      %3042 = vmatpush.msra.mxu0 %v911
      %3043 = vmatpush.msra.mxu0 %v897
      %3044 = vmatpush.msra.mxu0 %v883
      %3045 = vmatpush.msra.mxu0 %v869
      %3046 = vmatpush.msra.mxu0 %v855
      %3047 = vmatpush.msra.mxu0 %v841
      %3048 = vmatpush.msra.mxu0 %v827
      %3049 = vmatpush.msra.mxu0 %v813
      %3050 = vmatmul.f32.gmra.mxu0 %v576
      %v3051 = vpop.f32.mrf.mxu0
      %v3052 = vadd.f32 %v3032, %v3051
      %3053 = vdwg.mxu0
      %3054 = vmatpush.msra.mxu0 %v1247
      %3055 = vmatpush.msra.mxu0 %v1233
      %3056 = vmatpush.msra.mxu0 %v1219
      %3057 = vmatpush.msra.mxu0 %v1205
      %3058 = vmatpush.msra.mxu0 %v1191
      %3059 = vmatpush.msra.mxu0 %v1177
      %3060 = vmatpush.msra.mxu0 %v1163
      %3061 = vmatpush.msra.mxu0 %v1149
      %3062 = vmatpush.msra.mxu0 %v1135
      %3063 = vmatpush.msra.mxu0 %v1121
      %3064 = vmatpush.msra.mxu0 %v1107
      %3065 = vmatpush.msra.mxu0 %v1093
      %3066 = vmatpush.msra.mxu0 %v1079
      %3067 = vmatpush.msra.mxu0 %v1065
      %3068 = vmatpush.msra.mxu0 %v1051
      %3069 = vmatpush.msra.mxu0 %v1037
      %3070 = vmatmul.f32.gmra.mxu0 %v577
      %v3071 = vpop.f32.mrf.mxu0
      %v3072 = vadd.f32 %v3052, %v3071
      %3073 = vdwg.mxu0
      %3074 = vmatpush.msra.mxu0 %v1471
      %3075 = vmatpush.msra.mxu0 %v1457
      %3076 = vmatpush.msra.mxu0 %v1443
      %3077 = vmatpush.msra.mxu0 %v1429
      %3078 = vmatpush.msra.mxu0 %v1415
      %3079 = vmatpush.msra.mxu0 %v1401
      %3080 = vmatpush.msra.mxu0 %v1387
      %3081 = vmatpush.msra.mxu0 %v1373
      %3082 = vmatpush.msra.mxu0 %v1359
      %3083 = vmatpush.msra.mxu0 %v1345
      %3084 = vmatpush.msra.mxu0 %v1331
      %3085 = vmatpush.msra.mxu0 %v1317
      %3086 = vmatpush.msra.mxu0 %v1303
      %3087 = vmatpush.msra.mxu0 %v1289
      %3088 = vmatpush.msra.mxu0 %v1275
      %3089 = vmatpush.msra.mxu0 %v1261
      %3090 = vmatmul.f32.gmra.mxu0 %v578
      %v3091 = vpop.f32.mrf.mxu0
      %v3092 = vadd.f32 %v3072, %v3091
      %3093 = vdwg.mxu0
      %3094 = vmatpush.msra.mxu0 %v1695
      %3095 = vmatpush.msra.mxu0 %v1681
      %3096 = vmatpush.msra.mxu0 %v1667
      %3097 = vmatpush.msra.mxu0 %v1653
      %3098 = vmatpush.msra.mxu0 %v1639
      %3099 = vmatpush.msra.mxu0 %v1625
      %3100 = vmatpush.msra.mxu0 %v1611
      %3101 = vmatpush.msra.mxu0 %v1597
      %3102 = vmatpush.msra.mxu0 %v1583
      %3103 = vmatpush.msra.mxu0 %v1569
      %3104 = vmatpush.msra.mxu0 %v1555
      %3105 = vmatpush.msra.mxu0 %v1541
      %3106 = vmatpush.msra.mxu0 %v1527
      %3107 = vmatpush.msra.mxu0 %v1513
      %3108 = vmatpush.msra.mxu0 %v1499
      %3109 = vmatpush.msra.mxu0 %v1485
      %3110 = vmatmul.f32.gmra.mxu0 %v579
      %v3111 = vpop.f32.mrf.mxu0
      %v3112 = vadd.f32 %v3092, %v3111
      %3113 = vdwg.mxu0
      %3114 = vmatpush.msra.mxu0 %v1919
      %3115 = vmatpush.msra.mxu0 %v1905
      %3116 = vmatpush.msra.mxu0 %v1891
      %3117 = vmatpush.msra.mxu0 %v1877
      %3118 = vmatpush.msra.mxu0 %v1863
      %3119 = vmatpush.msra.mxu0 %v1849
      %3120 = vmatpush.msra.mxu0 %v1835
      %3121 = vmatpush.msra.mxu0 %v1821
      %3122 = vmatpush.msra.mxu0 %v1807
      %3123 = vmatpush.msra.mxu0 %v1793
      %3124 = vmatpush.msra.mxu0 %v1779
      %3125 = vmatpush.msra.mxu0 %v1765
      %3126 = vmatpush.msra.mxu0 %v1751
      %3127 = vmatpush.msra.mxu0 %v1737
      %3128 = vmatpush.msra.mxu0 %v1723
      %3129 = vmatpush.msra.mxu0 %v1709
      %3130 = vmatmul.f32.gmra.mxu0 %v580
      %v3131 = vpop.f32.mrf.mxu0
      %v3132 = vadd.f32 %v3112, %v3131
      %3133 = vdwg.mxu0
      %3134 = vmatpush.msra.mxu0 0.0
      %3135 = vmatpush.msra.mxu0 0.0
      %3136 = vmatpush.msra.mxu0 0.0
      %3137 = vmatpush.msra.mxu0 0.0
      %3138 = vmatpush.msra.mxu0 0.0
      %3139 = vmatpush.msra.mxu0 0.0
      %3140 = vmatpush.msra.mxu0 0.0
      %3141 = vmatpush.msra.mxu0 0.0
      %3142 = vmatpush.msra.mxu0 0.0
      %3143 = vmatpush.msra.mxu0 0.0
      %3144 = vmatpush.msra.mxu0 0.0
      %3145 = vmatpush.msra.mxu0 0.0
      %3146 = vmatpush.msra.mxu0 0.0
      %3147 = vmatpush.msra.mxu0 0.0
      %3148 = vmatpush.msra.mxu0 %v2014
      %3149 = vmatpush.msra.mxu0 %v1933
      %3150 = vmatmul.f32.gmra.mxu0 %v1989
      %v3151 = vpop.f32.mrf.mxu0
      %v3152 = vadd.f32 %v3132, %v3151
      %3153 = vdwg.mxu0
      %3154 = vmatpush.msra.mxu0 %v800
      %3155 = vmatpush.msra.mxu0 %v786
      %3156 = vmatpush.msra.mxu0 %v772
      %3157 = vmatpush.msra.mxu0 %v758
      %3158 = vmatpush.msra.mxu0 %v744
      %3159 = vmatpush.msra.mxu0 %v730
      %3160 = vmatpush.msra.mxu0 %v716
      %3161 = vmatpush.msra.mxu0 %v702
      %3162 = vmatpush.msra.mxu0 %v688
      %3163 = vmatpush.msra.mxu0 %v674
      %3164 = vmatpush.msra.mxu0 %v660
      %3165 = vmatpush.msra.mxu0 %v646
      %3166 = vmatpush.msra.mxu0 %v632
      %3167 = vmatpush.msra.mxu0 %v618
      %3168 = vmatpush.msra.mxu0 %v604
      %3169 = vmatpush.msra.mxu0 %v590
      %3170 = vmatmul.f32.gmra.mxu0 %v575
      %v3171 = vpop.f32.mrf.mxu0
      %v3172 = vadd.f32 %v1967, %v3171
      %3173 = vdwg.mxu0
      %3174 = vmatpush.msra.mxu0 %v1024
      %3175 = vmatpush.msra.mxu0 %v1010
      %3176 = vmatpush.msra.mxu0 %v996
      %3177 = vmatpush.msra.mxu0 %v982
      %3178 = vmatpush.msra.mxu0 %v968
      %3179 = vmatpush.msra.mxu0 %v954
      %3180 = vmatpush.msra.mxu0 %v940
      %3181 = vmatpush.msra.mxu0 %v926
      %3182 = vmatpush.msra.mxu0 %v912
      %3183 = vmatpush.msra.mxu0 %v898
      %3184 = vmatpush.msra.mxu0 %v884
      %3185 = vmatpush.msra.mxu0 %v870
      %3186 = vmatpush.msra.mxu0 %v856
      %3187 = vmatpush.msra.mxu0 %v842
      %3188 = vmatpush.msra.mxu0 %v828
      %3189 = vmatpush.msra.mxu0 %v814
      %3190 = vmatmul.f32.gmra.mxu0 %v576
      %v3191 = vpop.f32.mrf.mxu0
      %v3192 = vadd.f32 %v3172, %v3191
      %3193 = vdwg.mxu0
      %3194 = vmatpush.msra.mxu0 %v1248
      %3195 = vmatpush.msra.mxu0 %v1234
      %3196 = vmatpush.msra.mxu0 %v1220
      %3197 = vmatpush.msra.mxu0 %v1206
      %3198 = vmatpush.msra.mxu0 %v1192
      %3199 = vmatpush.msra.mxu0 %v1178
      %3200 = vmatpush.msra.mxu0 %v1164
      %3201 = vmatpush.msra.mxu0 %v1150
      %3202 = vmatpush.msra.mxu0 %v1136
      %3203 = vmatpush.msra.mxu0 %v1122
      %3204 = vmatpush.msra.mxu0 %v1108
      %3205 = vmatpush.msra.mxu0 %v1094
      %3206 = vmatpush.msra.mxu0 %v1080
      %3207 = vmatpush.msra.mxu0 %v1066
      %3208 = vmatpush.msra.mxu0 %v1052
      %3209 = vmatpush.msra.mxu0 %v1038
      %3210 = vmatmul.f32.gmra.mxu0 %v577
      %v3211 = vpop.f32.mrf.mxu0
      %v3212 = vadd.f32 %v3192, %v3211
      %3213 = vdwg.mxu0
      %3214 = vmatpush.msra.mxu0 %v1472
      %3215 = vmatpush.msra.mxu0 %v1458
      %3216 = vmatpush.msra.mxu0 %v1444
      %3217 = vmatpush.msra.mxu0 %v1430
      %3218 = vmatpush.msra.mxu0 %v1416
      %3219 = vmatpush.msra.mxu0 %v1402
      %3220 = vmatpush.msra.mxu0 %v1388
      %3221 = vmatpush.msra.mxu0 %v1374
      %3222 = vmatpush.msra.mxu0 %v1360
      %3223 = vmatpush.msra.mxu0 %v1346
      %3224 = vmatpush.msra.mxu0 %v1332
      %3225 = vmatpush.msra.mxu0 %v1318
      %3226 = vmatpush.msra.mxu0 %v1304
      %3227 = vmatpush.msra.mxu0 %v1290
      %3228 = vmatpush.msra.mxu0 %v1276
      %3229 = vmatpush.msra.mxu0 %v1262
      %3230 = vmatmul.f32.gmra.mxu0 %v578
      %v3231 = vpop.f32.mrf.mxu0
      %v3232 = vadd.f32 %v3212, %v3231
      %3233 = vdwg.mxu0
      %3234 = vmatpush.msra.mxu0 %v1696
      %3235 = vmatpush.msra.mxu0 %v1682
      %3236 = vmatpush.msra.mxu0 %v1668
      %3237 = vmatpush.msra.mxu0 %v1654
      %3238 = vmatpush.msra.mxu0 %v1640
      %3239 = vmatpush.msra.mxu0 %v1626
      %3240 = vmatpush.msra.mxu0 %v1612
      %3241 = vmatpush.msra.mxu0 %v1598
      %3242 = vmatpush.msra.mxu0 %v1584
      %3243 = vmatpush.msra.mxu0 %v1570
      %3244 = vmatpush.msra.mxu0 %v1556
      %3245 = vmatpush.msra.mxu0 %v1542
      %3246 = vmatpush.msra.mxu0 %v1528
      %3247 = vmatpush.msra.mxu0 %v1514
      %3248 = vmatpush.msra.mxu0 %v1500
      %3249 = vmatpush.msra.mxu0 %v1486
      %3250 = vmatmul.f32.gmra.mxu0 %v579
      %v3251 = vpop.f32.mrf.mxu0
      %v3252 = vadd.f32 %v3232, %v3251
      %3253 = vdwg.mxu0
      %3254 = vmatpush.msra.mxu0 %v1920
      %3255 = vmatpush.msra.mxu0 %v1906
      %3256 = vmatpush.msra.mxu0 %v1892
      %3257 = vmatpush.msra.mxu0 %v1878
      %3258 = vmatpush.msra.mxu0 %v1864
      %3259 = vmatpush.msra.mxu0 %v1850
      %3260 = vmatpush.msra.mxu0 %v1836
      %3261 = vmatpush.msra.mxu0 %v1822
      %3262 = vmatpush.msra.mxu0 %v1808
      %3263 = vmatpush.msra.mxu0 %v1794
      %3264 = vmatpush.msra.mxu0 %v1780
      %3265 = vmatpush.msra.mxu0 %v1766
      %3266 = vmatpush.msra.mxu0 %v1752
      %3267 = vmatpush.msra.mxu0 %v1738
      %3268 = vmatpush.msra.mxu0 %v1724
      %3269 = vmatpush.msra.mxu0 %v1710
      %3270 = vmatmul.f32.gmra.mxu0 %v580
      %v3271 = vpop.f32.mrf.mxu0
      %v3272 = vadd.f32 %v3252, %v3271
      %3273 = vdwg.mxu0
      %3274 = vmatpush.msra.mxu0 0.0
      %3275 = vmatpush.msra.mxu0 0.0
      %3276 = vmatpush.msra.mxu0 0.0
      %3277 = vmatpush.msra.mxu0 0.0
      %3278 = vmatpush.msra.mxu0 0.0
      %3279 = vmatpush.msra.mxu0 0.0
      %3280 = vmatpush.msra.mxu0 0.0
      %3281 = vmatpush.msra.mxu0 0.0
      %3282 = vmatpush.msra.mxu0 0.0
      %3283 = vmatpush.msra.mxu0 0.0
      %3284 = vmatpush.msra.mxu0 0.0
      %3285 = vmatpush.msra.mxu0 0.0
      %3286 = vmatpush.msra.mxu0 0.0
      %3287 = vmatpush.msra.mxu0 0.0
      %3288 = vmatpush.msra.mxu0 %v2017
      %3289 = vmatpush.msra.mxu0 %v1934
      %3290 = vmatmul.f32.gmra.mxu0 %v1989
      %v3291 = vpop.f32.mrf.mxu0
      %v3292 = vadd.f32 %v3272, %v3291
      %3293 = vdwg.mxu0
      %3294 = vmatpush.msra.mxu0 %v801
      %3295 = vmatpush.msra.mxu0 %v787
      %3296 = vmatpush.msra.mxu0 %v773
      %3297 = vmatpush.msra.mxu0 %v759
      %3298 = vmatpush.msra.mxu0 %v745
      %3299 = vmatpush.msra.mxu0 %v731
      %3300 = vmatpush.msra.mxu0 %v717
      %3301 = vmatpush.msra.mxu0 %v703
      %3302 = vmatpush.msra.mxu0 %v689
      %3303 = vmatpush.msra.mxu0 %v675
      %3304 = vmatpush.msra.mxu0 %v661
      %3305 = vmatpush.msra.mxu0 %v647
      %3306 = vmatpush.msra.mxu0 %v633
      %3307 = vmatpush.msra.mxu0 %v619
      %3308 = vmatpush.msra.mxu0 %v605
      %3309 = vmatpush.msra.mxu0 %v591
      %3310 = vmatmul.f32.gmra.mxu0 %v575
      %v3311 = vpop.f32.mrf.mxu0
      %v3312 = vadd.f32 %v1968, %v3311
      %3313 = vdwg.mxu0
      %3314 = vmatpush.msra.mxu0 %v1025
      %3315 = vmatpush.msra.mxu0 %v1011
      %3316 = vmatpush.msra.mxu0 %v997
      %3317 = vmatpush.msra.mxu0 %v983
      %3318 = vmatpush.msra.mxu0 %v969
      %3319 = vmatpush.msra.mxu0 %v955
      %3320 = vmatpush.msra.mxu0 %v941
      %3321 = vmatpush.msra.mxu0 %v927
      %3322 = vmatpush.msra.mxu0 %v913
      %3323 = vmatpush.msra.mxu0 %v899
      %3324 = vmatpush.msra.mxu0 %v885
      %3325 = vmatpush.msra.mxu0 %v871
      %3326 = vmatpush.msra.mxu0 %v857
      %3327 = vmatpush.msra.mxu0 %v843
      %3328 = vmatpush.msra.mxu0 %v829
      %3329 = vmatpush.msra.mxu0 %v815
      %3330 = vmatmul.f32.gmra.mxu0 %v576
      %v3331 = vpop.f32.mrf.mxu0
      %v3332 = vadd.f32 %v3312, %v3331
      %3333 = vdwg.mxu0
      %3334 = vmatpush.msra.mxu0 %v1249
      %3335 = vmatpush.msra.mxu0 %v1235
      %3336 = vmatpush.msra.mxu0 %v1221
      %3337 = vmatpush.msra.mxu0 %v1207
      %3338 = vmatpush.msra.mxu0 %v1193
      %3339 = vmatpush.msra.mxu0 %v1179
      %3340 = vmatpush.msra.mxu0 %v1165
      %3341 = vmatpush.msra.mxu0 %v1151
      %3342 = vmatpush.msra.mxu0 %v1137
      %3343 = vmatpush.msra.mxu0 %v1123
      %3344 = vmatpush.msra.mxu0 %v1109
      %3345 = vmatpush.msra.mxu0 %v1095
      %3346 = vmatpush.msra.mxu0 %v1081
      %3347 = vmatpush.msra.mxu0 %v1067
      %3348 = vmatpush.msra.mxu0 %v1053
      %3349 = vmatpush.msra.mxu0 %v1039
      %3350 = vmatmul.f32.gmra.mxu0 %v577
      %v3351 = vpop.f32.mrf.mxu0
      %v3352 = vadd.f32 %v3332, %v3351
      %3353 = vdwg.mxu0
      %3354 = vmatpush.msra.mxu0 %v1473
      %3355 = vmatpush.msra.mxu0 %v1459
      %3356 = vmatpush.msra.mxu0 %v1445
      %3357 = vmatpush.msra.mxu0 %v1431
      %3358 = vmatpush.msra.mxu0 %v1417
      %3359 = vmatpush.msra.mxu0 %v1403
      %3360 = vmatpush.msra.mxu0 %v1389
      %3361 = vmatpush.msra.mxu0 %v1375
      %3362 = vmatpush.msra.mxu0 %v1361
      %3363 = vmatpush.msra.mxu0 %v1347
      %3364 = vmatpush.msra.mxu0 %v1333
      %3365 = vmatpush.msra.mxu0 %v1319
      %3366 = vmatpush.msra.mxu0 %v1305
      %3367 = vmatpush.msra.mxu0 %v1291
      %3368 = vmatpush.msra.mxu0 %v1277
      %3369 = vmatpush.msra.mxu0 %v1263
      %3370 = vmatmul.f32.gmra.mxu0 %v578
      %v3371 = vpop.f32.mrf.mxu0
      %v3372 = vadd.f32 %v3352, %v3371
      %3373 = vdwg.mxu0
      %3374 = vmatpush.msra.mxu0 %v1697
      %3375 = vmatpush.msra.mxu0 %v1683
      %3376 = vmatpush.msra.mxu0 %v1669
      %3377 = vmatpush.msra.mxu0 %v1655
      %3378 = vmatpush.msra.mxu0 %v1641
      %3379 = vmatpush.msra.mxu0 %v1627
      %3380 = vmatpush.msra.mxu0 %v1613
      %3381 = vmatpush.msra.mxu0 %v1599
      %3382 = vmatpush.msra.mxu0 %v1585
      %3383 = vmatpush.msra.mxu0 %v1571
      %3384 = vmatpush.msra.mxu0 %v1557
      %3385 = vmatpush.msra.mxu0 %v1543
      %3386 = vmatpush.msra.mxu0 %v1529
      %3387 = vmatpush.msra.mxu0 %v1515
      %3388 = vmatpush.msra.mxu0 %v1501
      %3389 = vmatpush.msra.mxu0 %v1487
      %3390 = vmatmul.f32.gmra.mxu0 %v579
      %v3391 = vpop.f32.mrf.mxu0
      %v3392 = vadd.f32 %v3372, %v3391
      %3393 = vdwg.mxu0
      %3394 = vmatpush.msra.mxu0 %v1921
      %3395 = vmatpush.msra.mxu0 %v1907
      %3396 = vmatpush.msra.mxu0 %v1893
      %3397 = vmatpush.msra.mxu0 %v1879
      %3398 = vmatpush.msra.mxu0 %v1865
      %3399 = vmatpush.msra.mxu0 %v1851
      %3400 = vmatpush.msra.mxu0 %v1837
      %3401 = vmatpush.msra.mxu0 %v1823
      %3402 = vmatpush.msra.mxu0 %v1809
      %3403 = vmatpush.msra.mxu0 %v1795
      %3404 = vmatpush.msra.mxu0 %v1781
      %3405 = vmatpush.msra.mxu0 %v1767
      %3406 = vmatpush.msra.mxu0 %v1753
      %3407 = vmatpush.msra.mxu0 %v1739
      %3408 = vmatpush.msra.mxu0 %v1725
      %3409 = vmatpush.msra.mxu0 %v1711
      %3410 = vmatmul.f32.gmra.mxu0 %v580
      %v3411 = vpop.f32.mrf.mxu0
      %v3412 = vadd.f32 %v3392, %v3411
      %3413 = vdwg.mxu0
      %3414 = vmatpush.msra.mxu0 0.0
      %3415 = vmatpush.msra.mxu0 0.0
      %3416 = vmatpush.msra.mxu0 0.0
      %3417 = vmatpush.msra.mxu0 0.0
      %3418 = vmatpush.msra.mxu0 0.0
      %3419 = vmatpush.msra.mxu0 0.0
      %3420 = vmatpush.msra.mxu0 0.0
      %3421 = vmatpush.msra.mxu0 0.0
      %3422 = vmatpush.msra.mxu0 0.0
      %3423 = vmatpush.msra.mxu0 0.0
      %3424 = vmatpush.msra.mxu0 0.0
      %3425 = vmatpush.msra.mxu0 0.0
      %3426 = vmatpush.msra.mxu0 0.0
      %3427 = vmatpush.msra.mxu0 0.0
      %3428 = vmatpush.msra.mxu0 %v2020
      %3429 = vmatpush.msra.mxu0 %v1935
      %3430 = vmatmul.f32.gmra.mxu0 %v1989
      %v3431 = vpop.f32.mrf.mxu0
      %v3432 = vadd.f32 %v3412, %v3431
      %3433 = vdwg.mxu0
      %3434 = vmatpush.msra.mxu0 %v802
      %3435 = vmatpush.msra.mxu0 %v788
      %3436 = vmatpush.msra.mxu0 %v774
      %3437 = vmatpush.msra.mxu0 %v760
      %3438 = vmatpush.msra.mxu0 %v746
      %3439 = vmatpush.msra.mxu0 %v732
      %3440 = vmatpush.msra.mxu0 %v718
      %3441 = vmatpush.msra.mxu0 %v704
      %3442 = vmatpush.msra.mxu0 %v690
      %3443 = vmatpush.msra.mxu0 %v676
      %3444 = vmatpush.msra.mxu0 %v662
      %3445 = vmatpush.msra.mxu0 %v648
      %3446 = vmatpush.msra.mxu0 %v634
      %3447 = vmatpush.msra.mxu0 %v620
      %3448 = vmatpush.msra.mxu0 %v606
      %3449 = vmatpush.msra.mxu0 %v592
      %3450 = vmatmul.f32.gmra.mxu0 %v575
      %v3451 = vpop.f32.mrf.mxu0
      %v3452 = vadd.f32 %v1969, %v3451
      %3453 = vdwg.mxu0
      %3454 = vmatpush.msra.mxu0 %v1026
      %3455 = vmatpush.msra.mxu0 %v1012
      %3456 = vmatpush.msra.mxu0 %v998
      %3457 = vmatpush.msra.mxu0 %v984
      %3458 = vmatpush.msra.mxu0 %v970
      %3459 = vmatpush.msra.mxu0 %v956
      %3460 = vmatpush.msra.mxu0 %v942
      %3461 = vmatpush.msra.mxu0 %v928
      %3462 = vmatpush.msra.mxu0 %v914
      %3463 = vmatpush.msra.mxu0 %v900
      %3464 = vmatpush.msra.mxu0 %v886
      %3465 = vmatpush.msra.mxu0 %v872
      %3466 = vmatpush.msra.mxu0 %v858
      %3467 = vmatpush.msra.mxu0 %v844
      %3468 = vmatpush.msra.mxu0 %v830
      %3469 = vmatpush.msra.mxu0 %v816
      %3470 = vmatmul.f32.gmra.mxu0 %v576
      %v3471 = vpop.f32.mrf.mxu0
      %v3472 = vadd.f32 %v3452, %v3471
      %3473 = vdwg.mxu0
      %3474 = vmatpush.msra.mxu0 %v1250
      %3475 = vmatpush.msra.mxu0 %v1236
      %3476 = vmatpush.msra.mxu0 %v1222
      %3477 = vmatpush.msra.mxu0 %v1208
      %3478 = vmatpush.msra.mxu0 %v1194
      %3479 = vmatpush.msra.mxu0 %v1180
      %3480 = vmatpush.msra.mxu0 %v1166
      %3481 = vmatpush.msra.mxu0 %v1152
      %3482 = vmatpush.msra.mxu0 %v1138
      %3483 = vmatpush.msra.mxu0 %v1124
      %3484 = vmatpush.msra.mxu0 %v1110
      %3485 = vmatpush.msra.mxu0 %v1096
      %3486 = vmatpush.msra.mxu0 %v1082
      %3487 = vmatpush.msra.mxu0 %v1068
      %3488 = vmatpush.msra.mxu0 %v1054
      %3489 = vmatpush.msra.mxu0 %v1040
      %3490 = vmatmul.f32.gmra.mxu0 %v577
      %v3491 = vpop.f32.mrf.mxu0
      %v3492 = vadd.f32 %v3472, %v3491
      %3493 = vdwg.mxu0
      %3494 = vmatpush.msra.mxu0 %v1474
      %3495 = vmatpush.msra.mxu0 %v1460
      %3496 = vmatpush.msra.mxu0 %v1446
      %3497 = vmatpush.msra.mxu0 %v1432
      %3498 = vmatpush.msra.mxu0 %v1418
      %3499 = vmatpush.msra.mxu0 %v1404
      %3500 = vmatpush.msra.mxu0 %v1390
      %3501 = vmatpush.msra.mxu0 %v1376
      %3502 = vmatpush.msra.mxu0 %v1362
      %3503 = vmatpush.msra.mxu0 %v1348
      %3504 = vmatpush.msra.mxu0 %v1334
      %3505 = vmatpush.msra.mxu0 %v1320
      %3506 = vmatpush.msra.mxu0 %v1306
      %3507 = vmatpush.msra.mxu0 %v1292
      %3508 = vmatpush.msra.mxu0 %v1278
      %3509 = vmatpush.msra.mxu0 %v1264
      %3510 = vmatmul.f32.gmra.mxu0 %v578
      %v3511 = vpop.f32.mrf.mxu0
      %v3512 = vadd.f32 %v3492, %v3511
      %3513 = vdwg.mxu0
      %3514 = vmatpush.msra.mxu0 %v1698
      %3515 = vmatpush.msra.mxu0 %v1684
      %3516 = vmatpush.msra.mxu0 %v1670
      %3517 = vmatpush.msra.mxu0 %v1656
      %3518 = vmatpush.msra.mxu0 %v1642
      %3519 = vmatpush.msra.mxu0 %v1628
      %3520 = vmatpush.msra.mxu0 %v1614
      %3521 = vmatpush.msra.mxu0 %v1600
      %3522 = vmatpush.msra.mxu0 %v1586
      %3523 = vmatpush.msra.mxu0 %v1572
      %3524 = vmatpush.msra.mxu0 %v1558
      %3525 = vmatpush.msra.mxu0 %v1544
      %3526 = vmatpush.msra.mxu0 %v1530
      %3527 = vmatpush.msra.mxu0 %v1516
      %3528 = vmatpush.msra.mxu0 %v1502
      %3529 = vmatpush.msra.mxu0 %v1488
      %3530 = vmatmul.f32.gmra.mxu0 %v579
      %v3531 = vpop.f32.mrf.mxu0
      %v3532 = vadd.f32 %v3512, %v3531
      %3533 = vdwg.mxu0
      %3534 = vmatpush.msra.mxu0 %v1922
      %3535 = vmatpush.msra.mxu0 %v1908
      %3536 = vmatpush.msra.mxu0 %v1894
      %3537 = vmatpush.msra.mxu0 %v1880
      %3538 = vmatpush.msra.mxu0 %v1866
      %3539 = vmatpush.msra.mxu0 %v1852
      %3540 = vmatpush.msra.mxu0 %v1838
      %3541 = vmatpush.msra.mxu0 %v1824
      %3542 = vmatpush.msra.mxu0 %v1810
      %3543 = vmatpush.msra.mxu0 %v1796
      %3544 = vmatpush.msra.mxu0 %v1782
      %3545 = vmatpush.msra.mxu0 %v1768
      %3546 = vmatpush.msra.mxu0 %v1754
      %3547 = vmatpush.msra.mxu0 %v1740
      %3548 = vmatpush.msra.mxu0 %v1726
      %3549 = vmatpush.msra.mxu0 %v1712
      %3550 = vmatmul.f32.gmra.mxu0 %v580
      %v3551 = vpop.f32.mrf.mxu0
      %v3552 = vadd.f32 %v3532, %v3551
      %3553 = vdwg.mxu0
      %3554 = vmatpush.msra.mxu0 0.0
      %3555 = vmatpush.msra.mxu0 0.0
      %3556 = vmatpush.msra.mxu0 0.0
      %3557 = vmatpush.msra.mxu0 0.0
      %3558 = vmatpush.msra.mxu0 0.0
      %3559 = vmatpush.msra.mxu0 0.0
      %3560 = vmatpush.msra.mxu0 0.0
      %3561 = vmatpush.msra.mxu0 0.0
      %3562 = vmatpush.msra.mxu0 0.0
      %3563 = vmatpush.msra.mxu0 0.0
      %3564 = vmatpush.msra.mxu0 0.0
      %3565 = vmatpush.msra.mxu0 0.0
      %3566 = vmatpush.msra.mxu0 0.0
      %3567 = vmatpush.msra.mxu0 0.0
      %3568 = vmatpush.msra.mxu0 %v2023
      %3569 = vmatpush.msra.mxu0 %v1936
      %3570 = vmatmul.f32.gmra.mxu0 %v1989
      %v3571 = vpop.f32.mrf.mxu0
      %v3572 = vadd.f32 %v3552, %v3571
      %3573 = vdwg.mxu0
      %3574 = vmatpush.msra.mxu0 %v803
      %3575 = vmatpush.msra.mxu0 %v789
      %3576 = vmatpush.msra.mxu0 %v775
      %3577 = vmatpush.msra.mxu0 %v761
      %3578 = vmatpush.msra.mxu0 %v747
      %3579 = vmatpush.msra.mxu0 %v733
      %3580 = vmatpush.msra.mxu0 %v719
      %3581 = vmatpush.msra.mxu0 %v705
      %3582 = vmatpush.msra.mxu0 %v691
      %3583 = vmatpush.msra.mxu0 %v677
      %3584 = vmatpush.msra.mxu0 %v663
      %3585 = vmatpush.msra.mxu0 %v649
      %3586 = vmatpush.msra.mxu0 %v635
      %3587 = vmatpush.msra.mxu0 %v621
      %3588 = vmatpush.msra.mxu0 %v607
      %3589 = vmatpush.msra.mxu0 %v593
      %3590 = vmatmul.f32.gmra.mxu0 %v575
      %v3591 = vpop.f32.mrf.mxu0
      %v3592 = vadd.f32 %v1970, %v3591
      %3593 = vdwg.mxu0
      %3594 = vmatpush.msra.mxu0 %v1027
      %3595 = vmatpush.msra.mxu0 %v1013
      %3596 = vmatpush.msra.mxu0 %v999
      %3597 = vmatpush.msra.mxu0 %v985
      %3598 = vmatpush.msra.mxu0 %v971
      %3599 = vmatpush.msra.mxu0 %v957
      %3600 = vmatpush.msra.mxu0 %v943
      %3601 = vmatpush.msra.mxu0 %v929
      %3602 = vmatpush.msra.mxu0 %v915
      %3603 = vmatpush.msra.mxu0 %v901
      %3604 = vmatpush.msra.mxu0 %v887
      %3605 = vmatpush.msra.mxu0 %v873
      %3606 = vmatpush.msra.mxu0 %v859
      %3607 = vmatpush.msra.mxu0 %v845
      %3608 = vmatpush.msra.mxu0 %v831
      %3609 = vmatpush.msra.mxu0 %v817
      %3610 = vmatmul.f32.gmra.mxu0 %v576
      %v3611 = vpop.f32.mrf.mxu0
      %v3612 = vadd.f32 %v3592, %v3611
      %3613 = vdwg.mxu0
      %3614 = vmatpush.msra.mxu0 %v1251
      %3615 = vmatpush.msra.mxu0 %v1237
      %3616 = vmatpush.msra.mxu0 %v1223
      %3617 = vmatpush.msra.mxu0 %v1209
      %3618 = vmatpush.msra.mxu0 %v1195
      %3619 = vmatpush.msra.mxu0 %v1181
      %3620 = vmatpush.msra.mxu0 %v1167
      %3621 = vmatpush.msra.mxu0 %v1153
      %3622 = vmatpush.msra.mxu0 %v1139
      %3623 = vmatpush.msra.mxu0 %v1125
      %3624 = vmatpush.msra.mxu0 %v1111
      %3625 = vmatpush.msra.mxu0 %v1097
      %3626 = vmatpush.msra.mxu0 %v1083
      %3627 = vmatpush.msra.mxu0 %v1069
      %3628 = vmatpush.msra.mxu0 %v1055
      %3629 = vmatpush.msra.mxu0 %v1041
      %3630 = vmatmul.f32.gmra.mxu0 %v577
      %v3631 = vpop.f32.mrf.mxu0
      %v3632 = vadd.f32 %v3612, %v3631
      %3633 = vdwg.mxu0
      %3634 = vmatpush.msra.mxu0 %v1475
      %3635 = vmatpush.msra.mxu0 %v1461
      %3636 = vmatpush.msra.mxu0 %v1447
      %3637 = vmatpush.msra.mxu0 %v1433
      %3638 = vmatpush.msra.mxu0 %v1419
      %3639 = vmatpush.msra.mxu0 %v1405
      %3640 = vmatpush.msra.mxu0 %v1391
      %3641 = vmatpush.msra.mxu0 %v1377
      %3642 = vmatpush.msra.mxu0 %v1363
      %3643 = vmatpush.msra.mxu0 %v1349
      %3644 = vmatpush.msra.mxu0 %v1335
      %3645 = vmatpush.msra.mxu0 %v1321
      %3646 = vmatpush.msra.mxu0 %v1307
      %3647 = vmatpush.msra.mxu0 %v1293
      %3648 = vmatpush.msra.mxu0 %v1279
      %3649 = vmatpush.msra.mxu0 %v1265
      %3650 = vmatmul.f32.gmra.mxu0 %v578
      %v3651 = vpop.f32.mrf.mxu0
      %v3652 = vadd.f32 %v3632, %v3651
      %3653 = vdwg.mxu0
      %3654 = vmatpush.msra.mxu0 %v1699
      %3655 = vmatpush.msra.mxu0 %v1685
      %3656 = vmatpush.msra.mxu0 %v1671
      %3657 = vmatpush.msra.mxu0 %v1657
      %3658 = vmatpush.msra.mxu0 %v1643
      %3659 = vmatpush.msra.mxu0 %v1629
      %3660 = vmatpush.msra.mxu0 %v1615
      %3661 = vmatpush.msra.mxu0 %v1601
      %3662 = vmatpush.msra.mxu0 %v1587
      %3663 = vmatpush.msra.mxu0 %v1573
      %3664 = vmatpush.msra.mxu0 %v1559
      %3665 = vmatpush.msra.mxu0 %v1545
      %3666 = vmatpush.msra.mxu0 %v1531
      %3667 = vmatpush.msra.mxu0 %v1517
      %3668 = vmatpush.msra.mxu0 %v1503
      %3669 = vmatpush.msra.mxu0 %v1489
      %3670 = vmatmul.f32.gmra.mxu0 %v579
      %v3671 = vpop.f32.mrf.mxu0
      %v3672 = vadd.f32 %v3652, %v3671
      %3673 = vdwg.mxu0
      %3674 = vmatpush.msra.mxu0 %v1923
      %3675 = vmatpush.msra.mxu0 %v1909
      %3676 = vmatpush.msra.mxu0 %v1895
      %3677 = vmatpush.msra.mxu0 %v1881
      %3678 = vmatpush.msra.mxu0 %v1867
      %3679 = vmatpush.msra.mxu0 %v1853
      %3680 = vmatpush.msra.mxu0 %v1839
      %3681 = vmatpush.msra.mxu0 %v1825
      %3682 = vmatpush.msra.mxu0 %v1811
      %3683 = vmatpush.msra.mxu0 %v1797
      %3684 = vmatpush.msra.mxu0 %v1783
      %3685 = vmatpush.msra.mxu0 %v1769
      %3686 = vmatpush.msra.mxu0 %v1755
      %3687 = vmatpush.msra.mxu0 %v1741
      %3688 = vmatpush.msra.mxu0 %v1727
      %3689 = vmatpush.msra.mxu0 %v1713
      %3690 = vmatmul.f32.gmra.mxu0 %v580
      %v3691 = vpop.f32.mrf.mxu0
      %v3692 = vadd.f32 %v3672, %v3691
      %3693 = vdwg.mxu0
      %3694 = vmatpush.msra.mxu0 0.0
      %3695 = vmatpush.msra.mxu0 0.0
      %3696 = vmatpush.msra.mxu0 0.0
      %3697 = vmatpush.msra.mxu0 0.0
      %3698 = vmatpush.msra.mxu0 0.0
      %3699 = vmatpush.msra.mxu0 0.0
      %3700 = vmatpush.msra.mxu0 0.0
      %3701 = vmatpush.msra.mxu0 0.0
      %3702 = vmatpush.msra.mxu0 0.0
      %3703 = vmatpush.msra.mxu0 0.0
      %3704 = vmatpush.msra.mxu0 0.0
      %3705 = vmatpush.msra.mxu0 0.0
      %3706 = vmatpush.msra.mxu0 0.0
      %3707 = vmatpush.msra.mxu0 0.0
      %3708 = vmatpush.msra.mxu0 %v2026
      %3709 = vmatpush.msra.mxu0 %v1937
      %3710 = vmatmul.f32.gmra.mxu0 %v1989
      %v3711 = vpop.f32.mrf.mxu0
      %v3712 = vadd.f32 %v3692, %v3711
      %3713 = vdwg.mxu0
      %3714 = vmatpush.msra.mxu0 %v804
      %3715 = vmatpush.msra.mxu0 %v790
      %3716 = vmatpush.msra.mxu0 %v776
      %3717 = vmatpush.msra.mxu0 %v762
      %3718 = vmatpush.msra.mxu0 %v748
      %3719 = vmatpush.msra.mxu0 %v734
      %3720 = vmatpush.msra.mxu0 %v720
      %3721 = vmatpush.msra.mxu0 %v706
      %3722 = vmatpush.msra.mxu0 %v692
      %3723 = vmatpush.msra.mxu0 %v678
      %3724 = vmatpush.msra.mxu0 %v664
      %3725 = vmatpush.msra.mxu0 %v650
      %3726 = vmatpush.msra.mxu0 %v636
      %3727 = vmatpush.msra.mxu0 %v622
      %3728 = vmatpush.msra.mxu0 %v608
      %3729 = vmatpush.msra.mxu0 %v594
      %3730 = vmatmul.f32.gmra.mxu0 %v575
      %v3731 = vpop.f32.mrf.mxu0
      %v3732 = vadd.f32 %v1971, %v3731
      %3733 = vdwg.mxu0
      %3734 = vmatpush.msra.mxu0 %v1028
      %3735 = vmatpush.msra.mxu0 %v1014
      %3736 = vmatpush.msra.mxu0 %v1000
      %3737 = vmatpush.msra.mxu0 %v986
      %3738 = vmatpush.msra.mxu0 %v972
      %3739 = vmatpush.msra.mxu0 %v958
      %3740 = vmatpush.msra.mxu0 %v944
      %3741 = vmatpush.msra.mxu0 %v930
      %3742 = vmatpush.msra.mxu0 %v916
      %3743 = vmatpush.msra.mxu0 %v902
      %3744 = vmatpush.msra.mxu0 %v888
      %3745 = vmatpush.msra.mxu0 %v874
      %3746 = vmatpush.msra.mxu0 %v860
      %3747 = vmatpush.msra.mxu0 %v846
      %3748 = vmatpush.msra.mxu0 %v832
      %3749 = vmatpush.msra.mxu0 %v818
      %3750 = vmatmul.f32.gmra.mxu0 %v576
      %v3751 = vpop.f32.mrf.mxu0
      %v3752 = vadd.f32 %v3732, %v3751
      %3753 = vdwg.mxu0
      %3754 = vmatpush.msra.mxu0 %v1252
      %3755 = vmatpush.msra.mxu0 %v1238
      %3756 = vmatpush.msra.mxu0 %v1224
      %3757 = vmatpush.msra.mxu0 %v1210
      %3758 = vmatpush.msra.mxu0 %v1196
      %3759 = vmatpush.msra.mxu0 %v1182
      %3760 = vmatpush.msra.mxu0 %v1168
      %3761 = vmatpush.msra.mxu0 %v1154
      %3762 = vmatpush.msra.mxu0 %v1140
      %3763 = vmatpush.msra.mxu0 %v1126
      %3764 = vmatpush.msra.mxu0 %v1112
      %3765 = vmatpush.msra.mxu0 %v1098
      %3766 = vmatpush.msra.mxu0 %v1084
      %3767 = vmatpush.msra.mxu0 %v1070
      %3768 = vmatpush.msra.mxu0 %v1056
      %3769 = vmatpush.msra.mxu0 %v1042
      %3770 = vmatmul.f32.gmra.mxu0 %v577
      %v3771 = vpop.f32.mrf.mxu0
      %v3772 = vadd.f32 %v3752, %v3771
      %3773 = vdwg.mxu0
      %3774 = vmatpush.msra.mxu0 %v1476
      %3775 = vmatpush.msra.mxu0 %v1462
      %3776 = vmatpush.msra.mxu0 %v1448
      %3777 = vmatpush.msra.mxu0 %v1434
      %3778 = vmatpush.msra.mxu0 %v1420
      %3779 = vmatpush.msra.mxu0 %v1406
      %3780 = vmatpush.msra.mxu0 %v1392
      %3781 = vmatpush.msra.mxu0 %v1378
      %3782 = vmatpush.msra.mxu0 %v1364
      %3783 = vmatpush.msra.mxu0 %v1350
      %3784 = vmatpush.msra.mxu0 %v1336
      %3785 = vmatpush.msra.mxu0 %v1322
      %3786 = vmatpush.msra.mxu0 %v1308
      %3787 = vmatpush.msra.mxu0 %v1294
      %3788 = vmatpush.msra.mxu0 %v1280
      %3789 = vmatpush.msra.mxu0 %v1266
      %3790 = vmatmul.f32.gmra.mxu0 %v578
      %v3791 = vpop.f32.mrf.mxu0
      %v3792 = vadd.f32 %v3772, %v3791
      %3793 = vdwg.mxu0
      %3794 = vmatpush.msra.mxu0 %v1700
      %3795 = vmatpush.msra.mxu0 %v1686
      %3796 = vmatpush.msra.mxu0 %v1672
      %3797 = vmatpush.msra.mxu0 %v1658
      %3798 = vmatpush.msra.mxu0 %v1644
      %3799 = vmatpush.msra.mxu0 %v1630
      %3800 = vmatpush.msra.mxu0 %v1616
      %3801 = vmatpush.msra.mxu0 %v1602
      %3802 = vmatpush.msra.mxu0 %v1588
      %3803 = vmatpush.msra.mxu0 %v1574
      %3804 = vmatpush.msra.mxu0 %v1560
      %3805 = vmatpush.msra.mxu0 %v1546
      %3806 = vmatpush.msra.mxu0 %v1532
      %3807 = vmatpush.msra.mxu0 %v1518
      %3808 = vmatpush.msra.mxu0 %v1504
      %3809 = vmatpush.msra.mxu0 %v1490
      %3810 = vmatmul.f32.gmra.mxu0 %v579
      %v3811 = vpop.f32.mrf.mxu0
      %v3812 = vadd.f32 %v3792, %v3811
      %3813 = vdwg.mxu0
      %3814 = vmatpush.msra.mxu0 %v1924
      %3815 = vmatpush.msra.mxu0 %v1910
      %3816 = vmatpush.msra.mxu0 %v1896
      %3817 = vmatpush.msra.mxu0 %v1882
      %3818 = vmatpush.msra.mxu0 %v1868
      %3819 = vmatpush.msra.mxu0 %v1854
      %3820 = vmatpush.msra.mxu0 %v1840
      %3821 = vmatpush.msra.mxu0 %v1826
      %3822 = vmatpush.msra.mxu0 %v1812
      %3823 = vmatpush.msra.mxu0 %v1798
      %3824 = vmatpush.msra.mxu0 %v1784
      %3825 = vmatpush.msra.mxu0 %v1770
      %3826 = vmatpush.msra.mxu0 %v1756
      %3827 = vmatpush.msra.mxu0 %v1742
      %3828 = vmatpush.msra.mxu0 %v1728
      %3829 = vmatpush.msra.mxu0 %v1714
      %3830 = vmatmul.f32.gmra.mxu0 %v580
      %v3831 = vpop.f32.mrf.mxu0
      %v3832 = vadd.f32 %v3812, %v3831
      %3833 = vdwg.mxu0
      %3834 = vmatpush.msra.mxu0 0.0
      %3835 = vmatpush.msra.mxu0 0.0
      %3836 = vmatpush.msra.mxu0 0.0
      %3837 = vmatpush.msra.mxu0 0.0
      %3838 = vmatpush.msra.mxu0 0.0
      %3839 = vmatpush.msra.mxu0 0.0
      %3840 = vmatpush.msra.mxu0 0.0
      %3841 = vmatpush.msra.mxu0 0.0
      %3842 = vmatpush.msra.mxu0 0.0
      %3843 = vmatpush.msra.mxu0 0.0
      %3844 = vmatpush.msra.mxu0 0.0
      %3845 = vmatpush.msra.mxu0 0.0
      %3846 = vmatpush.msra.mxu0 0.0
      %3847 = vmatpush.msra.mxu0 0.0
      %3848 = vmatpush.msra.mxu0 %v2029
      %3849 = vmatpush.msra.mxu0 %v1938
      %3850 = vmatmul.f32.gmra.mxu0 %v1989
      %v3851 = vpop.f32.mrf.mxu0
      %v3852 = vadd.f32 %v3832, %v3851
      %3853 = vdwg.mxu0
      %3854 = vmatpush.msra.mxu0 %v805
      %3855 = vmatpush.msra.mxu0 %v791
      %3856 = vmatpush.msra.mxu0 %v777
      %3857 = vmatpush.msra.mxu0 %v763
      %3858 = vmatpush.msra.mxu0 %v749
      %3859 = vmatpush.msra.mxu0 %v735
      %3860 = vmatpush.msra.mxu0 %v721
      %3861 = vmatpush.msra.mxu0 %v707
      %3862 = vmatpush.msra.mxu0 %v693
      %3863 = vmatpush.msra.mxu0 %v679
      %3864 = vmatpush.msra.mxu0 %v665
      %3865 = vmatpush.msra.mxu0 %v651
      %3866 = vmatpush.msra.mxu0 %v637
      %3867 = vmatpush.msra.mxu0 %v623
      %3868 = vmatpush.msra.mxu0 %v609
      %3869 = vmatpush.msra.mxu0 %v595
      %3870 = vmatmul.f32.gmra.mxu0 %v575
      %v3871 = vpop.f32.mrf.mxu0
      %v3872 = vadd.f32 %v1972, %v3871
      %3873 = vdwg.mxu0
      %3874 = vmatpush.msra.mxu0 %v1029
      %3875 = vmatpush.msra.mxu0 %v1015
      %3876 = vmatpush.msra.mxu0 %v1001
      %3877 = vmatpush.msra.mxu0 %v987
      %3878 = vmatpush.msra.mxu0 %v973
      %3879 = vmatpush.msra.mxu0 %v959
      %3880 = vmatpush.msra.mxu0 %v945
      %3881 = vmatpush.msra.mxu0 %v931
      %3882 = vmatpush.msra.mxu0 %v917
      %3883 = vmatpush.msra.mxu0 %v903
      %3884 = vmatpush.msra.mxu0 %v889
      %3885 = vmatpush.msra.mxu0 %v875
      %3886 = vmatpush.msra.mxu0 %v861
      %3887 = vmatpush.msra.mxu0 %v847
      %3888 = vmatpush.msra.mxu0 %v833
      %3889 = vmatpush.msra.mxu0 %v819
      %3890 = vmatmul.f32.gmra.mxu0 %v576
      %v3891 = vpop.f32.mrf.mxu0
      %v3892 = vadd.f32 %v3872, %v3891
      %3893 = vdwg.mxu0
      %3894 = vmatpush.msra.mxu0 %v1253
      %3895 = vmatpush.msra.mxu0 %v1239
      %3896 = vmatpush.msra.mxu0 %v1225
      %3897 = vmatpush.msra.mxu0 %v1211
      %3898 = vmatpush.msra.mxu0 %v1197
      %3899 = vmatpush.msra.mxu0 %v1183
      %3900 = vmatpush.msra.mxu0 %v1169
      %3901 = vmatpush.msra.mxu0 %v1155
      %3902 = vmatpush.msra.mxu0 %v1141
      %3903 = vmatpush.msra.mxu0 %v1127
      %3904 = vmatpush.msra.mxu0 %v1113
      %3905 = vmatpush.msra.mxu0 %v1099
      %3906 = vmatpush.msra.mxu0 %v1085
      %3907 = vmatpush.msra.mxu0 %v1071
      %3908 = vmatpush.msra.mxu0 %v1057
      %3909 = vmatpush.msra.mxu0 %v1043
      %3910 = vmatmul.f32.gmra.mxu0 %v577
      %v3911 = vpop.f32.mrf.mxu0
      %v3912 = vadd.f32 %v3892, %v3911
      %3913 = vdwg.mxu0
      %3914 = vmatpush.msra.mxu0 %v1477
      %3915 = vmatpush.msra.mxu0 %v1463
      %3916 = vmatpush.msra.mxu0 %v1449
      %3917 = vmatpush.msra.mxu0 %v1435
      %3918 = vmatpush.msra.mxu0 %v1421
      %3919 = vmatpush.msra.mxu0 %v1407
      %3920 = vmatpush.msra.mxu0 %v1393
      %3921 = vmatpush.msra.mxu0 %v1379
      %3922 = vmatpush.msra.mxu0 %v1365
      %3923 = vmatpush.msra.mxu0 %v1351
      %3924 = vmatpush.msra.mxu0 %v1337
      %3925 = vmatpush.msra.mxu0 %v1323
      %3926 = vmatpush.msra.mxu0 %v1309
      %3927 = vmatpush.msra.mxu0 %v1295
      %3928 = vmatpush.msra.mxu0 %v1281
      %3929 = vmatpush.msra.mxu0 %v1267
      %3930 = vmatmul.f32.gmra.mxu0 %v578
      %v3931 = vpop.f32.mrf.mxu0
      %v3932 = vadd.f32 %v3912, %v3931
      %3933 = vdwg.mxu0
      %3934 = vmatpush.msra.mxu0 %v1701
      %3935 = vmatpush.msra.mxu0 %v1687
      %3936 = vmatpush.msra.mxu0 %v1673
      %3937 = vmatpush.msra.mxu0 %v1659
      %3938 = vmatpush.msra.mxu0 %v1645
      %3939 = vmatpush.msra.mxu0 %v1631
      %3940 = vmatpush.msra.mxu0 %v1617
      %3941 = vmatpush.msra.mxu0 %v1603
      %3942 = vmatpush.msra.mxu0 %v1589
      %3943 = vmatpush.msra.mxu0 %v1575
      %3944 = vmatpush.msra.mxu0 %v1561
      %3945 = vmatpush.msra.mxu0 %v1547
      %3946 = vmatpush.msra.mxu0 %v1533
      %3947 = vmatpush.msra.mxu0 %v1519
      %3948 = vmatpush.msra.mxu0 %v1505
      %3949 = vmatpush.msra.mxu0 %v1491
      %3950 = vmatmul.f32.gmra.mxu0 %v579
      %v3951 = vpop.f32.mrf.mxu0
      %v3952 = vadd.f32 %v3932, %v3951
      %3953 = vdwg.mxu0
      %3954 = vmatpush.msra.mxu0 %v1925
      %3955 = vmatpush.msra.mxu0 %v1911
      %3956 = vmatpush.msra.mxu0 %v1897
      %3957 = vmatpush.msra.mxu0 %v1883
      %3958 = vmatpush.msra.mxu0 %v1869
      %3959 = vmatpush.msra.mxu0 %v1855
      %3960 = vmatpush.msra.mxu0 %v1841
      %3961 = vmatpush.msra.mxu0 %v1827
      %3962 = vmatpush.msra.mxu0 %v1813
      %3963 = vmatpush.msra.mxu0 %v1799
      %3964 = vmatpush.msra.mxu0 %v1785
      %3965 = vmatpush.msra.mxu0 %v1771
      %3966 = vmatpush.msra.mxu0 %v1757
      %3967 = vmatpush.msra.mxu0 %v1743
      %3968 = vmatpush.msra.mxu0 %v1729
      %3969 = vmatpush.msra.mxu0 %v1715
      %3970 = vmatmul.f32.gmra.mxu0 %v580
      %v3971 = vpop.f32.mrf.mxu0
      %v3972 = vadd.f32 %v3952, %v3971
      %3973 = vdwg.mxu0
      %3974 = vmatpush.msra.mxu0 0.0
      %3975 = vmatpush.msra.mxu0 0.0
      %3976 = vmatpush.msra.mxu0 0.0
      %3977 = vmatpush.msra.mxu0 0.0
      %3978 = vmatpush.msra.mxu0 0.0
      %3979 = vmatpush.msra.mxu0 0.0
      %3980 = vmatpush.msra.mxu0 0.0
      %3981 = vmatpush.msra.mxu0 0.0
      %3982 = vmatpush.msra.mxu0 0.0
      %3983 = vmatpush.msra.mxu0 0.0
      %3984 = vmatpush.msra.mxu0 0.0
      %3985 = vmatpush.msra.mxu0 0.0
      %3986 = vmatpush.msra.mxu0 0.0
      %3987 = vmatpush.msra.mxu0 0.0
      %3988 = vmatpush.msra.mxu0 %v2032
      %3989 = vmatpush.msra.mxu0 %v1939
      %3990 = vmatmul.f32.gmra.mxu0 %v1989
      %v3991 = vpop.f32.mrf.mxu0
      %v3992 = vadd.f32 %v3972, %v3991
      %3993 = vdwg.mxu0
      %v3994 = vmax.f32 %v2172, 0.0
      %v3995 = vmax.f32 %v2312, 0.0
      %v3996 = vmax.f32 %v2452, 0.0
      %v3997 = vmax.f32 %v2592, 0.0
      %v3998 = vmax.f32 %v2732, 0.0
      %v3999 = vmax.f32 %v2872, 0.0
      %v4000 = vmax.f32 %v3012, 0.0
      %v4001 = vmax.f32 %v3152, 0.0
      %v4002 = vmax.f32 %v3292, 0.0
      %v4003 = vmax.f32 %v3432, 0.0
      %v4004 = vmax.f32 %v3572, 0.0
      %v4005 = vmax.f32 %v3712, 0.0
      %v4006 = vmax.f32 %v3852, 0.0
      %v4007 = vmax.f32 %v3992, 0.0
      %s4008 = scalar_lea.vmem %s4, 1
      %v4009 = vld [vmem:[%s4008] ss:$4 sm:$0xff]
      %s4010 = scalar_lea.vmem %s4, 33
      %v4011 = vld [vmem:[%s4010] ss:$4 sm:$0x3f]
      %v4014 = vperm.slane %v4009, 0
      %v4015 = vperm.slane %v4009, 1
      %v4016 = vperm.slane %v4009, 2
      %v4017 = vperm.slane %v4009, 3
      %v4018 = vperm.slane %v4009, 4
      %v4019 = vperm.slane %v4009, 5
      %v4020 = vperm.slane %v4009, 6
      %v4021 = vperm.slane %v4009, 7
      %v4022 = vperm.slane %v4011, 0
      %v4023 = vperm.slane %v4011, 1
      %v4024 = vperm.slane %v4011, 2
      %v4025 = vperm.slane %v4011, 3
      %v4026 = vperm.slane %v4011, 4
      %v4027 = vperm.slane %v4011, 5
      %v4042 = vmul.f32 %v3994, %v4014
      %v4043 = vmul.f32 %v3995, %v4015
      %v4044 = vmul.f32 %v3996, %v4016
      %v4045 = vmul.f32 %v3997, %v4017
      %v4046 = vmul.f32 %v3998, %v4018
      %v4047 = vmul.f32 %v3999, %v4019
      %v4048 = vmul.f32 %v4000, %v4020
      %v4049 = vmul.f32 %v4001, %v4021
      %v4050 = vmul.f32 %v4002, %v4022
      %v4051 = vmul.f32 %v4003, %v4023
      %v4052 = vmul.f32 %v4004, %v4024
      %v4053 = vmul.f32 %v4005, %v4025
      %v4054 = vmul.f32 %v4006, %v4026
      %v4055 = vmul.f32 %v4007, %v4027
      %s4056 = scalar_lea.vmem %s4, 2
      %v4057 = vld [vmem:[%s4056] ss:$4 sm:$0xff]
      %s4058 = scalar_lea.vmem %s4, 34
      %v4059 = vld [vmem:[%s4058] ss:$4 sm:$0x3f]
      %v4062 = vperm.slane %v4057, 0
      %v4063 = vperm.slane %v4057, 1
      %v4064 = vperm.slane %v4057, 2
      %v4065 = vperm.slane %v4057, 3
      %v4066 = vperm.slane %v4057, 4
      %v4067 = vperm.slane %v4057, 5
      %v4068 = vperm.slane %v4057, 6
      %v4069 = vperm.slane %v4057, 7
      %v4070 = vperm.slane %v4059, 0
      %v4071 = vperm.slane %v4059, 1
      %v4072 = vperm.slane %v4059, 2
      %v4073 = vperm.slane %v4059, 3
      %v4074 = vperm.slane %v4059, 4
      %v4075 = vperm.slane %v4059, 5
      %v4090 = vadd.f32 %v4042, %v4062
      %v4091 = vadd.f32 %v4043, %v4063
      %v4092 = vadd.f32 %v4044, %v4064
      %v4093 = vadd.f32 %v4045, %v4065
      %v4094 = vadd.f32 %v4046, %v4066
      %v4095 = vadd.f32 %v4047, %v4067
      %v4096 = vadd.f32 %v4048, %v4068
      %v4097 = vadd.f32 %v4049, %v4069
      %v4098 = vadd.f32 %v4050, %v4070
      %v4099 = vadd.f32 %v4051, %v4071
      %v4100 = vadd.f32 %v4052, %v4072
      %v4101 = vadd.f32 %v4053, %v4073
      %v4102 = vadd.f32 %v4054, %v4074
      %v4103 = vadd.f32 %v4055, %v4075
      %v4104 = vld [vmem:[%s5] sm:$0xff]
      %v4105 = vld [vmem:[%s5 + $0x8] sm:$0xff]
      %v4106 = vld [vmem:[%s5 + $0x10] sm:$0xff]
      %v4107 = vld [vmem:[%s5 + $0x18] sm:$0xff]
      %v4108 = vld [vmem:[%s5 + $0x20] sm:$0xff]
      %v4109 = vld [vmem:[%s5 + $0x28] sm:$0xff]
      %v4110 = vld [vmem:[%s5 + $0x30] sm:$0xff]
      %v4111 = vld [vmem:[%s5 + $0x38] sm:$0xff]
      %v4112 = vld [vmem:[%s5 + $0x40] sm:$0xff]
      %v4113 = vld [vmem:[%s5 + $0x48] sm:$0xff]
      %v4114 = vld [vmem:[%s5 + $0x50] sm:$0xff]
      %v4115 = vld [vmem:[%s5 + $0x58] sm:$0xff]
      %v4116 = vld [vmem:[%s5 + $0x60] sm:$0xff]
      %v4117 = vld [vmem:[%s5 + $0x68] sm:$0xff]
      %v4118 = vld [vmem:[%s5 + $0x70] sm:$0xff]
      %v4119 = vld [vmem:[%s5 + $0x78] sm:$0xff]
      %v4120 = vld [vmem:[%s5 + $0x80] sm:$0xff]
      %v4121 = vld [vmem:[%s5 + $0x88] sm:$0xff]
      %v4122 = vld [vmem:[%s5 + $0x90] sm:$0xff]
      %v4123 = vld [vmem:[%s5 + $0x98] sm:$0xff]
      %v4124 = vld [vmem:[%s5 + $0xa0] sm:$0xff]
      %v4125 = vld [vmem:[%s5 + $0xa8] sm:$0xff]
      %v4126 = vld [vmem:[%s5 + $0xb0] sm:$0xff]
      %v4127 = vld [vmem:[%s5 + $0xb8] sm:$0xff]
      %v4128 = vld [vmem:[%s5 + $0xc0] sm:$0xff]
      %v4129 = vld [vmem:[%s5 + $0xc8] sm:$0xff]
      %v4130 = vld [vmem:[%s5 + $0xd0] sm:$0xff]
      %v4131 = vld [vmem:[%s5 + $0xd8] sm:$0xff]
      %v4132 = vld [vmem:[%s5 + $0xe0] sm:$0xff]
      %v4133 = vld [vmem:[%s5 + $0xe8] sm:$0xff]
      %v4134 = vld [vmem:[%s5 + $0xf0] sm:$0xff]
      %v4135 = vld [vmem:[%s5 + $0xf8] sm:$0xff]
      %v4136 = vld [vmem:[%s5 + $0x100] sm:$0xff]
      %v4137 = vld [vmem:[%s5 + $0x108] sm:$0xff]
      %v4138 = vld [vmem:[%s5 + $0x110] sm:$0xff]
      %v4139 = vld [vmem:[%s5 + $0x118] sm:$0xff]
      %v4140 = vld [vmem:[%s5 + $0x120] sm:$0xff]
      %v4141 = vld [vmem:[%s5 + $0x128] sm:$0xff]
      %v4142 = vld [vmem:[%s5 + $0x130] sm:$0xff]
      %v4143 = vld [vmem:[%s5 + $0x138] sm:$0xff]
      %v4144 = vld [vmem:[%s5 + $0x140] sm:$0xff]
      %v4145 = vld [vmem:[%s5 + $0x148] sm:$0xff]
      %v4146 = vld [vmem:[%s5 + $0x150] sm:$0xff]
      %v4147 = vld [vmem:[%s5 + $0x158] sm:$0xff]
      %v4148 = vld [vmem:[%s5 + $0x160] sm:$0xff]
      %v4149 = vld [vmem:[%s5 + $0x168] sm:$0xff]
      %v4150 = vld [vmem:[%s5 + $0x170] sm:$0xff]
      %v4151 = vld [vmem:[%s5 + $0x178] sm:$0xff]
      %v4152 = vld [vmem:[%s5 + $0x180] sm:$0xff]
      %v4153 = vld [vmem:[%s5 + $0x188] sm:$0xff]
      %v4154 = vld [vmem:[%s5 + $0x190] sm:$0xff]
      %v4155 = vld [vmem:[%s5 + $0x198] sm:$0xff]
      %v4156 = vld [vmem:[%s5 + $0x1a0] sm:$0xff]
      %v4157 = vld [vmem:[%s5 + $0x1a8] sm:$0xff]
      %v4158 = vld [vmem:[%s5 + $0x1b0] sm:$0xff]
      %v4159 = vld [vmem:[%s5 + $0x1b8] sm:$0xff]
      %v4160 = vld [vmem:[%s5 + $0x1c0] sm:$0xff]
      %v4161 = vld [vmem:[%s5 + $0x1c8] sm:$0xff]
      %v4162 = vld [vmem:[%s5 + $0x1d0] sm:$0xff]
      %v4163 = vld [vmem:[%s5 + $0x1d8] sm:$0xff]
      %v4164 = vld [vmem:[%s5 + $0x1e0] sm:$0xff]
      %v4165 = vld [vmem:[%s5 + $0x1e8] sm:$0xff]
      %v4166 = vld [vmem:[%s5 + $0x1f0] sm:$0xff]
      %v4167 = vld [vmem:[%s5 + $0x1f8] sm:$0xff]
      %v4168 = vld [vmem:[%s5 + $0x200] sm:$0xff]
      %v4169 = vld [vmem:[%s5 + $0x208] sm:$0xff]
      %v4170 = vld [vmem:[%s5 + $0x210] sm:$0xff]
      %v4171 = vld [vmem:[%s5 + $0x218] sm:$0xff]
      %v4172 = vld [vmem:[%s5 + $0x220] sm:$0xff]
      %v4173 = vld [vmem:[%s5 + $0x228] sm:$0xff]
      %v4174 = vld [vmem:[%s5 + $0x230] sm:$0xff]
      %v4175 = vld [vmem:[%s5 + $0x238] sm:$0xff]
      %v4176 = vld [vmem:[%s5 + $0x240] sm:$0xff]
      %v4177 = vld [vmem:[%s5 + $0x248] sm:$0xff]
      %v4178 = vld [vmem:[%s5 + $0x250] sm:$0xff]
      %v4179 = vld [vmem:[%s5 + $0x258] sm:$0xff]
      %v4180 = vld [vmem:[%s5 + $0x260] sm:$0xff]
      %v4181 = vld [vmem:[%s5 + $0x268] sm:$0xff]
      %v4182 = vld [vmem:[%s5 + $0x270] sm:$0xff]
      %v4183 = vld [vmem:[%s5 + $0x278] sm:$0xff]
      %v4184 = vld [vmem:[%s5 + $0x280] sm:$0xff]
      %v4185 = vld [vmem:[%s5 + $0x288] sm:$0xff]
      %v4186 = vld [vmem:[%s5 + $0x290] sm:$0xff]
      %v4187 = vld [vmem:[%s5 + $0x298] sm:$0xff]
      %v4188 = vld [vmem:[%s5 + $0x2a0] sm:$0xff]
      %v4189 = vld [vmem:[%s5 + $0x2a8] sm:$0xff]
      %v4190 = vld [vmem:[%s5 + $0x2b0] sm:$0xff]
      %v4191 = vld [vmem:[%s5 + $0x2b8] sm:$0xff]
      %v4192 = vld [vmem:[%s5 + $0x2c0] sm:$0xff]
      %v4193 = vld [vmem:[%s5 + $0x2c8] sm:$0xff]
      %v4194 = vld [vmem:[%s5 + $0x2d0] sm:$0xff]
      %v4195 = vld [vmem:[%s5 + $0x2d8] sm:$0xff]
      %v4196 = vld [vmem:[%s5 + $0x2e0] sm:$0xff]
      %v4197 = vld [vmem:[%s5 + $0x2e8] sm:$0xff]
      %v4198 = vld [vmem:[%s5 + $0x2f0] sm:$0xff]
      %v4199 = vld [vmem:[%s5 + $0x2f8] sm:$0xff]
      %v4200 = vld [vmem:[%s5 + $0x300] sm:$0xff]
      %v4201 = vld [vmem:[%s5 + $0x308] sm:$0xff]
      %v4202 = vld [vmem:[%s5 + $0x310] sm:$0xff]
      %v4203 = vld [vmem:[%s5 + $0x318] sm:$0xff]
      %v4204 = vld [vmem:[%s5 + $0x320] sm:$0xff]
      %v4205 = vld [vmem:[%s5 + $0x328] sm:$0xff]
      %v4206 = vld [vmem:[%s5 + $0x330] sm:$0xff]
      %v4207 = vld [vmem:[%s5 + $0x338] sm:$0xff]
      %v4208 = vld [vmem:[%s5 + $0x340] sm:$0xff]
      %v4209 = vld [vmem:[%s5 + $0x348] sm:$0xff]
      %v4210 = vld [vmem:[%s5 + $0x350] sm:$0xff]
      %v4211 = vld [vmem:[%s5 + $0x358] sm:$0xff]
      %v4212 = vld [vmem:[%s5 + $0x360] sm:$0xff]
      %v4213 = vld [vmem:[%s5 + $0x368] sm:$0xff]
      %v4214 = vld [vmem:[%s5 + $0x370] sm:$0xff]
      %v4215 = vld [vmem:[%s5 + $0x378] sm:$0xff]
      %v4216 = vld [vmem:[%s5 + $0x380] sm:$0xff]
      %v4217 = vld [vmem:[%s5 + $0x388] sm:$0xff]
      %v4218 = vld [vmem:[%s5 + $0x390] sm:$0xff]
      %v4219 = vld [vmem:[%s5 + $0x398] sm:$0xff]
      %v4220 = vld [vmem:[%s5 + $0x3a0] sm:$0xff]
      %v4221 = vld [vmem:[%s5 + $0x3a8] sm:$0xff]
      %v4222 = vld [vmem:[%s5 + $0x3b0] sm:$0xff]
      %v4223 = vld [vmem:[%s5 + $0x3b8] sm:$0xff]
      %v4224 = vld [vmem:[%s5 + $0x3c0] sm:$0xff]
      %v4225 = vld [vmem:[%s5 + $0x3c8] sm:$0xff]
      %v4226 = vld [vmem:[%s5 + $0x3d0] sm:$0xff]
      %v4227 = vld [vmem:[%s5 + $0x3d8] sm:$0xff]
      %v4228 = vld [vmem:[%s5 + $0x3e0] sm:$0xff]
      %v4229 = vld [vmem:[%s5 + $0x3e8] sm:$0xff]
      %v4230 = vld [vmem:[%s5 + $0x3f0] sm:$0xff]
      %v4231 = vld [vmem:[%s5 + $0x3f8] sm:$0xff]
      %v4232 = vld [vmem:[%s5 + $0x400] sm:$0xff]
      %v4233 = vld [vmem:[%s5 + $0x408] sm:$0xff]
      %v4234 = vld [vmem:[%s5 + $0x410] sm:$0xff]
      %v4235 = vld [vmem:[%s5 + $0x418] sm:$0xff]
      %v4236 = vld [vmem:[%s5 + $0x420] sm:$0xff]
      %v4237 = vld [vmem:[%s5 + $0x428] sm:$0xff]
      %v4238 = vld [vmem:[%s5 + $0x430] sm:$0xff]
      %v4239 = vld [vmem:[%s5 + $0x438] sm:$0xff]
      %v4240 = vld [vmem:[%s5 + $0x440] sm:$0xff]
      %v4241 = vld [vmem:[%s5 + $0x448] sm:$0xff]
      %v4242 = vld [vmem:[%s5 + $0x450] sm:$0xff]
      %v4243 = vld [vmem:[%s5 + $0x458] sm:$0xff]
      %v4244 = vld [vmem:[%s5 + $0x460] sm:$0xff]
      %v4245 = vld [vmem:[%s5 + $0x468] sm:$0xff]
      %v4246 = vld [vmem:[%s5 + $0x470] sm:$0xff]
      %v4247 = vld [vmem:[%s5 + $0x478] sm:$0xff]
      %v4248 = vld [vmem:[%s5 + $0x480] sm:$0xff]
      %v4249 = vld [vmem:[%s5 + $0x488] sm:$0xff]
      %v4250 = vld [vmem:[%s5 + $0x490] sm:$0xff]
      %v4251 = vld [vmem:[%s5 + $0x498] sm:$0xff]
      %v4252 = vld [vmem:[%s5 + $0x4a0] sm:$0xff]
      %v4253 = vld [vmem:[%s5 + $0x4a8] sm:$0xff]
      %v4254 = vld [vmem:[%s5 + $0x4b0] sm:$0xff]
      %v4255 = vld [vmem:[%s5 + $0x4b8] sm:$0xff]
      %v4256 = vld [vmem:[%s5 + $0x4c0] sm:$0xff]
      %v4257 = vld [vmem:[%s5 + $0x4c8] sm:$0xff]
      %v4258 = vld [vmem:[%s5 + $0x4d0] sm:$0xff]
      %v4259 = vld [vmem:[%s5 + $0x4d8] sm:$0xff]
      %v4260 = vld [vmem:[%s5 + $0x4e0] sm:$0xff]
      %v4261 = vld [vmem:[%s5 + $0x4e8] sm:$0xff]
      %v4262 = vld [vmem:[%s5 + $0x4f0] sm:$0xff]
      %v4263 = vld [vmem:[%s5 + $0x4f8] sm:$0xff]
      %v4264 = vld [vmem:[%s5 + $0x500] sm:$0xff]
      %v4265 = vld [vmem:[%s5 + $0x508] sm:$0xff]
      %v4266 = vld [vmem:[%s5 + $0x510] sm:$0xff]
      %v4267 = vld [vmem:[%s5 + $0x518] sm:$0xff]
      %v4268 = vld [vmem:[%s5 + $0x520] sm:$0xff]
      %v4269 = vld [vmem:[%s5 + $0x528] sm:$0xff]
      %v4270 = vld [vmem:[%s5 + $0x530] sm:$0xff]
      %v4271 = vld [vmem:[%s5 + $0x538] sm:$0xff]
      %v4272 = vld [vmem:[%s5 + $0x540] sm:$0xff]
      %v4273 = vld [vmem:[%s5 + $0x548] sm:$0xff]
      %v4274 = vld [vmem:[%s5 + $0x550] sm:$0xff]
      %v4275 = vld [vmem:[%s5 + $0x558] sm:$0xff]
      %v4276 = vld [vmem:[%s5 + $0x560] sm:$0xff]
      %v4277 = vld [vmem:[%s5 + $0x568] sm:$0xff]
      %v4278 = vld [vmem:[%s5 + $0x570] sm:$0xff]
      %v4279 = vld [vmem:[%s5 + $0x578] sm:$0xff]
      %v4280 = vld [vmem:[%s5 + $0x580] sm:$0xff]
      %v4281 = vld [vmem:[%s5 + $0x588] sm:$0xff]
      %v4282 = vld [vmem:[%s5 + $0x590] sm:$0xff]
      %v4283 = vld [vmem:[%s5 + $0x598] sm:$0xff]
      %v4284 = vld [vmem:[%s5 + $0x5a0] sm:$0xff]
      %v4285 = vld [vmem:[%s5 + $0x5a8] sm:$0xff]
      %v4286 = vld [vmem:[%s5 + $0x5b0] sm:$0xff]
      %v4287 = vld [vmem:[%s5 + $0x5b8] sm:$0xff]
      %v4288 = vld [vmem:[%s5 + $0x5c0] sm:$0xff]
      %v4289 = vld [vmem:[%s5 + $0x5c8] sm:$0xff]
      %v4290 = vld [vmem:[%s5 + $0x5d0] sm:$0xff]
      %v4291 = vld [vmem:[%s5 + $0x5d8] sm:$0xff]
      %v4292 = vld [vmem:[%s5 + $0x5e0] sm:$0xff]
      %v4293 = vld [vmem:[%s5 + $0x5e8] sm:$0xff]
      %v4294 = vld [vmem:[%s5 + $0x5f0] sm:$0xff]
      %v4295 = vld [vmem:[%s5 + $0x5f8] sm:$0xff]
      %v4296 = vld [vmem:[%s5 + $0x600] sm:$0xff]
      %v4297 = vld [vmem:[%s5 + $0x608] sm:$0xff]
      %v4298 = vld [vmem:[%s5 + $0x610] sm:$0xff]
      %v4299 = vld [vmem:[%s5 + $0x618] sm:$0xff]
      %v4300 = vld [vmem:[%s5 + $0x620] sm:$0xff]
      %v4301 = vld [vmem:[%s5 + $0x628] sm:$0xff]
      %v4302 = vld [vmem:[%s5 + $0x630] sm:$0xff]
      %v4303 = vld [vmem:[%s5 + $0x638] sm:$0xff]
      %v4304 = vld [vmem:[%s5 + $0x640] sm:$0xff]
      %v4305 = vld [vmem:[%s5 + $0x648] sm:$0xff]
      %v4306 = vld [vmem:[%s5 + $0x650] sm:$0xff]
      %v4307 = vld [vmem:[%s5 + $0x658] sm:$0xff]
      %v4308 = vld [vmem:[%s5 + $0x660] sm:$0xff]
      %v4309 = vld [vmem:[%s5 + $0x668] sm:$0xff]
      %v4310 = vld [vmem:[%s5 + $0x670] sm:$0xff]
      %v4311 = vld [vmem:[%s5 + $0x678] sm:$0xff]
      %v4312 = vld [vmem:[%s5 + $0x680] sm:$0xff]
      %v4313 = vld [vmem:[%s5 + $0x688] sm:$0xff]
      %v4314 = vld [vmem:[%s5 + $0x690] sm:$0xff]
      %v4315 = vld [vmem:[%s5 + $0x698] sm:$0xff]
      %v4316 = vld [vmem:[%s5 + $0x6a0] sm:$0xff]
      %v4317 = vld [vmem:[%s5 + $0x6a8] sm:$0xff]
      %v4318 = vld [vmem:[%s5 + $0x6b0] sm:$0xff]
      %v4319 = vld [vmem:[%s5 + $0x6b8] sm:$0xff]
      %v4320 = vld [vmem:[%s5 + $0x6c0] sm:$0xff]
      %v4321 = vld [vmem:[%s5 + $0x6c8] sm:$0xff]
      %v4322 = vld [vmem:[%s5 + $0x6d0] sm:$0x3f]
      %v4323 = vld [vmem:[%s6] sm:$0x1]
      %v4325 = vperm.slane %v4323, 0
      %vm4327 = vcmask 703488
      %v4329 = vsel %vm4327, %v4103, 0
      %vm4331 = vcmask 1045504
      %v4333 = vsel %vm4331, %v4322, 0
      %4335 = vmatpush.msra.mxu0 %v4119
      %4336 = vmatpush.msra.mxu0 %v4118
      %4337 = vmatpush.msra.mxu0 %v4117
      %4338 = vmatpush.msra.mxu0 %v4116
      %4339 = vmatpush.msra.mxu0 %v4115
      %4340 = vmatpush.msra.mxu0 %v4114
      %4341 = vmatpush.msra.mxu0 %v4113
      %4342 = vmatpush.msra.mxu0 %v4112
      %4343 = vmatpush.msra.mxu0 %v4111
      %4344 = vmatpush.msra.mxu0 %v4110
      %4345 = vmatpush.msra.mxu0 %v4109
      %4346 = vmatpush.msra.mxu0 %v4108
      %4347 = vmatpush.msra.mxu0 %v4107
      %4348 = vmatpush.msra.mxu0 %v4106
      %4349 = vmatpush.msra.mxu0 %v4105
      %4350 = vmatpush.msra.mxu0 %v4104
      %4351 = vmatmul.f32.gmra.mxu0 %v4090
      %v4352 = vpop.f32.mrf.mxu0
      %v4353 = vadd.f32 %v4325, %v4352
      %4354 = vdwg.mxu0
      %4355 = vmatpush.msra.mxu0 %v4135
      %4356 = vmatpush.msra.mxu0 %v4134
      %4357 = vmatpush.msra.mxu0 %v4133
      %4358 = vmatpush.msra.mxu0 %v4132
      %4359 = vmatpush.msra.mxu0 %v4131
      %4360 = vmatpush.msra.mxu0 %v4130
      %4361 = vmatpush.msra.mxu0 %v4129
      %4362 = vmatpush.msra.mxu0 %v4128
      %4363 = vmatpush.msra.mxu0 %v4127
      %4364 = vmatpush.msra.mxu0 %v4126
      %4365 = vmatpush.msra.mxu0 %v4125
      %4366 = vmatpush.msra.mxu0 %v4124
      %4367 = vmatpush.msra.mxu0 %v4123
      %4368 = vmatpush.msra.mxu0 %v4122
      %4369 = vmatpush.msra.mxu0 %v4121
      %4370 = vmatpush.msra.mxu0 %v4120
      %4371 = vmatmul.f32.gmra.mxu0 %v4091
      %v4372 = vpop.f32.mrf.mxu0
      %v4373 = vadd.f32 %v4353, %v4372
      %4374 = vdwg.mxu0
      %4375 = vmatpush.msra.mxu0 %v4151
      %4376 = vmatpush.msra.mxu0 %v4150
      %4377 = vmatpush.msra.mxu0 %v4149
      %4378 = vmatpush.msra.mxu0 %v4148
      %4379 = vmatpush.msra.mxu0 %v4147
      %4380 = vmatpush.msra.mxu0 %v4146
      %4381 = vmatpush.msra.mxu0 %v4145
      %4382 = vmatpush.msra.mxu0 %v4144
      %4383 = vmatpush.msra.mxu0 %v4143
      %4384 = vmatpush.msra.mxu0 %v4142
      %4385 = vmatpush.msra.mxu0 %v4141
      %4386 = vmatpush.msra.mxu0 %v4140
      %4387 = vmatpush.msra.mxu0 %v4139
      %4388 = vmatpush.msra.mxu0 %v4138
      %4389 = vmatpush.msra.mxu0 %v4137
      %4390 = vmatpush.msra.mxu0 %v4136
      %4391 = vmatmul.f32.gmra.mxu0 %v4092
      %v4392 = vpop.f32.mrf.mxu0
      %v4393 = vadd.f32 %v4373, %v4392
      %4394 = vdwg.mxu0
      %4395 = vmatpush.msra.mxu0 %v4167
      %4396 = vmatpush.msra.mxu0 %v4166
      %4397 = vmatpush.msra.mxu0 %v4165
      %4398 = vmatpush.msra.mxu0 %v4164
      %4399 = vmatpush.msra.mxu0 %v4163
      %4400 = vmatpush.msra.mxu0 %v4162
      %4401 = vmatpush.msra.mxu0 %v4161
      %4402 = vmatpush.msra.mxu0 %v4160
      %4403 = vmatpush.msra.mxu0 %v4159
      %4404 = vmatpush.msra.mxu0 %v4158
      %4405 = vmatpush.msra.mxu0 %v4157
      %4406 = vmatpush.msra.mxu0 %v4156
      %4407 = vmatpush.msra.mxu0 %v4155
      %4408 = vmatpush.msra.mxu0 %v4154
      %4409 = vmatpush.msra.mxu0 %v4153
      %4410 = vmatpush.msra.mxu0 %v4152
      %4411 = vmatmul.f32.gmra.mxu0 %v4093
      %v4412 = vpop.f32.mrf.mxu0
      %v4413 = vadd.f32 %v4393, %v4412
      %4414 = vdwg.mxu0
      %4415 = vmatpush.msra.mxu0 %v4183
      %4416 = vmatpush.msra.mxu0 %v4182
      %4417 = vmatpush.msra.mxu0 %v4181
      %4418 = vmatpush.msra.mxu0 %v4180
      %4419 = vmatpush.msra.mxu0 %v4179
      %4420 = vmatpush.msra.mxu0 %v4178
      %4421 = vmatpush.msra.mxu0 %v4177
      %4422 = vmatpush.msra.mxu0 %v4176
      %4423 = vmatpush.msra.mxu0 %v4175
      %4424 = vmatpush.msra.mxu0 %v4174
      %4425 = vmatpush.msra.mxu0 %v4173
      %4426 = vmatpush.msra.mxu0 %v4172
      %4427 = vmatpush.msra.mxu0 %v4171
      %4428 = vmatpush.msra.mxu0 %v4170
      %4429 = vmatpush.msra.mxu0 %v4169
      %4430 = vmatpush.msra.mxu0 %v4168
      %4431 = vmatmul.f32.gmra.mxu0 %v4094
      %v4432 = vpop.f32.mrf.mxu0
      %v4433 = vadd.f32 %v4413, %v4432
      %4434 = vdwg.mxu0
      %4435 = vmatpush.msra.mxu0 %v4199
      %4436 = vmatpush.msra.mxu0 %v4198
      %4437 = vmatpush.msra.mxu0 %v4197
      %4438 = vmatpush.msra.mxu0 %v4196
      %4439 = vmatpush.msra.mxu0 %v4195
      %4440 = vmatpush.msra.mxu0 %v4194
      %4441 = vmatpush.msra.mxu0 %v4193
      %4442 = vmatpush.msra.mxu0 %v4192
      %4443 = vmatpush.msra.mxu0 %v4191
      %4444 = vmatpush.msra.mxu0 %v4190
      %4445 = vmatpush.msra.mxu0 %v4189
      %4446 = vmatpush.msra.mxu0 %v4188
      %4447 = vmatpush.msra.mxu0 %v4187
      %4448 = vmatpush.msra.mxu0 %v4186
      %4449 = vmatpush.msra.mxu0 %v4185
      %4450 = vmatpush.msra.mxu0 %v4184
      %4451 = vmatmul.f32.gmra.mxu0 %v4095
      %v4452 = vpop.f32.mrf.mxu0
      %v4453 = vadd.f32 %v4433, %v4452
      %4454 = vdwg.mxu0
      %4455 = vmatpush.msra.mxu0 %v4215
      %4456 = vmatpush.msra.mxu0 %v4214
      %4457 = vmatpush.msra.mxu0 %v4213
      %4458 = vmatpush.msra.mxu0 %v4212
      %4459 = vmatpush.msra.mxu0 %v4211
      %4460 = vmatpush.msra.mxu0 %v4210
      %4461 = vmatpush.msra.mxu0 %v4209
      %4462 = vmatpush.msra.mxu0 %v4208
      %4463 = vmatpush.msra.mxu0 %v4207
      %4464 = vmatpush.msra.mxu0 %v4206
      %4465 = vmatpush.msra.mxu0 %v4205
      %4466 = vmatpush.msra.mxu0 %v4204
      %4467 = vmatpush.msra.mxu0 %v4203
      %4468 = vmatpush.msra.mxu0 %v4202
      %4469 = vmatpush.msra.mxu0 %v4201
      %4470 = vmatpush.msra.mxu0 %v4200
      %4471 = vmatmul.f32.gmra.mxu0 %v4096
      %v4472 = vpop.f32.mrf.mxu0
      %v4473 = vadd.f32 %v4453, %v4472
      %4474 = vdwg.mxu0
      %4475 = vmatpush.msra.mxu0 %v4231
      %4476 = vmatpush.msra.mxu0 %v4230
      %4477 = vmatpush.msra.mxu0 %v4229
      %4478 = vmatpush.msra.mxu0 %v4228
      %4479 = vmatpush.msra.mxu0 %v4227
      %4480 = vmatpush.msra.mxu0 %v4226
      %4481 = vmatpush.msra.mxu0 %v4225
      %4482 = vmatpush.msra.mxu0 %v4224
      %4483 = vmatpush.msra.mxu0 %v4223
      %4484 = vmatpush.msra.mxu0 %v4222
      %4485 = vmatpush.msra.mxu0 %v4221
      %4486 = vmatpush.msra.mxu0 %v4220
      %4487 = vmatpush.msra.mxu0 %v4219
      %4488 = vmatpush.msra.mxu0 %v4218
      %4489 = vmatpush.msra.mxu0 %v4217
      %4490 = vmatpush.msra.mxu0 %v4216
      %4491 = vmatmul.f32.gmra.mxu0 %v4097
      %v4492 = vpop.f32.mrf.mxu0
      %v4493 = vadd.f32 %v4473, %v4492
      %4494 = vdwg.mxu0
      %4495 = vmatpush.msra.mxu0 %v4247
      %4496 = vmatpush.msra.mxu0 %v4246
      %4497 = vmatpush.msra.mxu0 %v4245
      %4498 = vmatpush.msra.mxu0 %v4244
      %4499 = vmatpush.msra.mxu0 %v4243
      %4500 = vmatpush.msra.mxu0 %v4242
      %4501 = vmatpush.msra.mxu0 %v4241
      %4502 = vmatpush.msra.mxu0 %v4240
      %4503 = vmatpush.msra.mxu0 %v4239
      %4504 = vmatpush.msra.mxu0 %v4238
      %4505 = vmatpush.msra.mxu0 %v4237
      %4506 = vmatpush.msra.mxu0 %v4236
      %4507 = vmatpush.msra.mxu0 %v4235
      %4508 = vmatpush.msra.mxu0 %v4234
      %4509 = vmatpush.msra.mxu0 %v4233
      %4510 = vmatpush.msra.mxu0 %v4232
      %4511 = vmatmul.f32.gmra.mxu0 %v4098
      %v4512 = vpop.f32.mrf.mxu0
      %v4513 = vadd.f32 %v4493, %v4512
      %4514 = vdwg.mxu0
      %4515 = vmatpush.msra.mxu0 %v4263
      %4516 = vmatpush.msra.mxu0 %v4262
      %4517 = vmatpush.msra.mxu0 %v4261
      %4518 = vmatpush.msra.mxu0 %v4260
      %4519 = vmatpush.msra.mxu0 %v4259
      %4520 = vmatpush.msra.mxu0 %v4258
      %4521 = vmatpush.msra.mxu0 %v4257
      %4522 = vmatpush.msra.mxu0 %v4256
      %4523 = vmatpush.msra.mxu0 %v4255
      %4524 = vmatpush.msra.mxu0 %v4254
      %4525 = vmatpush.msra.mxu0 %v4253
      %4526 = vmatpush.msra.mxu0 %v4252
      %4527 = vmatpush.msra.mxu0 %v4251
      %4528 = vmatpush.msra.mxu0 %v4250
      %4529 = vmatpush.msra.mxu0 %v4249
      %4530 = vmatpush.msra.mxu0 %v4248
      %4531 = vmatmul.f32.gmra.mxu0 %v4099
      %v4532 = vpop.f32.mrf.mxu0
      %v4533 = vadd.f32 %v4513, %v4532
      %4534 = vdwg.mxu0
      %4535 = vmatpush.msra.mxu0 %v4279
      %4536 = vmatpush.msra.mxu0 %v4278
      %4537 = vmatpush.msra.mxu0 %v4277
      %4538 = vmatpush.msra.mxu0 %v4276
      %4539 = vmatpush.msra.mxu0 %v4275
      %4540 = vmatpush.msra.mxu0 %v4274
      %4541 = vmatpush.msra.mxu0 %v4273
      %4542 = vmatpush.msra.mxu0 %v4272
      %4543 = vmatpush.msra.mxu0 %v4271
      %4544 = vmatpush.msra.mxu0 %v4270
      %4545 = vmatpush.msra.mxu0 %v4269
      %4546 = vmatpush.msra.mxu0 %v4268
      %4547 = vmatpush.msra.mxu0 %v4267
      %4548 = vmatpush.msra.mxu0 %v4266
      %4549 = vmatpush.msra.mxu0 %v4265
      %4550 = vmatpush.msra.mxu0 %v4264
      %4551 = vmatmul.f32.gmra.mxu0 %v4100
      %v4552 = vpop.f32.mrf.mxu0
      %v4553 = vadd.f32 %v4533, %v4552
      %4554 = vdwg.mxu0
      %4555 = vmatpush.msra.mxu0 %v4295
      %4556 = vmatpush.msra.mxu0 %v4294
      %4557 = vmatpush.msra.mxu0 %v4293
      %4558 = vmatpush.msra.mxu0 %v4292
      %4559 = vmatpush.msra.mxu0 %v4291
      %4560 = vmatpush.msra.mxu0 %v4290
      %4561 = vmatpush.msra.mxu0 %v4289
      %4562 = vmatpush.msra.mxu0 %v4288
      %4563 = vmatpush.msra.mxu0 %v4287
      %4564 = vmatpush.msra.mxu0 %v4286
      %4565 = vmatpush.msra.mxu0 %v4285
      %4566 = vmatpush.msra.mxu0 %v4284
      %4567 = vmatpush.msra.mxu0 %v4283
      %4568 = vmatpush.msra.mxu0 %v4282
      %4569 = vmatpush.msra.mxu0 %v4281
      %4570 = vmatpush.msra.mxu0 %v4280
      %4571 = vmatmul.f32.gmra.mxu0 %v4101
      %v4572 = vpop.f32.mrf.mxu0
      %v4573 = vadd.f32 %v4553, %v4572
      %4574 = vdwg.mxu0
      %4575 = vmatpush.msra.mxu0 %v4311
      %4576 = vmatpush.msra.mxu0 %v4310
      %4577 = vmatpush.msra.mxu0 %v4309
      %4578 = vmatpush.msra.mxu0 %v4308
      %4579 = vmatpush.msra.mxu0 %v4307
      %4580 = vmatpush.msra.mxu0 %v4306
      %4581 = vmatpush.msra.mxu0 %v4305
      %4582 = vmatpush.msra.mxu0 %v4304
      %4583 = vmatpush.msra.mxu0 %v4303
      %4584 = vmatpush.msra.mxu0 %v4302
      %4585 = vmatpush.msra.mxu0 %v4301
      %4586 = vmatpush.msra.mxu0 %v4300
      %4587 = vmatpush.msra.mxu0 %v4299
      %4588 = vmatpush.msra.mxu0 %v4298
      %4589 = vmatpush.msra.mxu0 %v4297
      %4590 = vmatpush.msra.mxu0 %v4296
      %4591 = vmatmul.f32.gmra.mxu0 %v4102
      %v4592 = vpop.f32.mrf.mxu0
      %v4593 = vadd.f32 %v4573, %v4592
      %4594 = vdwg.mxu0
      %4595 = vmatpush.msra.mxu0 0.0
      %4596 = vmatpush.msra.mxu0 0.0
      %4597 = vmatpush.msra.mxu0 0.0
      %4598 = vmatpush.msra.mxu0 0.0
      %4599 = vmatpush.msra.mxu0 0.0
      %4600 = vmatpush.msra.mxu0 %v4333
      %4601 = vmatpush.msra.mxu0 %v4321
      %4602 = vmatpush.msra.mxu0 %v4320
      %4603 = vmatpush.msra.mxu0 %v4319
      %4604 = vmatpush.msra.mxu0 %v4318
      %4605 = vmatpush.msra.mxu0 %v4317
      %4606 = vmatpush.msra.mxu0 %v4316
      %4607 = vmatpush.msra.mxu0 %v4315
      %4608 = vmatpush.msra.mxu0 %v4314
      %4609 = vmatpush.msra.mxu0 %v4313
      %4610 = vmatpush.msra.mxu0 %v4312
      %4611 = vmatmul.f32.gmra.mxu0 %v4329
      %v4612 = vpop.f32.mrf.mxu0
      %v4613 = vadd.f32 %v4593, %v4612
      %4614 = vdwg.mxu0
      %4615 = vst [vmem:[%s273] sm:$0xff] %v4613
      %p4616 = scmp.lt.s32.totalorder %s18, 2
      %s4617 = scalar_select %p4616, %s18, 2
      %s4618 = smul.addr %s4617, 8
      %s4619 = scalar_lea.vmem %s7, %s4618
      // Predicated region
      $region49: #{densenet_forward.1} parent=47 // pred_check
        %p4620 = pneg %p188
      $region50: #{densenet_forward.1} parent=47 // pred_check_branch
        %4622 = sbr.rel (%p4620) target = $region52
      $region51: #{densenet_forward.1} parent=47 // pred_region
        _
      $region52: #{densenet_forward.1} parent=47 // pred_fallthru
        _
    $region48: #{densenet_forward.1} parent=5 // pred_fallthru
      _
    %p4623 = scmp.le.s32.totalorder 2, %s13
    // Predicated region
    $region53: #{densenet_forward.1} parent=5 // pred_check
      %p4624 = pneg %p4623
    $region54: #{densenet_forward.1} parent=5 // pred_check_branch
      %4626 = sbr.rel (%p4624) target = $region56
    $region55: #{densenet_forward.1} parent=5 // pred_region
      %s4627 = ssub.s32 %s13, 2
      // Predicated region
      $region57: #{densenet_forward.1} parent=55 // pred_check
        %p4628 = pneg %p194
      $region58: #{densenet_forward.1} parent=55 // pred_check_branch
        %4630 = sbr.rel (%p4628) target = $region60
      $region59: #{densenet_forward.1} parent=55 // pred_region
        %p4631 = scmp.lt.s32.totalorder %s19, 2
        %s4632 = scalar_select %p4631, %s19, 2
        %s4633 = smul.addr %s4632, 8
        %s4634 = scalar_lea.vmem %s7, %s4633
      $region60: #{densenet_forward.1} parent=55 // pred_fallthru
        _
    $region56: #{densenet_forward.1} parent=5 // pred_fallthru
      _
  $region6: #{densenet_forward.1} parent=0 // loop_footer
    %s17 = sadd.s32 1, %s13
  $region7: #{densenet_forward.1} parent=0 // loop_footer_branch
    %12 = sbr.rel target = $region3
  $region8: #{densenet_forward.1} parent=0 // loop_exit
    _

</llo_original>
